<compile_context>
chip_gen: v6e
topology: v6e:2x2x1
jax: 0.10.0
libtpu: 0.0.40
codegen_flags: <defaults>
</compile_context>

<pallas_src>
import functools

import jax
import jax.numpy as jnp
import numpy as np
from jax.experimental import pallas as pl
from jax.experimental.pallas import tpu as pltpu


# ---------------------------------------------------------------------------
# Fused kernel: a_sit init + `steps` x (LSTM cell + segment softmax attention)
# ---------------------------------------------------------------------------
def _reason_kernel(bank_ref, x_ref, qstar_ref, w_ref, b_ref, out_ref, *, steps):
    C = w_ref.shape[0] // 3
    TB, L, _ = x_ref.shape

    # ---------------- loop-invariant setup (once per grid step) ----------------
    x3 = x_ref[...]                                  # [TB, L, C] node features (VMEM resident)
    W = w_ref[...]                                   # [3C, 4C] = [Wq; Wr; Wh] (see __init__)
    Wq = W[0 * C:1 * C, :]
    Wr = W[1 * C:2 * C, :]
    Wh = W[2 * C:3 * C, :]
    bias = b_ref[...]                                # [1, 4C]
    qs0 = qstar_ref[...]                             # [TB, 2C]

    # Per-graph pooling (a_sit init and attention readout r). MXU path: scatter each graph's
    # L node weights onto a block-diagonal [TB, TB*L] operand (segment selector is
    # loop-invariant) and do ONE dense matmul against the flat node matrix -> keeps the XLU
    # out of the pooling phase and fills MXU rows as TB grows.
    if TB * TB * L * 4 <= (4 << 20):                 # block-diagonal operand stays small
        Xf = x3.reshape(TB * L, C)                   # layout-preserving for L % 8 == 0
        col = jax.lax.broadcasted_iota(jnp.int32, (TB, TB * L), 1)
        lo = jax.lax.broadcasted_iota(jnp.int32, (TB, TB * L), 0) * L
        seg = (col >= lo) & (col < lo + L)           # loop-invariant segment selector

        def pool(wts):                               # wts: [TB, L] per-graph node weights
            tiled = jnp.concatenate([wts] * TB, axis=1)                      # [TB, TB*L]
            wbd = jnp.where(seg, tiled, 0.0)
            return jnp.dot(wbd, Xf, preferred_element_type=jnp.float32)     # [TB, C]
    else:
        def pool(wts):                               # VPU/XLU fallback for very large TB*L
            return jnp.sum(wts[:, :, None] * x3, axis=1)

    # a_sit init: per-graph mm(bank_row, H); bank rows are pre-zeroed when index >= length,
    # so no separate validity mask is needed.
    h0 = pool(bank_ref[...])                         # [TB, C]
    c0 = jnp.zeros_like(h0)
    q0 = qs0[:, 0:C]                                 # q-part of the initial q_star
    r0 = qs0[:, C:2 * C]                             # r-part of the initial q_star

    def step(_, carry):
        q, r, h, c = carry
        # LSTM cell: three lane-aligned MXU dots (no 192-lane concat). Gate columns were
        # permuted to [f, i, o, g] and the sigmoid columns pre-scaled by 0.5 at __init__,
        # so ONE full-width tanh + per-gate fused mul-add recovers every activation
        # (sigmoid(x) = 0.5*tanh(x/2) + 0.5) -> EUP transcendental work halved.
        gates = (jnp.dot(q, Wq, preferred_element_type=jnp.float32)
                 + jnp.dot(r, Wr, preferred_element_type=jnp.float32)
                 + jnp.dot(h, Wh, preferred_element_type=jnp.float32)
                 + bias)                             # [TB, 4C], gate order f', i', o', g
        t = jnp.tanh(gates)
        f_g = 0.5 * t[:, 0 * C:1 * C] + 0.5
        i_g = 0.5 * t[:, 1 * C:2 * C] + 0.5
        o_g = 0.5 * t[:, 2 * C:3 * C] + 0.5
        g_g = t[:, 3 * C:4 * C]
        c_new = f_g * c + i_g * g_g
        q_new = o_g * jnp.tanh(c_new)                # [TB, C]

        # Segment softmax attention over each graph's L nodes + pooled readout.
        # TODO(synk): `e` is still a VPU mul + XLU lane reduce over C; route it through the
        # MXU (Xf @ q.T + diagonal extract) if C grows large enough for this to dominate.
        e = jnp.sum(x3 * q_new[:, None, :], axis=-1)               # [TB, L]
        e = e - jnp.max(e, axis=-1, keepdims=True)
        p = jnp.exp(e)
        s = jnp.sum(p, axis=-1, keepdims=True)
        inv = pl.reciprocal(s, approx=True)
        inv = inv * (2.0 - s * inv)                  # one Newton step -> ~f32-accurate 1/s
        a = p * inv                                  # softmax(e, batch)
        r_new = pool(a)                              # scatter_add(a * x) on the MXU
        return q_new, r_new, q_new, c_new            # next-step hidden h == q_new

    q, r, _, _ = jax.lax.fori_loop(0, steps, step, (q0, r0, h0, c0), unroll=True)
    out_ref[...] = jnp.concatenate([q, r], axis=-1)  # single lane-dense [TB, 2C] store


# ---------------------------------------------------------------------------
# Tiling / VMEM budgeting helpers (static, trace-time Python)
# ---------------------------------------------------------------------------
def _pick_tb(batch_size):
    """Graphs per grid step: as large as possible (fill MXU rows, amortize ~0.35us/grid-step
    overhead) while keeping >= 2 programs when B allows so the 'parallel' axis can shard
    across v7x's two TensorCores."""
    if batch_size % 8 != 0:
        return batch_size                            # single-block fallback
    best, tb = 8, 8
    while tb <= min(batch_size, 256):
        if batch_size % tb == 0 and (batch_size // tb >= 2 or batch_size <= 8):
            best = tb
        tb += 8
    return best


def _vmem_limit_bytes(TB, L, C):
    """Explicit scoped-VMEM budget: raises v5e's 16 MiB default so large tiles still
    pipeline, stays under v7x's 64 MiB physical ceiling."""
    def padded_bytes(*shape):
        s = list(shape)
        s[-1] = -(-s[-1] // 128) * 128
        if len(s) >= 2:
            s[-2] = -(-s[-2] // 8) * 8
        n = 1
        for d in s:
            n *= d
        return 4 * n

    io = (padded_bytes(TB, L) + padded_bytes(TB, L, C) + 2 * padded_bytes(TB, 2 * C)
          + padded_bytes(3 * C, 4 * C) + padded_bytes(1, 4 * C))
    scratch = 8 * padded_bytes(TB, 4 * C) + 2 * padded_bytes(TB, TB * L)
    need = 2 * io + scratch + (4 << 20)              # double-buffered IO + headroom
    return int(min(max(need, 32 << 20), 60 << 20))


# ---------------------------------------------------------------------------
# Jitted forward wrapper around the single pallas_call
# ---------------------------------------------------------------------------
@functools.partial(jax.jit, static_argnames=("steps",))
def _reason_forward(x, bank_rows, q_star, w_comb, bias, *, steps):
    B, L = bank_rows.shape
    C = w_comb.shape[0] // 3
    x3 = x.reshape(B, L, C)                          # equal-sized segments [B, L, C]
    TB = _pick_tb(B)
    grid = (B // TB,)
    kernel = functools.partial(_reason_kernel, steps=steps)
    return pl.pallas_call(
        kernel,
        out_shape=jax.ShapeDtypeStruct((B, 2 * C), jnp.float32),
        grid=grid,
        in_specs=[
            pl.BlockSpec((TB, L), lambda i: (i, 0)),          # selected bank rows
            pl.BlockSpec((TB, L, C), lambda i: (i, 0, 0)),    # node features
            pl.BlockSpec((TB, 2 * C), lambda i: (i, 0)),      # initial q_star
            pl.BlockSpec((3 * C, 4 * C), lambda i: (0, 0)),   # fused LSTM weights (resident)
            pl.BlockSpec((1, 4 * C), lambda i: (0, 0)),       # fused LSTM bias (resident)
        ],
        out_specs=pl.BlockSpec((TB, 2 * C), lambda i: (i, 0)),
        compiler_params=pltpu.CompilerParams(
            dimension_semantics=("parallel",),
            vmem_limit_bytes=_vmem_limit_bytes(TB, L, C)),
    )(bank_rows, x3, q_star, w_comb, bias)


# ---------------------------------------------------------------------------
# Module wrapper (all parameter re-layout done once at init; call path is one jitted fn)
# ---------------------------------------------------------------------------
class ReasonModulePallas:
    def __init__(self, in_channels=64, processing_steps=2, num_layers=1, key=None):
        # TODO(synk): num_layers > 1 (stacked LSTM) not implemented; module default is 1.
        assert num_layers == 1
        self.in_channels = in_channels
        self.out_channels = 2 * in_channels
        self.processing_steps = processing_steps
        self.num_layers = num_layers
        if processing_steps > 0:
            C = in_channels
            bound = 1.0 / float(np.sqrt(C))  # nn.LSTM.reset_parameters: U(-1/sqrt(H), 1/sqrt(H))
            key = jax.random.PRNGKey(42) if key is None else key
            k1, k2, k3, k4 = jax.random.split(key, 4)
            self.w_ih = jax.random.uniform(k1, (4 * C, 2 * C), jnp.float32, -bound, bound)
            self.w_hh = jax.random.uniform(k2, (4 * C, C), jnp.float32, -bound, bound)
            self.b_ih = jax.random.uniform(k3, (4 * C,), jnp.float32, -bound, bound)
            self.b_hh = jax.random.uniform(k4, (4 * C,), jnp.float32, -bound, bound)
            # One-time (off the hot path) re-layout of the LSTM parameters for the kernel:
            #  * gate rows permuted i,f,g,o -> f,i,o,g so gates that multiply together share
            #    the same 64-lane half of their vregs (no per-step lane rotates),
            #  * sigmoid-gate rows (f, i, o) pre-scaled by 0.5 so the kernel needs a single
            #    full-width tanh (sigmoid(x) = 0.5*tanh(x/2) + 0.5),
            #  * weights transposed & stacked as [Wq; Wr; Wh] -> [3C, 4C], biases pre-summed.
            perm = np.concatenate([np.arange(C, 2 * C), np.arange(0, C),
                                   np.arange(3 * C, 4 * C), np.arange(2 * C, 3 * C)])
            gate_scale = jnp.concatenate([jnp.full((3 * C,), 0.5, jnp.float32),
                                          jnp.ones((C,), jnp.float32)])
            w_ih_p = self.w_ih[perm] * gate_scale[:, None]     # [4C, 2C]
            w_hh_p = self.w_hh[perm] * gate_scale[:, None]     # [4C, C]
            self.w_comb = jnp.concatenate(
                [w_ih_p[:, :C].T, w_ih_p[:, C:2 * C].T, w_hh_p.T], axis=0)   # [3C, 4C]
            self.bias = ((self.b_ih + self.b_hh)[perm] * gate_scale).reshape(1, 4 * C)

    def __call__(self, x, batch, q_star, bank_s_list, bank_s, index):
        # `bank_s` and the original `cuda` flag do not affect the math.
        if self.processing_steps <= 0:
            return q_star
        lengths = [int(b.shape[1]) for b in bank_s_list]
        L = lengths[0]
        assert all(l == L for l in lengths), "equal-sized-segments specialization"
        B = len(bank_s_list)           # == batch.max()+1, but static -> no device->host sync
        # NOTE: `index` must be a static Python int (mirrors the original Python-level branch).
        # Rows with index >= length are zeroed here, which makes a_sit exactly zero in-kernel
        # without a separate mask input.
        bank_rows = jnp.stack(
            [b[index] if index < l else jnp.zeros((l,), jnp.float32)
             for b, l in zip(bank_s_list, lengths)], axis=0)                            # [B, L]
        return _reason_forward(x, bank_rows, q_star, self.w_comb, self.bias,
                               steps=self.processing_steps)


# ---------------------------------------------------------------------------
# Pure-JAX reference of the same math (for correctness check)
# ---------------------------------------------------------------------------
def reference_forward(mod, x, batch, q_star, bank_s_list, index):
    B = len(bank_s_list)
    C = mod.in_channels
    lengths = [int(b.shape[1]) for b in bank_s_list]
    rows, s = [], 0
    for bmat, l in zip(bank_s_list, lengths):
        H = x[s:s + l]
        rows.append(bmat[index] @ H if index < l else jnp.zeros((C,), jnp.float32))
        s += l
    h = jnp.stack(rows, axis=0)
    c = jnp.zeros((B, C), jnp.float32)
    x3 = x.reshape(B, -1, C)
    for _ in range(mod.processing_steps):
        gates = q_star @ mod.w_ih.T + h @ mod.w_hh.T + mod.b_ih + mod.b_hh
        i = jax.nn.sigmoid(gates[:, :C])
        f = jax.nn.sigmoid(gates[:, C:2 * C])
        g = jnp.tanh(gates[:, 2 * C:3 * C])
        o = jax.nn.sigmoid(gates[:, 3 * C:])
        c = f * c + i * g
        q = o * jnp.tanh(c)
        h = q
        e = jnp.sum(x3 * q[:, None, :], axis=-1)
        a = jax.nn.softmax(e, axis=-1)
        r = jnp.sum(a[..., None] * x3, axis=1)
        q_star = jnp.concatenate([q, r], axis=-1)
    return q_star


if __name__ == "__main__":
    key = jax.random.PRNGKey(0)
    B, L, C = 8, 16, 64          # graphs (full sublane), nodes per graph, in_channels (2C=128 lanes)
    N = B * L
    kx, kq, kb = jax.random.split(key, 3)

    x = jax.random.normal(kx, (N, C), jnp.float32)                      # node features [N, C]
    batch = jnp.repeat(jnp.arange(B, dtype=jnp.int32), L)               # node -> graph index
    q_star = jax.random.normal(kq, (B, 2 * C), jnp.float32)             # [B, out_channels]
    bank_keys = jax.random.split(kb, B)
    bank_s_list = [jax.random.normal(k, (L, L), jnp.float32) for k in bank_keys]
    bank_s = None   # unused by the forward pass
    index = 3

    module = ReasonModulePallas(in_channels=C, processing_steps=2, num_layers=1)
    out = module(x, batch, q_star, bank_s_list, bank_s, index)
    out = jax.block_until_ready(out)

    ref = reference_forward(module, x, batch, q_star, bank_s_list, index)
    np.testing.assert_allclose(np.asarray(out), np.asarray(ref), atol=1e-4, rtol=1e-4)
    print("KERNEL_OK")
</pallas_src>

<mosaic_0001>
module attributes {stable_mosaic.version = 11 : i64} {
  func.func @_reason_kernel(%arg0: i32, %arg1: memref<8x16xf32, #tpu.memory_space<vmem>>, %arg2: memref<8x16x64xf32, #tpu.memory_space<vmem>>, %arg3: memref<8x128xf32, #tpu.memory_space<vmem>>, %arg4: memref<192x256xf32, #tpu.memory_space<vmem>>, %arg5: memref<1x256xf32, #tpu.memory_space<vmem>>, %arg6: memref<8x128xf32, #tpu.memory_space<vmem>>) attributes {dimension_semantics = [#tpu.dimension_semantics<parallel>], iteration_bounds = array<i64: 1>, scalar_prefetch = 0 : i64, scratch_operands = 0 : i64, tpu.core_type = #tpu.core_type<tc>, window_params = [{transform_indices = @transform_0, window_bounds = array<i64: 8, 16>}, {transform_indices = @transform_1, window_bounds = array<i64: 8, 16, 64>}, {transform_indices = @transform_2, window_bounds = array<i64: 8, 128>}, {pipeline_mode = #tpu.pipeline_mode<synchronous>, transform_indices = @transform_3, window_bounds = array<i64: 192, 256>}, {pipeline_mode = #tpu.pipeline_mode<synchronous>, transform_indices = @transform_4, window_bounds = array<i64: 1, 256>}, {transform_indices = @transform_5, window_bounds = array<i64: 8, 128>}]} {
    %c0 = arith.constant 0 : index
    %c0_0 = arith.constant 0 : index
    %c0_1 = arith.constant 0 : index
    %0 = vector.load %arg2[%c0, %c0_0, %c0_1] : memref<8x16x64xf32, #tpu.memory_space<vmem>>, vector<8x16x64xf32>
    %c0_2 = arith.constant 0 : index
    %c0_3 = arith.constant 0 : index
    %1 = vector.load %arg4[%c0_2, %c0_3] : memref<192x256xf32, #tpu.memory_space<vmem>>, vector<192x256xf32>
    %2 = vector.extract_strided_slice %1 {offsets = [0, 0], sizes = [64, 256], strides = [1, 1]} : vector<192x256xf32> to vector<64x256xf32>
    %3 = vector.extract_strided_slice %1 {offsets = [64, 0], sizes = [64, 256], strides = [1, 1]} : vector<192x256xf32> to vector<64x256xf32>
    %4 = vector.extract_strided_slice %1 {offsets = [128, 0], sizes = [64, 256], strides = [1, 1]} : vector<192x256xf32> to vector<64x256xf32>
    %c0_4 = arith.constant 0 : index
    %c0_5 = arith.constant 0 : index
    %5 = vector.load %arg5[%c0_4, %c0_5] : memref<1x256xf32, #tpu.memory_space<vmem>>, vector<1x256xf32>
    %c0_6 = arith.constant 0 : index
    %c0_7 = arith.constant 0 : index
    %6 = vector.load %arg3[%c0_6, %c0_7] : memref<8x128xf32, #tpu.memory_space<vmem>>, vector<8x128xf32>
    %7 = vector.shape_cast %0 : vector<8x16x64xf32> to vector<128x64xf32>
    %8 = tpu.iota {dimensions = array<i32: 1>} : vector<8x128xi32>
    %9 = tpu.iota {dimensions = array<i32: 0>} : vector<8x128xi32>
    %c16_i32 = arith.constant 16 : i32
    %10 = vector.broadcast %c16_i32 : i32 to vector<8x128xi32>
    %11 = arith.muli %9, %10 : vector<8x128xi32>
    %12 = arith.cmpi sge, %8, %11 : vector<8x128xi32>
    %c16_i32_8 = arith.constant 16 : i32
    %13 = vector.broadcast %c16_i32_8 : i32 to vector<8x128xi32>
    %14 = arith.addi %11, %13 : vector<8x128xi32>
    %15 = arith.cmpi slt, %8, %14 : vector<8x128xi32>
    %16 = arith.andi %12, %15 : vector<8x128xi1>
    %c0_9 = arith.constant 0 : index
    %c0_10 = arith.constant 0 : index
    %17 = vector.load %arg1[%c0_9, %c0_10] : memref<8x16xf32, #tpu.memory_space<vmem>>, vector<8x16xf32>
    %18 = tpu.concatenate %17, %17, %17, %17, %17, %17, %17, %17 in 1 : vector<8x16xf32>, vector<8x16xf32>, vector<8x16xf32>, vector<8x16xf32>, vector<8x16xf32>, vector<8x16xf32>, vector<8x16xf32>, vector<8x16xf32> -> vector<8x128xf32>
    %cst = arith.constant 0.000000e+00 : f32
    %19 = vector.broadcast %cst : f32 to vector<8x128xf32>
    %20 = arith.select %16, %18, %19 : vector<8x128xi1>, vector<8x128xf32>
    %cst_11 = arith.constant dense<0.000000e+00> : vector<8x64xf32>
    %21 = tpu.matmul %20, %7, %cst_11 {dimension_numbers = #tpu.dot_dimension_numbers<[1], [0], [0], [1], [0, 0, 1, 1], [], []>} : vector<8x128xf32>, vector<128x64xf32>, vector<8x64xf32> -> vector<8x64xf32>
    %cst_12 = arith.constant 0.000000e+00 : f32
    %22 = vector.broadcast %cst_12 : f32 to vector<8x64xf32>
    %23 = vector.extract_strided_slice %6 {offsets = [0, 0], sizes = [8, 64], strides = [1, 1]} : vector<8x128xf32> to vector<8x64xf32>
    %24 = vector.extract_strided_slice %6 {offsets = [0, 64], sizes = [8, 64], strides = [1, 1]} : vector<8x128xf32> to vector<8x64xf32>
    %c0_i32 = arith.constant 0 : i32
    %cst_13 = arith.constant dense<0.000000e+00> : vector<8x256xf32>
    %25 = tpu.matmul %23, %2, %cst_13 {dimension_numbers = #tpu.dot_dimension_numbers<[1], [0], [0], [1], [0, 0, 1, 1], [], []>} : vector<8x64xf32>, vector<64x256xf32>, vector<8x256xf32> -> vector<8x256xf32>
    %cst_14 = arith.constant dense<0.000000e+00> : vector<8x256xf32>
    %26 = tpu.matmul %24, %3, %cst_14 {dimension_numbers = #tpu.dot_dimension_numbers<[1], [0], [0], [1], [0, 0, 1, 1], [], []>} : vector<8x64xf32>, vector<64x256xf32>, vector<8x256xf32> -> vector<8x256xf32>
    %27 = arith.addf %25, %26 : vector<8x256xf32>
    %cst_15 = arith.constant dense<0.000000e+00> : vector<8x256xf32>
    %28 = tpu.matmul %21, %4, %cst_15 {dimension_numbers = #tpu.dot_dimension_numbers<[1], [0], [0], [1], [0, 0, 1, 1], [], []>} : vector<8x64xf32>, vector<64x256xf32>, vector<8x256xf32> -> vector<8x256xf32>
    %29 = arith.addf %27, %28 : vector<8x256xf32>
    %30 = vector.broadcast %5 : vector<1x256xf32> to vector<8x256xf32>
    %31 = arith.addf %29, %30 : vector<8x256xf32>
    %32 = math.tanh %31 : vector<8x256xf32>
    %33 = vector.extract_strided_slice %32 {offsets = [0, 0], sizes = [8, 64], strides = [1, 1]} : vector<8x256xf32> to vector<8x64xf32>
    %cst_16 = arith.constant 5.000000e-01 : f32
    %34 = vector.broadcast %cst_16 : f32 to vector<8x64xf32>
    %35 = arith.mulf %34, %33 : vector<8x64xf32>
    %cst_17 = arith.constant 5.000000e-01 : f32
    %36 = vector.broadcast %cst_17 : f32 to vector<8x64xf32>
    %37 = arith.addf %35, %36 : vector<8x64xf32>
    %38 = vector.extract_strided_slice %32 {offsets = [0, 64], sizes = [8, 64], strides = [1, 1]} : vector<8x256xf32> to vector<8x64xf32>
    %cst_18 = arith.constant 5.000000e-01 : f32
    %39 = vector.broadcast %cst_18 : f32 to vector<8x64xf32>
    %40 = arith.mulf %39, %38 : vector<8x64xf32>
    %cst_19 = arith.constant 5.000000e-01 : f32
    %41 = vector.broadcast %cst_19 : f32 to vector<8x64xf32>
    %42 = arith.addf %40, %41 : vector<8x64xf32>
    %43 = vector.extract_strided_slice %32 {offsets = [0, 128], sizes = [8, 64], strides = [1, 1]} : vector<8x256xf32> to vector<8x64xf32>
    %cst_20 = arith.constant 5.000000e-01 : f32
    %44 = vector.broadcast %cst_20 : f32 to vector<8x64xf32>
    %45 = arith.mulf %44, %43 : vector<8x64xf32>
    %cst_21 = arith.constant 5.000000e-01 : f32
    %46 = vector.broadcast %cst_21 : f32 to vector<8x64xf32>
    %47 = arith.addf %45, %46 : vector<8x64xf32>
    %48 = vector.extract_strided_slice %32 {offsets = [0, 192], sizes = [8, 64], strides = [1, 1]} : vector<8x256xf32> to vector<8x64xf32>
    %49 = arith.mulf %37, %22 : vector<8x64xf32>
    %50 = arith.mulf %42, %48 : vector<8x64xf32>
    %51 = arith.addf %49, %50 : vector<8x64xf32>
    %52 = math.tanh %51 : vector<8x64xf32>
    %53 = arith.mulf %47, %52 : vector<8x64xf32>
    %54 = vector.shape_cast %53 : vector<8x64xf32> to vector<8x1x64xf32>
    %55 = vector.broadcast %54 : vector<8x1x64xf32> to vector<8x16x64xf32>
    %56 = arith.mulf %0, %55 : vector<8x16x64xf32>
    %cst_22 = arith.constant dense<0.000000e+00> : vector<8x16xf32>
    %57 = vector.multi_reduction <add>, %56, %cst_22 [2] : vector<8x16x64xf32> to vector<8x16xf32>
    %cst_23 = arith.constant dense<0xFF800000> : vector<8xf32>
    %58 = vector.multi_reduction <maximumf>, %57, %cst_23 [1] : vector<8x16xf32> to vector<8xf32>
    %59 = vector.shape_cast %58 : vector<8xf32> to vector<8x1xf32>
    %60 = vector.broadcast %59 : vector<8x1xf32> to vector<8x16xf32>
    %61 = arith.subf %57, %60 : vector<8x16xf32>
    %62 = math.exp %61 : vector<8x16xf32>
    %cst_24 = arith.constant dense<0.000000e+00> : vector<8xf32>
    %63 = vector.multi_reduction <add>, %62, %cst_24 [1] : vector<8x16xf32> to vector<8xf32>
    %64 = vector.shape_cast %63 : vector<8xf32> to vector<8x1xf32>
    %65 = tpu.reciprocal %64 {approx = true} : vector<8x1xf32> -> vector<8x1xf32>
    %66 = arith.mulf %64, %65 : vector<8x1xf32>
    %cst_25 = arith.constant 2.000000e+00 : f32
    %67 = vector.broadcast %cst_25 : f32 to vector<8x1xf32>
    %68 = arith.subf %67, %66 : vector<8x1xf32>
    %69 = arith.mulf %65, %68 : vector<8x1xf32>
    %70 = vector.broadcast %69 : vector<8x1xf32> to vector<8x16xf32>
    %71 = arith.mulf %62, %70 : vector<8x16xf32>
    %72 = tpu.concatenate %71, %71, %71, %71, %71, %71, %71, %71 in 1 : vector<8x16xf32>, vector<8x16xf32>, vector<8x16xf32>, vector<8x16xf32>, vector<8x16xf32>, vector<8x16xf32>, vector<8x16xf32>, vector<8x16xf32> -> vector<8x128xf32>
    %cst_26 = arith.constant 0.000000e+00 : f32
    %73 = vector.broadcast %cst_26 : f32 to vector<8x128xf32>
    %74 = arith.select %16, %72, %73 : vector<8x128xi1>, vector<8x128xf32>
    %cst_27 = arith.constant dense<0.000000e+00> : vector<8x64xf32>
    %75 = tpu.matmul %74, %7, %cst_27 {dimension_numbers = #tpu.dot_dimension_numbers<[1], [0], [0], [1], [0, 0, 1, 1], [], []>} : vector<8x128xf32>, vector<128x64xf32>, vector<8x64xf32> -> vector<8x64xf32>
    %c1_i32 = arith.constant 1 : i32
    %cst_28 = arith.constant dense<0.000000e+00> : vector<8x256xf32>
    %76 = tpu.matmul %53, %2, %cst_28 {dimension_numbers = #tpu.dot_dimension_numbers<[1], [0], [0], [1], [0, 0, 1, 1], [], []>} : vector<8x64xf32>, vector<64x256xf32>, vector<8x256xf32> -> vector<8x256xf32>
    %cst_29 = arith.constant dense<0.000000e+00> : vector<8x256xf32>
    %77 = tpu.matmul %75, %3, %cst_29 {dimension_numbers = #tpu.dot_dimension_numbers<[1], [0], [0], [1], [0, 0, 1, 1], [], []>} : vector<8x64xf32>, vector<64x256xf32>, vector<8x256xf32> -> vector<8x256xf32>
    %78 = arith.addf %76, %77 : vector<8x256xf32>
    %cst_30 = arith.constant dense<0.000000e+00> : vector<8x256xf32>
    %79 = tpu.matmul %53, %4, %cst_30 {dimension_numbers = #tpu.dot_dimension_numbers<[1], [0], [0], [1], [0, 0, 1, 1], [], []>} : vector<8x64xf32>, vector<64x256xf32>, vector<8x256xf32> -> vector<8x256xf32>
    %80 = arith.addf %78, %79 : vector<8x256xf32>
    %81 = vector.broadcast %5 : vector<1x256xf32> to vector<8x256xf32>
    %82 = arith.addf %80, %81 : vector<8x256xf32>
    %83 = math.tanh %82 : vector<8x256xf32>
    %84 = vector.extract_strided_slice %83 {offsets = [0, 0], sizes = [8, 64], strides = [1, 1]} : vector<8x256xf32> to vector<8x64xf32>
    %cst_31 = arith.constant 5.000000e-01 : f32
    %85 = vector.broadcast %cst_31 : f32 to vector<8x64xf32>
    %86 = arith.mulf %85, %84 : vector<8x64xf32>
    %cst_32 = arith.constant 5.000000e-01 : f32
    %87 = vector.broadcast %cst_32 : f32 to vector<8x64xf32>
    %88 = arith.addf %86, %87 : vector<8x64xf32>
    %89 = vector.extract_strided_slice %83 {offsets = [0, 64], sizes = [8, 64], strides = [1, 1]} : vector<8x256xf32> to vector<8x64xf32>
    %cst_33 = arith.constant 5.000000e-01 : f32
    %90 = vector.broadcast %cst_33 : f32 to vector<8x64xf32>
    %91 = arith.mulf %90, %89 : vector<8x64xf32>
    %cst_34 = arith.constant 5.000000e-01 : f32
    %92 = vector.broadcast %cst_34 : f32 to vector<8x64xf32>
    %93 = arith.addf %91, %92 : vector<8x64xf32>
    %94 = vector.extract_strided_slice %83 {offsets = [0, 128], sizes = [8, 64], strides = [1, 1]} : vector<8x256xf32> to vector<8x64xf32>
    %cst_35 = arith.constant 5.000000e-01 : f32
    %95 = vector.broadcast %cst_35 : f32 to vector<8x64xf32>
    %96 = arith.mulf %95, %94 : vector<8x64xf32>
    %cst_36 = arith.constant 5.000000e-01 : f32
    %97 = vector.broadcast %cst_36 : f32 to vector<8x64xf32>
    %98 = arith.addf %96, %97 : vector<8x64xf32>
    %99 = vector.extract_strided_slice %83 {offsets = [0, 192], sizes = [8, 64], strides = [1, 1]} : vector<8x256xf32> to vector<8x64xf32>
    %100 = arith.mulf %88, %51 : vector<8x64xf32>
    %101 = arith.mulf %93, %99 : vector<8x64xf32>
    %102 = arith.addf %100, %101 : vector<8x64xf32>
    %103 = math.tanh %102 : vector<8x64xf32>
    %104 = arith.mulf %98, %103 : vector<8x64xf32>
    %105 = vector.shape_cast %104 : vector<8x64xf32> to vector<8x1x64xf32>
    %106 = vector.broadcast %105 : vector<8x1x64xf32> to vector<8x16x64xf32>
    %107 = arith.mulf %0, %106 : vector<8x16x64xf32>
    %cst_37 = arith.constant dense<0.000000e+00> : vector<8x16xf32>
    %108 = vector.multi_reduction <add>, %107, %cst_37 [2] : vector<8x16x64xf32> to vector<8x16xf32>
    %cst_38 = arith.constant dense<0xFF800000> : vector<8xf32>
    %109 = vector.multi_reduction <maximumf>, %108, %cst_38 [1] : vector<8x16xf32> to vector<8xf32>
    %110 = vector.shape_cast %109 : vector<8xf32> to vector<8x1xf32>
    %111 = vector.broadcast %110 : vector<8x1xf32> to vector<8x16xf32>
    %112 = arith.subf %108, %111 : vector<8x16xf32>
    %113 = math.exp %112 : vector<8x16xf32>
    %cst_39 = arith.constant dense<0.000000e+00> : vector<8xf32>
    %114 = vector.multi_reduction <add>, %113, %cst_39 [1] : vector<8x16xf32> to vector<8xf32>
    %115 = vector.shape_cast %114 : vector<8xf32> to vector<8x1xf32>
    %116 = tpu.reciprocal %115 {approx = true} : vector<8x1xf32> -> vector<8x1xf32>
    %117 = arith.mulf %115, %116 : vector<8x1xf32>
    %cst_40 = arith.constant 2.000000e+00 : f32
    %118 = vector.broadcast %cst_40 : f32 to vector<8x1xf32>
    %119 = arith.subf %118, %117 : vector<8x1xf32>
    %120 = arith.mulf %116, %119 : vector<8x1xf32>
    %121 = vector.broadcast %120 : vector<8x1xf32> to vector<8x16xf32>
    %122 = arith.mulf %113, %121 : vector<8x16xf32>
    %123 = tpu.concatenate %122, %122, %122, %122, %122, %122, %122, %122 in 1 : vector<8x16xf32>, vector<8x16xf32>, vector<8x16xf32>, vector<8x16xf32>, vector<8x16xf32>, vector<8x16xf32>, vector<8x16xf32>, vector<8x16xf32> -> vector<8x128xf32>
    %cst_41 = arith.constant 0.000000e+00 : f32
    %124 = vector.broadcast %cst_41 : f32 to vector<8x128xf32>
    %125 = arith.select %16, %123, %124 : vector<8x128xi1>, vector<8x128xf32>
    %cst_42 = arith.constant dense<0.000000e+00> : vector<8x64xf32>
    %126 = tpu.matmul %125, %7, %cst_42 {dimension_numbers = #tpu.dot_dimension_numbers<[1], [0], [0], [1], [0, 0, 1, 1], [], []>} : vector<8x128xf32>, vector<128x64xf32>, vector<8x64xf32> -> vector<8x64xf32>
    %127 = tpu.concatenate %104, %126 in 1 : vector<8x64xf32>, vector<8x64xf32> -> vector<8x128xf32>
    %c0_43 = arith.constant 0 : index
    %c0_44 = arith.constant 0 : index
    %128 = vector.load %arg6[%c0_43, %c0_44] : memref<8x128xf32, #tpu.memory_space<vmem>>, vector<8x128xf32>
    tpu.vector_store %arg6[%c0_43, %c0_44], %127 {strides = array<i32>} : memref<8x128xf32, #tpu.memory_space<vmem>>, vector<8x128xf32>,
    return
  }
  func.func @transform_0(%arg0: i32) -> (i32, i32) {
    %c0_i32 = arith.constant 0 : i32
    %c0_i32_0 = arith.constant 0 : i32
    return %arg0, %c0_i32 : i32, i32
  }
  func.func @transform_1(%arg0: i32) -> (i32, i32, i32) {
    %c0_i32 = arith.constant 0 : i32
    %c0_i32_0 = arith.constant 0 : i32
    %c0_i32_1 = arith.constant 0 : i32
    return %arg0, %c0_i32, %c0_i32_0 : i32, i32, i32
  }
  func.func @transform_2(%arg0: i32) -> (i32, i32) {
    %c0_i32 = arith.constant 0 : i32
    %c0_i32_0 = arith.constant 0 : i32
    return %arg0, %c0_i32 : i32, i32
  }
  func.func @transform_3(%arg0: i32) -> (i32, i32) {
    %c0_i32 = arith.constant 0 : i32
    %c0_i32_0 = arith.constant 0 : i32
    %c0_i32_1 = arith.constant 0 : i32
    return %c0_i32, %c0_i32_0 : i32, i32
  }
  func.func @transform_4(%arg0: i32) -> (i32, i32) {
    %c0_i32 = arith.constant 0 : i32
    %c0_i32_0 = arith.constant 0 : i32
    %c0_i32_1 = arith.constant 0 : i32
    return %c0_i32, %c0_i32_0 : i32, i32
  }
  func.func @transform_5(%arg0: i32) -> (i32, i32) {
    %c0_i32 = arith.constant 0 : i32
    %c0_i32_0 = arith.constant 0 : i32
    return %arg0, %c0_i32 : i32, i32
  }
}

</mosaic_0001>

<llo_original>
// kernel: _reason_forward.1
$region0: #{_reason_forward.1}
  #allocation0 [shape = 'u32[]', space=smem, size = 0x4, offset = 0x4, fixed_abs, tag = 'smem constant byte address 0x4 - core index']
  #allocation1 [shape = 'u32[144,128]{1,0:T(1,128)}', space=vmem, size = 0x12000, scoped, tag = 'internal scratch']
  %s0 = inlined_call_operand.vmem [shape: f32[8,16], index: 0, kind: input, shape index: {}]
  %s1 = inlined_call_operand.vmem [shape: f32[8,16,64], index: 1, kind: input, shape index: {}]
  %s2 = inlined_call_operand.vmem [shape: f32[8,128], index: 2, kind: input, shape index: {}]
  %s3 = inlined_call_operand.hbm [shape: f32[192,256], index: 3, kind: input, shape index: {}]
  %s4 = inlined_call_operand.vmem [shape: f32[1,256], index: 4, kind: input, shape index: {}]
  %s5 = inlined_call_operand.hbm [shape: f32[8,128], index: 5, kind: output, shape index: {}]
  %s6 = sld [smem:[#allocation0]]
  $region34: #{_reason_forward.1} parent=0
    _
  %s8 = ssub.s32 1, %s6
  %s9 = scalar_select 0, %s8, %s6
  $region1: #{_reason_forward.1} parent=0
    #allocation2 [shape = 'u8[196608]{0}', space=vmem, size = 0x30000, scoped, tag = 'input window, operand 3, single buffered']
    #allocation3 [shape = 's32[1]{0}', space=sflag, size = 0x4, scoped, tag = 'scoped memory for _reason_forward.1']
    #allocation4 [shape = 's32[1]{0}', space=sflag, size = 0x4, scoped, tag = 'scoped memory for _reason_forward.1']
    #allocation5 [shape = 'u8[4096]{0}', space=vmem, size = 0x1000, scoped, tag = 'output window, operand 0, single buffered']
    %10 = vsyncpa [#allocation3], 0
    %11 = vsyncpa [#allocation4], 0
    // Predicated region
    $region2: #{_reason_forward.1} parent=1 // pred_check
      _
    $region3: #{_reason_forward.1} parent=1 // pred_check_branch
      %13 = sbr.rel (0) target = $region5
    $region4: #{_reason_forward.1} parent=1 // pred_region
      _
    $region5: #{_reason_forward.1} parent=1 // pred_fallthru
      _
    // Predicated region
    $region6: #{_reason_forward.1} parent=1 // pred_check
      _
    $region7: #{_reason_forward.1} parent=1 // pred_check_branch
      %15 = sbr.rel (0) target = $region9
    $region8: #{_reason_forward.1} parent=1 // pred_region
      _
    $region9: #{_reason_forward.1} parent=1 // pred_fallthru
      _
    // Predicated region
    $region10: #{_reason_forward.1} parent=1 // pred_check
      _
    $region11: #{_reason_forward.1} parent=1 // pred_check_branch
      %17 = sbr.rel (0) target = $region13
    $region12: #{_reason_forward.1} parent=1 // pred_region
      _
    $region13: #{_reason_forward.1} parent=1 // pred_fallthru
      _
    // Predicated region
    $region14: #{_reason_forward.1} parent=1 // pred_check
      _
    $region15: #{_reason_forward.1} parent=1 // pred_check_branch
      %19 = sbr.rel (0) target = $region17
    $region16: #{_reason_forward.1} parent=1 // pred_region
      %s21 = ssub.s32 6144, 6144
      %22 = vsyncadd [#allocation3], %s21
      %s23 = sshll.u32 [#allocation2], 4
      %s24 = int_to_ptr.vmem [resolvable:$true] %s23
      %29 = dma.hbm_to_vmem [thread:$0]  %s3, 6144, %s24, [#allocation3], 256, 256, 16
    $region17: #{_reason_forward.1} parent=1 // pred_fallthru
      _
    // Predicated region
    $region18: #{_reason_forward.1} parent=1 // pred_check
      _
    $region19: #{_reason_forward.1} parent=1 // pred_check_branch
      %31 = sbr.rel (0) target = $region21
    $region20: #{_reason_forward.1} parent=1 // pred_region
      _
    $region21: #{_reason_forward.1} parent=1 // pred_fallthru
      _
    // Predicated region
    $region22: #{_reason_forward.1} parent=1 // pred_check
      _
    $region23: #{_reason_forward.1} parent=1 // pred_check_branch
      %33 = sbr.rel (0) target = $region25
    $region24: #{_reason_forward.1} parent=1 // pred_region
      %34 = dma.done [#allocation3], 6144
    $region25: #{_reason_forward.1} parent=1 // pred_fallthru
      _
    %v35 = vld [vmem:[%s1] sm:$0xff]
    %v36 = vld [vmem:[%s1 + $0x8] sm:$0xff]
    %v37 = vld [vmem:[%s1 + $0x10] sm:$0xff]
    %v38 = vld [vmem:[%s1 + $0x18] sm:$0xff]
    %v39 = vld [vmem:[%s1 + $0x20] sm:$0xff]
    %v40 = vld [vmem:[%s1 + $0x28] sm:$0xff]
    %v41 = vld [vmem:[%s1 + $0x30] sm:$0xff]
    %v42 = vld [vmem:[%s1 + $0x38] sm:$0xff]
    %v43 = vld [vmem:[%s1 + $0x40] sm:$0xff]
    %v44 = vld [vmem:[%s1 + $0x48] sm:$0xff]
    %v45 = vld [vmem:[%s1 + $0x50] sm:$0xff]
    %v46 = vld [vmem:[%s1 + $0x58] sm:$0xff]
    %v47 = vld [vmem:[%s1 + $0x60] sm:$0xff]
    %v48 = vld [vmem:[%s1 + $0x68] sm:$0xff]
    %v49 = vld [vmem:[%s1 + $0x70] sm:$0xff]
    %v50 = vld [vmem:[%s1 + $0x78] sm:$0xff]
    %v51 = vld [vmem:[#allocation2] sm:$0xff]
    %v52 = vld [vmem:[#allocation2 + $0x8] sm:$0xff]
    %v53 = vld [vmem:[#allocation2 + $0x10] sm:$0xff]
    %v54 = vld [vmem:[#allocation2 + $0x18] sm:$0xff]
    %v55 = vld [vmem:[#allocation2 + $0x20] sm:$0xff]
    %v56 = vld [vmem:[#allocation2 + $0x28] sm:$0xff]
    %v57 = vld [vmem:[#allocation2 + $0x30] sm:$0xff]
    %v58 = vld [vmem:[#allocation2 + $0x38] sm:$0xff]
    %v59 = vld [vmem:[#allocation2 + $0x40] sm:$0xff]
    %v60 = vld [vmem:[#allocation2 + $0x48] sm:$0xff]
    %v61 = vld [vmem:[#allocation2 + $0x50] sm:$0xff]
    %v62 = vld [vmem:[#allocation2 + $0x58] sm:$0xff]
    %v63 = vld [vmem:[#allocation2 + $0x60] sm:$0xff]
    %v64 = vld [vmem:[#allocation2 + $0x68] sm:$0xff]
    %v65 = vld [vmem:[#allocation2 + $0x70] sm:$0xff]
    %v66 = vld [vmem:[#allocation2 + $0x78] sm:$0xff]
    %v67 = vld [vmem:[#allocation2 + $0x80] sm:$0xff]
    %v68 = vld [vmem:[#allocation2 + $0x88] sm:$0xff]
    %v69 = vld [vmem:[#allocation2 + $0x90] sm:$0xff]
    %v70 = vld [vmem:[#allocation2 + $0x98] sm:$0xff]
    %v71 = vld [vmem:[#allocation2 + $0xa0] sm:$0xff]
    %v72 = vld [vmem:[#allocation2 + $0xa8] sm:$0xff]
    %v73 = vld [vmem:[#allocation2 + $0xb0] sm:$0xff]
    %v74 = vld [vmem:[#allocation2 + $0xb8] sm:$0xff]
    %v75 = vld [vmem:[#allocation2 + $0xc0] sm:$0xff]
    %v76 = vld [vmem:[#allocation2 + $0xc8] sm:$0xff]
    %v77 = vld [vmem:[#allocation2 + $0xd0] sm:$0xff]
    %v78 = vld [vmem:[#allocation2 + $0xd8] sm:$0xff]
    %v79 = vld [vmem:[#allocation2 + $0xe0] sm:$0xff]
    %v80 = vld [vmem:[#allocation2 + $0xe8] sm:$0xff]
    %v81 = vld [vmem:[#allocation2 + $0xf0] sm:$0xff]
    %v82 = vld [vmem:[#allocation2 + $0xf8] sm:$0xff]
    %v83 = vld [vmem:[#allocation2 + $0x100] sm:$0xff]
    %v84 = vld [vmem:[#allocation2 + $0x108] sm:$0xff]
    %v85 = vld [vmem:[#allocation2 + $0x110] sm:$0xff]
    %v86 = vld [vmem:[#allocation2 + $0x118] sm:$0xff]
    %v87 = vld [vmem:[#allocation2 + $0x120] sm:$0xff]
    %v88 = vld [vmem:[#allocation2 + $0x128] sm:$0xff]
    %v89 = vld [vmem:[#allocation2 + $0x130] sm:$0xff]
    %v90 = vld [vmem:[#allocation2 + $0x138] sm:$0xff]
    %v91 = vld [vmem:[#allocation2 + $0x140] sm:$0xff]
    %v92 = vld [vmem:[#allocation2 + $0x148] sm:$0xff]
    %v93 = vld [vmem:[#allocation2 + $0x150] sm:$0xff]
    %v94 = vld [vmem:[#allocation2 + $0x158] sm:$0xff]
    %v95 = vld [vmem:[#allocation2 + $0x160] sm:$0xff]
    %v96 = vld [vmem:[#allocation2 + $0x168] sm:$0xff]
    %v97 = vld [vmem:[#allocation2 + $0x170] sm:$0xff]
    %v98 = vld [vmem:[#allocation2 + $0x178] sm:$0xff]
    %v99 = vld [vmem:[%s4] sm:$0x3]
    %v100 = vld [vmem:[%s2] sm:$0xff]
    %v101 = vlaneseq
    %v102 = vand.u32 %v101, 127
    %v103 = vlaneseq
    %v104 = vshrl.u32 %v103, 7
    %v105 = vmul.u32 %v104, 16
    %vm106 = vcmp.ge.s32.totalorder %v102, %v105
    %v107 = vadd.s32 %v105, 16
    %vm108 = vcmp.lt.s32.totalorder %v102, %v107
    %vm109 = vmand %vm106, %vm108
    %v110 = vld [vmem:[%s0] sm:$0xff]
    %112 = vrot.lane.b32.xlu0 %v110, 16
    %v113 = vpop.permute.xlu0 %112
    %115 = vrot.lane.b32.xlu0 %v110, 32
    %v116 = vpop.permute.xlu0 %115
    %118 = vrot.lane.b32.xlu0 %v110, 48
    %v119 = vpop.permute.xlu0 %118
    %121 = vrot.lane.b32.xlu0 %v110, 64
    %v122 = vpop.permute.xlu0 %121
    %124 = vrot.lane.b32.xlu0 %v110, 80
    %v125 = vpop.permute.xlu0 %124
    %127 = vrot.lane.b32.xlu0 %v110, 96
    %v128 = vpop.permute.xlu0 %127
    %130 = vrot.lane.b32.xlu0 %v110, 112
    %v131 = vpop.permute.xlu0 %130
    %vm133 = vcmask 130048
    %v134 = vsel %vm133, %v110, %v113
    %vm135 = vcmask 261120
    %v136 = vsel %vm135, %v134, %v116
    %vm137 = vcmask 392192
    %v138 = vsel %vm137, %v136, %v119
    %vm139 = vcmask 523264
    %v140 = vsel %vm139, %v138, %v122
    %vm141 = vcmask 654336
    %v142 = vsel %vm141, %v140, %v125
    %vm143 = vcmask 785408
    %v144 = vsel %vm143, %v142, %v128
    %vm145 = vcmask 916480
    %v146 = vsel %vm145, %v144, %v131
    %v147 = vsel %vm109, %v146, 0.0
    %148 = vmatprep.subr.mxu0 0.0
    %149 = vmatpush1.msra.mxu0 %v50
    %150 = vmatprep.subr.mxu0 0.0
    %151 = vmatpush1.msra.mxu0 %v49
    %152 = vmatprep.subr.mxu0 0.0
    %153 = vmatpush1.msra.mxu0 %v48
    %154 = vmatprep.subr.mxu0 0.0
    %155 = vmatpush1.msra.mxu0 %v47
    %156 = vmatprep.subr.mxu0 0.0
    %157 = vmatpush1.msra.mxu0 %v46
    %158 = vmatprep.subr.mxu0 0.0
    %159 = vmatpush1.msra.mxu0 %v45
    %160 = vmatprep.subr.mxu0 0.0
    %161 = vmatpush1.msra.mxu0 %v44
    %162 = vmatprep.subr.mxu0 0.0
    %163 = vmatpush1.msra.mxu0 %v43
    %164 = vmatprep.subr.mxu0 0.0
    %165 = vmatpush1.msra.mxu0 %v42
    %166 = vmatprep.subr.mxu0 0.0
    %167 = vmatpush1.msra.mxu0 %v41
    %168 = vmatprep.subr.mxu0 0.0
    %169 = vmatpush1.msra.mxu0 %v40
    %170 = vmatprep.subr.mxu0 0.0
    %171 = vmatpush1.msra.mxu0 %v39
    %172 = vmatprep.subr.mxu0 0.0
    %173 = vmatpush1.msra.mxu0 %v38
    %174 = vmatprep.subr.mxu0 0.0
    %175 = vmatpush1.msra.mxu0 %v37
    %176 = vmatprep.subr.mxu0 0.0
    %177 = vmatpush1.msra.mxu0 %v36
    %178 = vmatprep.subr.mxu0 0.0
    %179 = vmatpush1.msra.mxu0 %v35
    %180 = vmatprep.subr.mxu0 0.0
    %181 = vmatpush2.msra.mxu0 0.0
    %182 = vmatprep.subr.mxu0 0.0
    %183 = vmatpush2.msra.mxu0 0.0
    %184 = vmatprep.subr.mxu0 0.0
    %185 = vmatpush2.msra.mxu0 0.0
    %186 = vmatprep.subr.mxu0 0.0
    %187 = vmatpush2.msra.mxu0 0.0
    %188 = vmatprep.subr.mxu0 0.0
    %189 = vmatpush2.msra.mxu0 0.0
    %190 = vmatprep.subr.mxu0 0.0
    %191 = vmatpush2.msra.mxu0 0.0
    %192 = vmatprep.subr.mxu0 0.0
    %193 = vmatpush2.msra.mxu0 0.0
    %194 = vmatprep.subr.mxu0 0.0
    %195 = vmatpush2.msra.mxu0 0.0
    %196 = vmatprep.subr.mxu0 0.0
    %197 = vmatpush2.msra.mxu0 0.0
    %198 = vmatprep.subr.mxu0 0.0
    %199 = vmatpush2.msra.mxu0 0.0
    %200 = vmatprep.subr.mxu0 0.0
    %201 = vmatpush2.msra.mxu0 0.0
    %202 = vmatprep.subr.mxu0 0.0
    %203 = vmatpush2.msra.mxu0 0.0
    %204 = vmatprep.subr.mxu0 0.0
    %205 = vmatpush2.msra.mxu0 0.0
    %206 = vmatprep.subr.mxu0 0.0
    %207 = vmatpush2.msra.mxu0 0.0
    %208 = vmatprep.subr.mxu0 0.0
    %209 = vmatpush2.msra.mxu0 0.0
    %210 = vmatprep.subr.mxu0 0.0
    %211 = vmatpush2.msra.mxu0 0.0
    %212 = vmatprep.mubr.f32.mxu0 0.0
    %213 = vmatmul.mubr.f32.gmra.mxu0 %v147
    %v214 = vpop.f32.mrf.mxu0
    %v215 = vadd.f32 0.0, %v214
    %v216 = vpop.f32.mrf.mxu0
    %217 = vdwg.mxu0
    %219 = vrot.lane.b32.xlu0 %v100, 64
    %v220 = vpop.permute.xlu0 %219
    %v221 = vsel %vm139, %v220, 0
    %223 = vmatprep.subr.mxu0 0.0
    %224 = vmatpush1.msra.mxu0 0.0
    %225 = vmatprep.subr.mxu0 0.0
    %226 = vmatpush1.msra.mxu0 0.0
    %227 = vmatprep.subr.mxu0 0.0
    %228 = vmatpush1.msra.mxu0 0.0
    %229 = vmatprep.subr.mxu0 0.0
    %230 = vmatpush1.msra.mxu0 0.0
    %231 = vmatprep.subr.mxu0 0.0
    %232 = vmatpush1.msra.mxu0 0.0
    %233 = vmatprep.subr.mxu0 0.0
    %234 = vmatpush1.msra.mxu0 0.0
    %235 = vmatprep.subr.mxu0 0.0
    %236 = vmatpush1.msra.mxu0 0.0
    %237 = vmatprep.subr.mxu0 0.0
    %238 = vmatpush1.msra.mxu0 0.0
    %239 = vmatprep.subr.mxu0 %v82
    %240 = vmatpush1.msra.mxu0 %v81
    %241 = vmatprep.subr.mxu0 %v80
    %242 = vmatpush1.msra.mxu0 %v79
    %243 = vmatprep.subr.mxu0 %v78
    %244 = vmatpush1.msra.mxu0 %v77
    %245 = vmatprep.subr.mxu0 %v76
    %246 = vmatpush1.msra.mxu0 %v75
    %247 = vmatprep.subr.mxu0 %v74
    %248 = vmatpush1.msra.mxu0 %v73
    %249 = vmatprep.subr.mxu0 %v72
    %250 = vmatpush1.msra.mxu0 %v71
    %251 = vmatprep.subr.mxu0 %v70
    %252 = vmatpush1.msra.mxu0 %v69
    %253 = vmatprep.subr.mxu0 %v68
    %254 = vmatpush1.msra.mxu0 %v67
    %255 = vmatprep.subr.mxu0 0.0
    %256 = vmatpush2.msra.mxu0 0.0
    %257 = vmatprep.subr.mxu0 0.0
    %258 = vmatpush2.msra.mxu0 0.0
    %259 = vmatprep.subr.mxu0 0.0
    %260 = vmatpush2.msra.mxu0 0.0
    %261 = vmatprep.subr.mxu0 0.0
    %262 = vmatpush2.msra.mxu0 0.0
    %263 = vmatprep.subr.mxu0 0.0
    %264 = vmatpush2.msra.mxu0 0.0
    %265 = vmatprep.subr.mxu0 0.0
    %266 = vmatpush2.msra.mxu0 0.0
    %267 = vmatprep.subr.mxu0 0.0
    %268 = vmatpush2.msra.mxu0 0.0
    %269 = vmatprep.subr.mxu0 0.0
    %270 = vmatpush2.msra.mxu0 0.0
    %271 = vmatprep.subr.mxu0 0.0
    %272 = vmatpush2.msra.mxu0 0.0
    %273 = vmatprep.subr.mxu0 0.0
    %274 = vmatpush2.msra.mxu0 0.0
    %275 = vmatprep.subr.mxu0 0.0
    %276 = vmatpush2.msra.mxu0 0.0
    %277 = vmatprep.subr.mxu0 0.0
    %278 = vmatpush2.msra.mxu0 0.0
    %279 = vmatprep.subr.mxu0 0.0
    %280 = vmatpush2.msra.mxu0 0.0
    %281 = vmatprep.subr.mxu0 0.0
    %282 = vmatpush2.msra.mxu0 0.0
    %283 = vmatprep.subr.mxu0 0.0
    %284 = vmatpush2.msra.mxu0 0.0
    %285 = vmatprep.subr.mxu0 0.0
    %286 = vmatpush2.msra.mxu0 0.0
    %287 = vmatprep.mubr.f32.mxu0 0.0
    %288 = vmatmul.mubr.f32.gmra.mxu0 %v221
    %v289 = vpop.f32.mrf.mxu0
    %v290 = vadd.f32 0.0, %v289
    %v291 = vpop.f32.mrf.mxu0
    %v292 = vadd.f32 0.0, %v291
    %293 = vdwg.mxu0
    %v294 = vsel %vm139, %v100, 0
    %296 = vmatprep.subr.mxu0 0.0
    %297 = vmatpush1.msra.mxu0 0.0
    %298 = vmatprep.subr.mxu0 0.0
    %299 = vmatpush1.msra.mxu0 0.0
    %300 = vmatprep.subr.mxu0 0.0
    %301 = vmatpush1.msra.mxu0 0.0
    %302 = vmatprep.subr.mxu0 0.0
    %303 = vmatpush1.msra.mxu0 0.0
    %304 = vmatprep.subr.mxu0 0.0
    %305 = vmatpush1.msra.mxu0 0.0
    %306 = vmatprep.subr.mxu0 0.0
    %307 = vmatpush1.msra.mxu0 0.0
    %308 = vmatprep.subr.mxu0 0.0
    %309 = vmatpush1.msra.mxu0 0.0
    %310 = vmatprep.subr.mxu0 0.0
    %311 = vmatpush1.msra.mxu0 0.0
    %312 = vmatprep.subr.mxu0 %v66
    %313 = vmatpush1.msra.mxu0 %v65
    %314 = vmatprep.subr.mxu0 %v64
    %315 = vmatpush1.msra.mxu0 %v63
    %316 = vmatprep.subr.mxu0 %v62
    %317 = vmatpush1.msra.mxu0 %v61
    %318 = vmatprep.subr.mxu0 %v60
    %319 = vmatpush1.msra.mxu0 %v59
    %320 = vmatprep.subr.mxu0 %v58
    %321 = vmatpush1.msra.mxu0 %v57
    %322 = vmatprep.subr.mxu0 %v56
    %323 = vmatpush1.msra.mxu0 %v55
    %324 = vmatprep.subr.mxu0 %v54
    %325 = vmatpush1.msra.mxu0 %v53
    %326 = vmatprep.subr.mxu0 %v52
    %327 = vmatpush1.msra.mxu0 %v51
    %328 = vmatprep.subr.mxu0 0.0
    %329 = vmatpush2.msra.mxu0 0.0
    %330 = vmatprep.subr.mxu0 0.0
    %331 = vmatpush2.msra.mxu0 0.0
    %332 = vmatprep.subr.mxu0 0.0
    %333 = vmatpush2.msra.mxu0 0.0
    %334 = vmatprep.subr.mxu0 0.0
    %335 = vmatpush2.msra.mxu0 0.0
    %336 = vmatprep.subr.mxu0 0.0
    %337 = vmatpush2.msra.mxu0 0.0
    %338 = vmatprep.subr.mxu0 0.0
    %339 = vmatpush2.msra.mxu0 0.0
    %340 = vmatprep.subr.mxu0 0.0
    %341 = vmatpush2.msra.mxu0 0.0
    %342 = vmatprep.subr.mxu0 0.0
    %343 = vmatpush2.msra.mxu0 0.0
    %344 = vmatprep.subr.mxu0 0.0
    %345 = vmatpush2.msra.mxu0 0.0
    %346 = vmatprep.subr.mxu0 0.0
    %347 = vmatpush2.msra.mxu0 0.0
    %348 = vmatprep.subr.mxu0 0.0
    %349 = vmatpush2.msra.mxu0 0.0
    %350 = vmatprep.subr.mxu0 0.0
    %351 = vmatpush2.msra.mxu0 0.0
    %352 = vmatprep.subr.mxu0 0.0
    %353 = vmatpush2.msra.mxu0 0.0
    %354 = vmatprep.subr.mxu0 0.0
    %355 = vmatpush2.msra.mxu0 0.0
    %356 = vmatprep.subr.mxu0 0.0
    %357 = vmatpush2.msra.mxu0 0.0
    %358 = vmatprep.subr.mxu0 0.0
    %359 = vmatpush2.msra.mxu0 0.0
    %360 = vmatprep.mubr.f32.mxu0 0.0
    %361 = vmatmul.mubr.f32.gmra.mxu0 %v294
    %v362 = vpop.f32.mrf.mxu0
    %v363 = vadd.f32 %v290, %v362
    %v364 = vpop.f32.mrf.mxu0
    %v365 = vadd.f32 %v292, %v364
    %366 = vdwg.mxu0
    %v368 = vsel %vm139, %v215, 0
    %370 = vmatprep.subr.mxu0 0.0
    %371 = vmatpush1.msra.mxu0 0.0
    %372 = vmatprep.subr.mxu0 0.0
    %373 = vmatpush1.msra.mxu0 0.0
    %374 = vmatprep.subr.mxu0 0.0
    %375 = vmatpush1.msra.mxu0 0.0
    %376 = vmatprep.subr.mxu0 0.0
    %377 = vmatpush1.msra.mxu0 0.0
    %378 = vmatprep.subr.mxu0 0.0
    %379 = vmatpush1.msra.mxu0 0.0
    %380 = vmatprep.subr.mxu0 0.0
    %381 = vmatpush1.msra.mxu0 0.0
    %382 = vmatprep.subr.mxu0 0.0
    %383 = vmatpush1.msra.mxu0 0.0
    %384 = vmatprep.subr.mxu0 0.0
    %385 = vmatpush1.msra.mxu0 0.0
    %386 = vmatprep.subr.mxu0 %v98
    %387 = vmatpush1.msra.mxu0 %v97
    %388 = vmatprep.subr.mxu0 %v96
    %389 = vmatpush1.msra.mxu0 %v95
    %390 = vmatprep.subr.mxu0 %v94
    %391 = vmatpush1.msra.mxu0 %v93
    %392 = vmatprep.subr.mxu0 %v92
    %393 = vmatpush1.msra.mxu0 %v91
    %394 = vmatprep.subr.mxu0 %v90
    %395 = vmatpush1.msra.mxu0 %v89
    %396 = vmatprep.subr.mxu0 %v88
    %397 = vmatpush1.msra.mxu0 %v87
    %398 = vmatprep.subr.mxu0 %v86
    %399 = vmatpush1.msra.mxu0 %v85
    %400 = vmatprep.subr.mxu0 %v84
    %401 = vmatpush1.msra.mxu0 %v83
    %402 = vmatprep.subr.mxu0 0.0
    %403 = vmatpush2.msra.mxu0 0.0
    %404 = vmatprep.subr.mxu0 0.0
    %405 = vmatpush2.msra.mxu0 0.0
    %406 = vmatprep.subr.mxu0 0.0
    %407 = vmatpush2.msra.mxu0 0.0
    %408 = vmatprep.subr.mxu0 0.0
    %409 = vmatpush2.msra.mxu0 0.0
    %410 = vmatprep.subr.mxu0 0.0
    %411 = vmatpush2.msra.mxu0 0.0
    %412 = vmatprep.subr.mxu0 0.0
    %413 = vmatpush2.msra.mxu0 0.0
    %414 = vmatprep.subr.mxu0 0.0
    %415 = vmatpush2.msra.mxu0 0.0
    %416 = vmatprep.subr.mxu0 0.0
    %417 = vmatpush2.msra.mxu0 0.0
    %418 = vmatprep.subr.mxu0 0.0
    %419 = vmatpush2.msra.mxu0 0.0
    %420 = vmatprep.subr.mxu0 0.0
    %421 = vmatpush2.msra.mxu0 0.0
    %422 = vmatprep.subr.mxu0 0.0
    %423 = vmatpush2.msra.mxu0 0.0
    %424 = vmatprep.subr.mxu0 0.0
    %425 = vmatpush2.msra.mxu0 0.0
    %426 = vmatprep.subr.mxu0 0.0
    %427 = vmatpush2.msra.mxu0 0.0
    %428 = vmatprep.subr.mxu0 0.0
    %429 = vmatpush2.msra.mxu0 0.0
    %430 = vmatprep.subr.mxu0 0.0
    %431 = vmatpush2.msra.mxu0 0.0
    %432 = vmatprep.subr.mxu0 0.0
    %433 = vmatpush2.msra.mxu0 0.0
    %434 = vmatprep.mubr.f32.mxu0 0.0
    %435 = vmatmul.mubr.f32.gmra.mxu0 %v368
    %v436 = vpop.f32.mrf.mxu0
    %v437 = vadd.f32 0.0, %v436
    %v438 = vpop.f32.mrf.mxu0
    %v439 = vadd.f32 0.0, %v438
    %440 = vdwg.mxu0
    %v441 = vadd.f32 %v363, %v437
    %v442 = vadd.f32 %v365, %v439
    %v444 = vlaneseq
    %v445 = vshrl.u32 %v444, 7
    %v446 = vsub.s32 0, %v445
    %v447 = vrot.slane %v99, %v446
    %v448 = vlaneseq
    %v449 = vshrl.u32 %v448, 7
    %v450 = vsub.s32 1, %v449
    %v451 = vrot.slane %v99, %v450
    %v454 = vadd.f32 %v441, %v447
    %v455 = vadd.f32 %v442, %v451
    %v456 = vtanh.pop %v454
    %v457 = vtanh.pop %v455
    %v458 = vmul.f32 %v456, 0.5
    %v459 = vadd.f32 %v458, 0.5
    %v460 = vmul.f32 %v457, 0.5
    %v461 = vadd.f32 %v460, 0.5
    %v462 = vmul.f32 %v459, 0.0
    %v463 = vmul.f32 %v459, %v457
    %465 = vrot.lane.b32.xlu0 %v463, 64
    %v466 = vpop.permute.xlu0 %465
    %v468 = vadd.f32 %v462, %v466
    %v469 = vtanh.pop %v468
    %v470 = vmul.f32 %v461, %v469
    %v472 = vcombine.high %v470, %v470
    %v474 = vunpack.c.l.s4 1966171168
    %v475 = vunpack.c.0.s8 %v474
    %v476 = vlaneseq
    %v477 = vshrl.u32 %v476, 7
    %v478 = vsub.s32 %v475, %v477
    %v479 = vrot.slane %v470, %v478
    %v481 = vunpack.c.l.s4 1966171168
    %v482 = vunpack.c.0.s8 %v481
    %v483 = vlaneseq
    %v484 = vshrl.u32 %v483, 7
    %v485 = vsub.s32 %v482, %v484
    %v486 = vrot.slane %v472, %v485
    %v487 = vcombine.high %v479, %v479
    %v488 = vcombine.high %v486, %v486
    %v490 = vunpack.c.l.s4 1966171168
    %v491 = vunpack.c.0.s8 %v490
    %v492 = vlaneseq
    %v493 = vshrl.u32 %v492, 7
    %v494 = vsub.s32 %v491, %v493
    %v495 = vrot.slane %v479, %v494
    %v497 = vunpack.c.l.s4 1966171168
    %v498 = vunpack.c.0.s8 %v497
    %v499 = vlaneseq
    %v500 = vshrl.u32 %v499, 7
    %v501 = vsub.s32 %v498, %v500
    %v502 = vrot.slane %v486, %v501
    %v504 = vunpack.c.l.s4 1966171168
    %v505 = vunpack.c.0.s8 %v504
    %v506 = vlaneseq
    %v507 = vshrl.u32 %v506, 7
    %v508 = vsub.s32 %v505, %v507
    %v509 = vrot.slane %v487, %v508
    %v511 = vunpack.c.l.s4 1966171168
    %v512 = vunpack.c.0.s8 %v511
    %v513 = vlaneseq
    %v514 = vshrl.u32 %v513, 7
    %v515 = vsub.s32 %v512, %v514
    %v516 = vrot.slane %v488, %v515
    %v517 = vcombine.high %v495, %v495
    %v518 = vcombine.high %v502, %v502
    %v519 = vcombine.high %v509, %v509
    %v520 = vcombine.high %v516, %v516
    %v521 = vlaneseq
    %v522 = vshrl.u32 %v521, 7
    %v523 = vsub.s32 0, %v522
    %v524 = vrot.slane %v495, %v523
    %v525 = vlaneseq
    %v526 = vshrl.u32 %v525, 7
    %v527 = vsub.s32 0, %v526
    %v528 = vrot.slane %v509, %v527
    %v529 = vlaneseq
    %v530 = vshrl.u32 %v529, 7
    %v531 = vsub.s32 0, %v530
    %v532 = vrot.slane %v517, %v531
    %v533 = vlaneseq
    %v534 = vshrl.u32 %v533, 7
    %v535 = vsub.s32 0, %v534
    %v536 = vrot.slane %v519, %v535
    %v537 = vlaneseq
    %v538 = vshrl.u32 %v537, 7
    %v539 = vsub.s32 0, %v538
    %v540 = vrot.slane %v502, %v539
    %v541 = vlaneseq
    %v542 = vshrl.u32 %v541, 7
    %v543 = vsub.s32 0, %v542
    %v544 = vrot.slane %v516, %v543
    %v545 = vlaneseq
    %v546 = vshrl.u32 %v545, 7
    %v547 = vsub.s32 0, %v546
    %v548 = vrot.slane %v518, %v547
    %v549 = vlaneseq
    %v550 = vshrl.u32 %v549, 7
    %v551 = vsub.s32 0, %v550
    %v552 = vrot.slane %v520, %v551
    %v561 = vmul.f32 %v35, %v524
    %v562 = vmul.f32 %v36, %v524
    %v563 = vmul.f32 %v37, %v528
    %v564 = vmul.f32 %v38, %v528
    %v565 = vmul.f32 %v39, %v532
    %v566 = vmul.f32 %v40, %v532
    %v567 = vmul.f32 %v41, %v536
    %v568 = vmul.f32 %v42, %v536
    %v569 = vmul.f32 %v43, %v540
    %v570 = vmul.f32 %v44, %v540
    %v571 = vmul.f32 %v45, %v544
    %v572 = vmul.f32 %v46, %v544
    %v573 = vmul.f32 %v47, %v548
    %v574 = vmul.f32 %v48, %v548
    %v575 = vmul.f32 %v49, %v552
    %v576 = vmul.f32 %v50, %v552
    %v577 = vsel %vm139, %v561, 0.0
    %578 = vadd.xlane.f32.xlu0 %v577
    %v579 = vpop.xlane.xlu0 %578
    %v580 = vsel %vm139, %v562, 0.0
    %581 = vadd.xlane.f32.xlu0 %v580
    %v582 = vpop.xlane.xlu0 %581
    %v583 = vsel %vm139, %v563, 0.0
    %584 = vadd.xlane.f32.xlu0 %v583
    %v585 = vpop.xlane.xlu0 %584
    %v586 = vsel %vm139, %v564, 0.0
    %587 = vadd.xlane.f32.xlu0 %v586
    %v588 = vpop.xlane.xlu0 %587
    %v589 = vsel %vm139, %v565, 0.0
    %590 = vadd.xlane.f32.xlu0 %v589
    %v591 = vpop.xlane.xlu0 %590
    %v592 = vsel %vm139, %v566, 0.0
    %593 = vadd.xlane.f32.xlu0 %v592
    %v594 = vpop.xlane.xlu0 %593
    %v595 = vsel %vm139, %v567, 0.0
    %596 = vadd.xlane.f32.xlu0 %v595
    %v597 = vpop.xlane.xlu0 %596
    %v598 = vsel %vm139, %v568, 0.0
    %599 = vadd.xlane.f32.xlu0 %v598
    %v600 = vpop.xlane.xlu0 %599
    %v601 = vsel %vm139, %v569, 0.0
    %602 = vadd.xlane.f32.xlu0 %v601
    %v603 = vpop.xlane.xlu0 %602
    %v604 = vsel %vm139, %v570, 0.0
    %605 = vadd.xlane.f32.xlu0 %v604
    %v606 = vpop.xlane.xlu0 %605
    %v607 = vsel %vm139, %v571, 0.0
    %608 = vadd.xlane.f32.xlu0 %v607
    %v609 = vpop.xlane.xlu0 %608
    %v610 = vsel %vm139, %v572, 0.0
    %611 = vadd.xlane.f32.xlu0 %v610
    %v612 = vpop.xlane.xlu0 %611
    %v613 = vsel %vm139, %v573, 0.0
    %614 = vadd.xlane.f32.xlu0 %v613
    %v615 = vpop.xlane.xlu0 %614
    %v616 = vsel %vm139, %v574, 0.0
    %617 = vadd.xlane.f32.xlu0 %v616
    %v618 = vpop.xlane.xlu0 %617
    %v619 = vsel %vm139, %v575, 0.0
    %620 = vadd.xlane.f32.xlu0 %v619
    %v621 = vpop.xlane.xlu0 %620
    %v622 = vsel %vm139, %v576, 0.0
    %623 = vadd.xlane.f32.xlu0 %v622
    %v624 = vpop.xlane.xlu0 %623
    %v641 = vlaneseq
    %v642 = vshrl.u32 %v641, 7
    %v643 = vsub.s32 %v102, %v642
    %v644 = vrot.slane %v579, %v643
    %v645 = vadd.s32 %v102, 4294967288
    %v646 = vlaneseq
    %v647 = vshrl.u32 %v646, 7
    %v648 = vsub.s32 %v645, %v647
    %v649 = vrot.slane %v582, %v648
    %vm650 = vcmask 130112
    %v651 = vsel %vm650, %v649, %v644
    %v652 = vlaneseq
    %v653 = vshrl.u32 %v652, 7
    %v654 = vsub.s32 %v102, %v653
    %v655 = vrot.slane %v585, %v654
    %v656 = vlaneseq
    %v657 = vshrl.u32 %v656, 7
    %v658 = vsub.s32 %v645, %v657
    %v659 = vrot.slane %v588, %v658
    %v660 = vsel %vm650, %v659, %v655
    %v661 = vlaneseq
    %v662 = vshrl.u32 %v661, 7
    %v663 = vsub.s32 %v102, %v662
    %v664 = vrot.slane %v591, %v663
    %v665 = vlaneseq
    %v666 = vshrl.u32 %v665, 7
    %v667 = vsub.s32 %v645, %v666
    %v668 = vrot.slane %v594, %v667
    %v669 = vsel %vm650, %v668, %v664
    %v670 = vlaneseq
    %v671 = vshrl.u32 %v670, 7
    %v672 = vsub.s32 %v102, %v671
    %v673 = vrot.slane %v597, %v672
    %v674 = vlaneseq
    %v675 = vshrl.u32 %v674, 7
    %v676 = vsub.s32 %v645, %v675
    %v677 = vrot.slane %v600, %v676
    %v678 = vsel %vm650, %v677, %v673
    %v679 = vlaneseq
    %v680 = vshrl.u32 %v679, 7
    %v681 = vsub.s32 %v102, %v680
    %v682 = vrot.slane %v603, %v681
    %v683 = vlaneseq
    %v684 = vshrl.u32 %v683, 7
    %v685 = vsub.s32 %v645, %v684
    %v686 = vrot.slane %v606, %v685
    %v687 = vsel %vm650, %v686, %v682
    %v688 = vlaneseq
    %v689 = vshrl.u32 %v688, 7
    %v690 = vsub.s32 %v102, %v689
    %v691 = vrot.slane %v609, %v690
    %v692 = vlaneseq
    %v693 = vshrl.u32 %v692, 7
    %v694 = vsub.s32 %v645, %v693
    %v695 = vrot.slane %v612, %v694
    %v696 = vsel %vm650, %v695, %v691
    %v697 = vlaneseq
    %v698 = vshrl.u32 %v697, 7
    %v699 = vsub.s32 %v102, %v698
    %v700 = vrot.slane %v615, %v699
    %v701 = vlaneseq
    %v702 = vshrl.u32 %v701, 7
    %v703 = vsub.s32 %v645, %v702
    %v704 = vrot.slane %v618, %v703
    %v705 = vsel %vm650, %v704, %v700
    %v706 = vlaneseq
    %v707 = vshrl.u32 %v706, 7
    %v708 = vsub.s32 %v102, %v707
    %v709 = vrot.slane %v621, %v708
    %v710 = vlaneseq
    %v711 = vshrl.u32 %v710, 7
    %v712 = vsub.s32 %v645, %v711
    %v713 = vrot.slane %v624, %v712
    %v714 = vsel %vm650, %v713, %v709
    %vm715 = vcmask 1041409
    %v716 = vsel %vm715, %v660, %v651
    %vm717 = vcmask 1042434
    %v718 = vsel %vm717, %v669, %v716
    %vm719 = vcmask 1043459
    %v720 = vsel %vm719, %v678, %v718
    %vm721 = vcmask 1044484
    %v722 = vsel %vm721, %v687, %v720
    %vm723 = vcmask 1045509
    %v724 = vsel %vm723, %v696, %v722
    %vm725 = vcmask 1046534
    %v726 = vsel %vm725, %v705, %v724
    %vm727 = vcmask 1047559
    %v728 = vsel %vm727, %v714, %v726
    %v730 = vsel %vm133, %v728, -inf
    %731 = vmax.xlane.f32.xlu0 %v730
    %v732 = vpop.xlane.xlu0 %731
    %v734 = vlaneseq
    %v735 = vshrl.u32 %v734, 7
    %v736 = vsub.s32 0, %v735
    %v737 = vrot.slane %v732, %v736
    %v738 = vlaneseq
    %v739 = vshrl.u32 %v738, 7
    %v740 = vsub.s32 1, %v739
    %v741 = vrot.slane %v732, %v740
    %v742 = vlaneseq
    %v743 = vshrl.u32 %v742, 7
    %v744 = vsub.s32 2, %v743
    %v745 = vrot.slane %v732, %v744
    %v746 = vlaneseq
    %v747 = vshrl.u32 %v746, 7
    %v748 = vsub.s32 3, %v747
    %v749 = vrot.slane %v732, %v748
    %v750 = vlaneseq
    %v751 = vshrl.u32 %v750, 7
    %v752 = vsub.s32 4, %v751
    %v753 = vrot.slane %v732, %v752
    %v754 = vlaneseq
    %v755 = vshrl.u32 %v754, 7
    %v756 = vsub.s32 5, %v755
    %v757 = vrot.slane %v732, %v756
    %v758 = vlaneseq
    %v759 = vshrl.u32 %v758, 7
    %v760 = vsub.s32 6, %v759
    %v761 = vrot.slane %v732, %v760
    %v762 = vlaneseq
    %v763 = vshrl.u32 %v762, 7
    %v764 = vsub.s32 7, %v763
    %v765 = vrot.slane %v732, %v764
    %v774 = vsub.f32 %v579, %v737
    %v775 = vsub.f32 %v582, %v737
    %v776 = vsub.f32 %v585, %v741
    %v777 = vsub.f32 %v588, %v741
    %v778 = vsub.f32 %v591, %v745
    %v779 = vsub.f32 %v594, %v745
    %v780 = vsub.f32 %v597, %v749
    %v781 = vsub.f32 %v600, %v749
    %v782 = vsub.f32 %v603, %v753
    %v783 = vsub.f32 %v606, %v753
    %v784 = vsub.f32 %v609, %v757
    %v785 = vsub.f32 %v612, %v757
    %v786 = vsub.f32 %v615, %v761
    %v787 = vsub.f32 %v618, %v761
    %v788 = vsub.f32 %v621, %v765
    %v789 = vsub.f32 %v624, %v765
    %v790 = vmul.f32 %v774, 1.442695
    %v791 = vpow.pop %v790
    %v792 = vmul.f32 %v775, 1.442695
    %v793 = vpow.pop %v792
    %v794 = vmul.f32 %v776, 1.442695
    %v795 = vpow.pop %v794
    %v796 = vmul.f32 %v777, 1.442695
    %v797 = vpow.pop %v796
    %v798 = vmul.f32 %v778, 1.442695
    %v799 = vpow.pop %v798
    %v800 = vmul.f32 %v779, 1.442695
    %v801 = vpow.pop %v800
    %v802 = vmul.f32 %v780, 1.442695
    %v803 = vpow.pop %v802
    %v804 = vmul.f32 %v781, 1.442695
    %v805 = vpow.pop %v804
    %v806 = vmul.f32 %v782, 1.442695
    %v807 = vpow.pop %v806
    %v808 = vmul.f32 %v783, 1.442695
    %v809 = vpow.pop %v808
    %v810 = vmul.f32 %v784, 1.442695
    %v811 = vpow.pop %v810
    %v812 = vmul.f32 %v785, 1.442695
    %v813 = vpow.pop %v812
    %v814 = vmul.f32 %v786, 1.442695
    %v815 = vpow.pop %v814
    %v816 = vmul.f32 %v787, 1.442695
    %v817 = vpow.pop %v816
    %v818 = vmul.f32 %v788, 1.442695
    %v819 = vpow.pop %v818
    %v820 = vmul.f32 %v789, 1.442695
    %v821 = vpow.pop %v820
    %838 = vset.pattern.permute.xlu0 0
    %839 = vperm.xlu0 %838, %v791
    %v840 = vpop.permute.xlu0 %839
    %841 = vset.pattern.permute.xlu0 0
    %842 = vperm.xlu0 %841, %v793
    %v843 = vpop.permute.xlu0 %842
    %844 = vset.pattern.permute.xlu0 0
    %845 = vperm.xlu0 %844, %v795
    %v846 = vpop.permute.xlu0 %845
    %847 = vset.pattern.permute.xlu0 0
    %848 = vperm.xlu0 %847, %v797
    %v849 = vpop.permute.xlu0 %848
    %850 = vset.pattern.permute.xlu0 0
    %851 = vperm.xlu0 %850, %v799
    %v852 = vpop.permute.xlu0 %851
    %853 = vset.pattern.permute.xlu0 0
    %854 = vperm.xlu0 %853, %v801
    %v855 = vpop.permute.xlu0 %854
    %856 = vset.pattern.permute.xlu0 0
    %857 = vperm.xlu0 %856, %v803
    %v858 = vpop.permute.xlu0 %857
    %859 = vset.pattern.permute.xlu0 0
    %860 = vperm.xlu0 %859, %v805
    %v861 = vpop.permute.xlu0 %860
    %862 = vset.pattern.permute.xlu0 0
    %863 = vperm.xlu0 %862, %v807
    %v864 = vpop.permute.xlu0 %863
    %865 = vset.pattern.permute.xlu0 0
    %866 = vperm.xlu0 %865, %v809
    %v867 = vpop.permute.xlu0 %866
    %868 = vset.pattern.permute.xlu0 0
    %869 = vperm.xlu0 %868, %v811
    %v870 = vpop.permute.xlu0 %869
    %871 = vset.pattern.permute.xlu0 0
    %872 = vperm.xlu0 %871, %v813
    %v873 = vpop.permute.xlu0 %872
    %874 = vset.pattern.permute.xlu0 0
    %875 = vperm.xlu0 %874, %v815
    %v876 = vpop.permute.xlu0 %875
    %877 = vset.pattern.permute.xlu0 0
    %878 = vperm.xlu0 %877, %v817
    %v879 = vpop.permute.xlu0 %878
    %880 = vset.pattern.permute.xlu0 0
    %881 = vperm.xlu0 %880, %v819
    %v882 = vpop.permute.xlu0 %881
    %883 = vset.pattern.permute.xlu0 0
    %884 = vperm.xlu0 %883, %v821
    %v885 = vpop.permute.xlu0 %884
    %v886 = vlaneseq
    %v887 = vshrl.u32 %v886, 7
    %v888 = vsub.s32 %v102, %v887
    %v889 = vrot.slane %v840, %v888
    %v890 = vlaneseq
    %v891 = vshrl.u32 %v890, 7
    %v892 = vsub.s32 %v645, %v891
    %v893 = vrot.slane %v843, %v892
    %v894 = vsel %vm650, %v893, %v889
    %v895 = vlaneseq
    %v896 = vshrl.u32 %v895, 7
    %v897 = vsub.s32 %v102, %v896
    %v898 = vrot.slane %v846, %v897
    %v899 = vlaneseq
    %v900 = vshrl.u32 %v899, 7
    %v901 = vsub.s32 %v645, %v900
    %v902 = vrot.slane %v849, %v901
    %v903 = vsel %vm650, %v902, %v898
    %v904 = vlaneseq
    %v905 = vshrl.u32 %v904, 7
    %v906 = vsub.s32 %v102, %v905
    %v907 = vrot.slane %v852, %v906
    %v908 = vlaneseq
    %v909 = vshrl.u32 %v908, 7
    %v910 = vsub.s32 %v645, %v909
    %v911 = vrot.slane %v855, %v910
    %v912 = vsel %vm650, %v911, %v907
    %v913 = vlaneseq
    %v914 = vshrl.u32 %v913, 7
    %v915 = vsub.s32 %v102, %v914
    %v916 = vrot.slane %v858, %v915
    %v917 = vlaneseq
    %v918 = vshrl.u32 %v917, 7
    %v919 = vsub.s32 %v645, %v918
    %v920 = vrot.slane %v861, %v919
    %v921 = vsel %vm650, %v920, %v916
    %v922 = vlaneseq
    %v923 = vshrl.u32 %v922, 7
    %v924 = vsub.s32 %v102, %v923
    %v925 = vrot.slane %v864, %v924
    %v926 = vlaneseq
    %v927 = vshrl.u32 %v926, 7
    %v928 = vsub.s32 %v645, %v927
    %v929 = vrot.slane %v867, %v928
    %v930 = vsel %vm650, %v929, %v925
    %v931 = vlaneseq
    %v932 = vshrl.u32 %v931, 7
    %v933 = vsub.s32 %v102, %v932
    %v934 = vrot.slane %v870, %v933
    %v935 = vlaneseq
    %v936 = vshrl.u32 %v935, 7
    %v937 = vsub.s32 %v645, %v936
    %v938 = vrot.slane %v873, %v937
    %v939 = vsel %vm650, %v938, %v934
    %v940 = vlaneseq
    %v941 = vshrl.u32 %v940, 7
    %v942 = vsub.s32 %v102, %v941
    %v943 = vrot.slane %v876, %v942
    %v944 = vlaneseq
    %v945 = vshrl.u32 %v944, 7
    %v946 = vsub.s32 %v645, %v945
    %v947 = vrot.slane %v879, %v946
    %v948 = vsel %vm650, %v947, %v943
    %v949 = vlaneseq
    %v950 = vshrl.u32 %v949, 7
    %v951 = vsub.s32 %v102, %v950
    %v952 = vrot.slane %v882, %v951
    %v953 = vlaneseq
    %v954 = vshrl.u32 %v953, 7
    %v955 = vsub.s32 %v645, %v954
    %v956 = vrot.slane %v885, %v955
    %v957 = vsel %vm650, %v956, %v952
    %v958 = vsel %vm715, %v903, %v894
    %v959 = vsel %vm717, %v912, %v958
    %v960 = vsel %vm719, %v921, %v959
    %v961 = vsel %vm721, %v930, %v960
    %v962 = vsel %vm723, %v939, %v961
    %v963 = vsel %vm725, %v948, %v962
    %v964 = vsel %vm727, %v957, %v963
    %v966 = vsel %vm133, %v964, 0.0
    %967 = vadd.xlane.f32.xlu0 %v966
    %v968 = vpop.xlane.xlu0 %967
    %v969 = vrcp.pop %v968
    %v970 = vmul.f32 %v968, %v969
    %v971 = vsub.f32 2.0, %v970
    %v972 = vmul.f32 %v969, %v971
    %v974 = vlaneseq
    %v975 = vshrl.u32 %v974, 7
    %v976 = vsub.s32 0, %v975
    %v977 = vrot.slane %v972, %v976
    %v978 = vlaneseq
    %v979 = vshrl.u32 %v978, 7
    %v980 = vsub.s32 1, %v979
    %v981 = vrot.slane %v972, %v980
    %v982 = vlaneseq
    %v983 = vshrl.u32 %v982, 7
    %v984 = vsub.s32 2, %v983
    %v985 = vrot.slane %v972, %v984
    %v986 = vlaneseq
    %v987 = vshrl.u32 %v986, 7
    %v988 = vsub.s32 3, %v987
    %v989 = vrot.slane %v972, %v988
    %v990 = vlaneseq
    %v991 = vshrl.u32 %v990, 7
    %v992 = vsub.s32 4, %v991
    %v993 = vrot.slane %v972, %v992
    %v994 = vlaneseq
    %v995 = vshrl.u32 %v994, 7
    %v996 = vsub.s32 5, %v995
    %v997 = vrot.slane %v972, %v996
    %v998 = vlaneseq
    %v999 = vshrl.u32 %v998, 7
    %v1000 = vsub.s32 6, %v999
    %v1001 = vrot.slane %v972, %v1000
    %v1002 = vlaneseq
    %v1003 = vshrl.u32 %v1002, 7
    %v1004 = vsub.s32 7, %v1003
    %v1005 = vrot.slane %v972, %v1004
    %v1014 = vmul.f32 %v791, %v977
    %v1015 = vmul.f32 %v793, %v977
    %v1016 = vmul.f32 %v795, %v981
    %v1017 = vmul.f32 %v797, %v981
    %v1018 = vmul.f32 %v799, %v985
    %v1019 = vmul.f32 %v801, %v985
    %v1020 = vmul.f32 %v803, %v989
    %v1021 = vmul.f32 %v805, %v989
    %v1022 = vmul.f32 %v807, %v993
    %v1023 = vmul.f32 %v809, %v993
    %v1024 = vmul.f32 %v811, %v997
    %v1025 = vmul.f32 %v813, %v997
    %v1026 = vmul.f32 %v815, %v1001
    %v1027 = vmul.f32 %v817, %v1001
    %v1028 = vmul.f32 %v819, %v1005
    %v1029 = vmul.f32 %v821, %v1005
    %1046 = vset.pattern.permute.xlu0 0
    %1047 = vperm.xlu0 %1046, %v1014
    %v1048 = vpop.permute.xlu0 %1047
    %1049 = vset.pattern.permute.xlu0 0
    %1050 = vperm.xlu0 %1049, %v1015
    %v1051 = vpop.permute.xlu0 %1050
    %1052 = vset.pattern.permute.xlu0 0
    %1053 = vperm.xlu0 %1052, %v1016
    %v1054 = vpop.permute.xlu0 %1053
    %1055 = vset.pattern.permute.xlu0 0
    %1056 = vperm.xlu0 %1055, %v1017
    %v1057 = vpop.permute.xlu0 %1056
    %1058 = vset.pattern.permute.xlu0 0
    %1059 = vperm.xlu0 %1058, %v1018
    %v1060 = vpop.permute.xlu0 %1059
    %1061 = vset.pattern.permute.xlu0 0
    %1062 = vperm.xlu0 %1061, %v1019
    %v1063 = vpop.permute.xlu0 %1062
    %1064 = vset.pattern.permute.xlu0 0
    %1065 = vperm.xlu0 %1064, %v1020
    %v1066 = vpop.permute.xlu0 %1065
    %1067 = vset.pattern.permute.xlu0 0
    %1068 = vperm.xlu0 %1067, %v1021
    %v1069 = vpop.permute.xlu0 %1068
    %1070 = vset.pattern.permute.xlu0 0
    %1071 = vperm.xlu0 %1070, %v1022
    %v1072 = vpop.permute.xlu0 %1071
    %1073 = vset.pattern.permute.xlu0 0
    %1074 = vperm.xlu0 %1073, %v1023
    %v1075 = vpop.permute.xlu0 %1074
    %1076 = vset.pattern.permute.xlu0 0
    %1077 = vperm.xlu0 %1076, %v1024
    %v1078 = vpop.permute.xlu0 %1077
    %1079 = vset.pattern.permute.xlu0 0
    %1080 = vperm.xlu0 %1079, %v1025
    %v1081 = vpop.permute.xlu0 %1080
    %1082 = vset.pattern.permute.xlu0 0
    %1083 = vperm.xlu0 %1082, %v1026
    %v1084 = vpop.permute.xlu0 %1083
    %1085 = vset.pattern.permute.xlu0 0
    %1086 = vperm.xlu0 %1085, %v1027
    %v1087 = vpop.permute.xlu0 %1086
    %1088 = vset.pattern.permute.xlu0 0
    %1089 = vperm.xlu0 %1088, %v1028
    %v1090 = vpop.permute.xlu0 %1089
    %1091 = vset.pattern.permute.xlu0 0
    %1092 = vperm.xlu0 %1091, %v1029
    %v1093 = vpop.permute.xlu0 %1092
    %v1094 = vlaneseq
    %v1095 = vshrl.u32 %v1094, 7
    %v1096 = vsub.s32 %v102, %v1095
    %v1097 = vrot.slane %v1048, %v1096
    %v1098 = vlaneseq
    %v1099 = vshrl.u32 %v1098, 7
    %v1100 = vsub.s32 %v645, %v1099
    %v1101 = vrot.slane %v1051, %v1100
    %v1102 = vsel %vm650, %v1101, %v1097
    %v1103 = vlaneseq
    %v1104 = vshrl.u32 %v1103, 7
    %v1105 = vsub.s32 %v102, %v1104
    %v1106 = vrot.slane %v1054, %v1105
    %v1107 = vlaneseq
    %v1108 = vshrl.u32 %v1107, 7
    %v1109 = vsub.s32 %v645, %v1108
    %v1110 = vrot.slane %v1057, %v1109
    %v1111 = vsel %vm650, %v1110, %v1106
    %v1112 = vlaneseq
    %v1113 = vshrl.u32 %v1112, 7
    %v1114 = vsub.s32 %v102, %v1113
    %v1115 = vrot.slane %v1060, %v1114
    %v1116 = vlaneseq
    %v1117 = vshrl.u32 %v1116, 7
    %v1118 = vsub.s32 %v645, %v1117
    %v1119 = vrot.slane %v1063, %v1118
    %v1120 = vsel %vm650, %v1119, %v1115
    %v1121 = vlaneseq
    %v1122 = vshrl.u32 %v1121, 7
    %v1123 = vsub.s32 %v102, %v1122
    %v1124 = vrot.slane %v1066, %v1123
    %v1125 = vlaneseq
    %v1126 = vshrl.u32 %v1125, 7
    %v1127 = vsub.s32 %v645, %v1126
    %v1128 = vrot.slane %v1069, %v1127
    %v1129 = vsel %vm650, %v1128, %v1124
    %v1130 = vlaneseq
    %v1131 = vshrl.u32 %v1130, 7
    %v1132 = vsub.s32 %v102, %v1131
    %v1133 = vrot.slane %v1072, %v1132
    %v1134 = vlaneseq
    %v1135 = vshrl.u32 %v1134, 7
    %v1136 = vsub.s32 %v645, %v1135
    %v1137 = vrot.slane %v1075, %v1136
    %v1138 = vsel %vm650, %v1137, %v1133
    %v1139 = vlaneseq
    %v1140 = vshrl.u32 %v1139, 7
    %v1141 = vsub.s32 %v102, %v1140
    %v1142 = vrot.slane %v1078, %v1141
    %v1143 = vlaneseq
    %v1144 = vshrl.u32 %v1143, 7
    %v1145 = vsub.s32 %v645, %v1144
    %v1146 = vrot.slane %v1081, %v1145
    %v1147 = vsel %vm650, %v1146, %v1142
    %v1148 = vlaneseq
    %v1149 = vshrl.u32 %v1148, 7
    %v1150 = vsub.s32 %v102, %v1149
    %v1151 = vrot.slane %v1084, %v1150
    %v1152 = vlaneseq
    %v1153 = vshrl.u32 %v1152, 7
    %v1154 = vsub.s32 %v645, %v1153
    %v1155 = vrot.slane %v1087, %v1154
    %v1156 = vsel %vm650, %v1155, %v1151
    %v1157 = vlaneseq
    %v1158 = vshrl.u32 %v1157, 7
    %v1159 = vsub.s32 %v102, %v1158
    %v1160 = vrot.slane %v1090, %v1159
    %v1161 = vlaneseq
    %v1162 = vshrl.u32 %v1161, 7
    %v1163 = vsub.s32 %v645, %v1162
    %v1164 = vrot.slane %v1093, %v1163
    %v1165 = vsel %vm650, %v1164, %v1160
    %v1166 = vsel %vm715, %v1111, %v1102
    %v1167 = vsel %vm717, %v1120, %v1166
    %v1168 = vsel %vm719, %v1129, %v1167
    %v1169 = vsel %vm721, %v1138, %v1168
    %v1170 = vsel %vm723, %v1147, %v1169
    %v1171 = vsel %vm725, %v1156, %v1170
    %v1172 = vsel %vm727, %v1165, %v1171
    %v1174 = vadd.s32 %v102, 4294967280
    %v1175 = vlaneseq
    %v1176 = vshrl.u32 %v1175, 7
    %v1177 = vsub.s32 %v1174, %v1176
    %v1178 = vrot.slane %v1048, %v1177
    %v1179 = vadd.s32 %v102, 4294967272
    %v1180 = vlaneseq
    %v1181 = vshrl.u32 %v1180, 7
    %v1182 = vsub.s32 %v1179, %v1181
    %v1183 = vrot.slane %v1051, %v1182
    %vm1184 = vcmask 261312
    %v1185 = vsel %vm1184, %v1183, %v1178
    %v1186 = vlaneseq
    %v1187 = vshrl.u32 %v1186, 7
    %v1188 = vsub.s32 %v1174, %v1187
    %v1189 = vrot.slane %v1054, %v1188
    %v1190 = vlaneseq
    %v1191 = vshrl.u32 %v1190, 7
    %v1192 = vsub.s32 %v1179, %v1191
    %v1193 = vrot.slane %v1057, %v1192
    %v1194 = vsel %vm1184, %v1193, %v1189
    %v1195 = vlaneseq
    %v1196 = vshrl.u32 %v1195, 7
    %v1197 = vsub.s32 %v1174, %v1196
    %v1198 = vrot.slane %v1060, %v1197
    %v1199 = vlaneseq
    %v1200 = vshrl.u32 %v1199, 7
    %v1201 = vsub.s32 %v1179, %v1200
    %v1202 = vrot.slane %v1063, %v1201
    %v1203 = vsel %vm1184, %v1202, %v1198
    %v1204 = vlaneseq
    %v1205 = vshrl.u32 %v1204, 7
    %v1206 = vsub.s32 %v1174, %v1205
    %v1207 = vrot.slane %v1066, %v1206
    %v1208 = vlaneseq
    %v1209 = vshrl.u32 %v1208, 7
    %v1210 = vsub.s32 %v1179, %v1209
    %v1211 = vrot.slane %v1069, %v1210
    %v1212 = vsel %vm1184, %v1211, %v1207
    %v1213 = vlaneseq
    %v1214 = vshrl.u32 %v1213, 7
    %v1215 = vsub.s32 %v1174, %v1214
    %v1216 = vrot.slane %v1072, %v1215
    %v1217 = vlaneseq
    %v1218 = vshrl.u32 %v1217, 7
    %v1219 = vsub.s32 %v1179, %v1218
    %v1220 = vrot.slane %v1075, %v1219
    %v1221 = vsel %vm1184, %v1220, %v1216
    %v1222 = vlaneseq
    %v1223 = vshrl.u32 %v1222, 7
    %v1224 = vsub.s32 %v1174, %v1223
    %v1225 = vrot.slane %v1078, %v1224
    %v1226 = vlaneseq
    %v1227 = vshrl.u32 %v1226, 7
    %v1228 = vsub.s32 %v1179, %v1227
    %v1229 = vrot.slane %v1081, %v1228
    %v1230 = vsel %vm1184, %v1229, %v1225
    %v1231 = vlaneseq
    %v1232 = vshrl.u32 %v1231, 7
    %v1233 = vsub.s32 %v1174, %v1232
    %v1234 = vrot.slane %v1084, %v1233
    %v1235 = vlaneseq
    %v1236 = vshrl.u32 %v1235, 7
    %v1237 = vsub.s32 %v1179, %v1236
    %v1238 = vrot.slane %v1087, %v1237
    %v1239 = vsel %vm1184, %v1238, %v1234
    %v1240 = vlaneseq
    %v1241 = vshrl.u32 %v1240, 7
    %v1242 = vsub.s32 %v1174, %v1241
    %v1243 = vrot.slane %v1090, %v1242
    %v1244 = vlaneseq
    %v1245 = vshrl.u32 %v1244, 7
    %v1246 = vsub.s32 %v1179, %v1245
    %v1247 = vrot.slane %v1093, %v1246
    %v1248 = vsel %vm1184, %v1247, %v1243
    %v1249 = vsel %vm715, %v1194, %v1185
    %v1250 = vsel %vm717, %v1203, %v1249
    %v1251 = vsel %vm719, %v1212, %v1250
    %v1252 = vsel %vm721, %v1221, %v1251
    %v1253 = vsel %vm723, %v1230, %v1252
    %v1254 = vsel %vm725, %v1239, %v1253
    %v1255 = vsel %vm727, %v1248, %v1254
    %v1257 = vadd.s32 %v102, 4294967264
    %v1258 = vlaneseq
    %v1259 = vshrl.u32 %v1258, 7
    %v1260 = vsub.s32 %v1257, %v1259
    %v1261 = vrot.slane %v1048, %v1260
    %v1262 = vadd.s32 %v102, 4294967256
    %v1263 = vlaneseq
    %v1264 = vshrl.u32 %v1263, 7
    %v1265 = vsub.s32 %v1262, %v1264
    %v1266 = vrot.slane %v1051, %v1265
    %vm1267 = vcmask 392512
    %v1268 = vsel %vm1267, %v1266, %v1261
    %v1269 = vlaneseq
    %v1270 = vshrl.u32 %v1269, 7
    %v1271 = vsub.s32 %v1257, %v1270
    %v1272 = vrot.slane %v1054, %v1271
    %v1273 = vlaneseq
    %v1274 = vshrl.u32 %v1273, 7
    %v1275 = vsub.s32 %v1262, %v1274
    %v1276 = vrot.slane %v1057, %v1275
    %v1277 = vsel %vm1267, %v1276, %v1272
    %v1278 = vlaneseq
    %v1279 = vshrl.u32 %v1278, 7
    %v1280 = vsub.s32 %v1257, %v1279
    %v1281 = vrot.slane %v1060, %v1280
    %v1282 = vlaneseq
    %v1283 = vshrl.u32 %v1282, 7
    %v1284 = vsub.s32 %v1262, %v1283
    %v1285 = vrot.slane %v1063, %v1284
    %v1286 = vsel %vm1267, %v1285, %v1281
    %v1287 = vlaneseq
    %v1288 = vshrl.u32 %v1287, 7
    %v1289 = vsub.s32 %v1257, %v1288
    %v1290 = vrot.slane %v1066, %v1289
    %v1291 = vlaneseq
    %v1292 = vshrl.u32 %v1291, 7
    %v1293 = vsub.s32 %v1262, %v1292
    %v1294 = vrot.slane %v1069, %v1293
    %v1295 = vsel %vm1267, %v1294, %v1290
    %v1296 = vlaneseq
    %v1297 = vshrl.u32 %v1296, 7
    %v1298 = vsub.s32 %v1257, %v1297
    %v1299 = vrot.slane %v1072, %v1298
    %v1300 = vlaneseq
    %v1301 = vshrl.u32 %v1300, 7
    %v1302 = vsub.s32 %v1262, %v1301
    %v1303 = vrot.slane %v1075, %v1302
    %v1304 = vsel %vm1267, %v1303, %v1299
    %v1305 = vlaneseq
    %v1306 = vshrl.u32 %v1305, 7
    %v1307 = vsub.s32 %v1257, %v1306
    %v1308 = vrot.slane %v1078, %v1307
    %v1309 = vlaneseq
    %v1310 = vshrl.u32 %v1309, 7
    %v1311 = vsub.s32 %v1262, %v1310
    %v1312 = vrot.slane %v1081, %v1311
    %v1313 = vsel %vm1267, %v1312, %v1308
    %v1314 = vlaneseq
    %v1315 = vshrl.u32 %v1314, 7
    %v1316 = vsub.s32 %v1257, %v1315
    %v1317 = vrot.slane %v1084, %v1316
    %v1318 = vlaneseq
    %v1319 = vshrl.u32 %v1318, 7
    %v1320 = vsub.s32 %v1262, %v1319
    %v1321 = vrot.slane %v1087, %v1320
    %v1322 = vsel %vm1267, %v1321, %v1317
    %v1323 = vlaneseq
    %v1324 = vshrl.u32 %v1323, 7
    %v1325 = vsub.s32 %v1257, %v1324
    %v1326 = vrot.slane %v1090, %v1325
    %v1327 = vlaneseq
    %v1328 = vshrl.u32 %v1327, 7
    %v1329 = vsub.s32 %v1262, %v1328
    %v1330 = vrot.slane %v1093, %v1329
    %v1331 = vsel %vm1267, %v1330, %v1326
    %v1332 = vsel %vm715, %v1277, %v1268
    %v1333 = vsel %vm717, %v1286, %v1332
    %v1334 = vsel %vm719, %v1295, %v1333
    %v1335 = vsel %vm721, %v1304, %v1334
    %v1336 = vsel %vm723, %v1313, %v1335
    %v1337 = vsel %vm725, %v1322, %v1336
    %v1338 = vsel %vm727, %v1331, %v1337
    %v1340 = vadd.s32 %v102, 4294967248
    %v1341 = vlaneseq
    %v1342 = vshrl.u32 %v1341, 7
    %v1343 = vsub.s32 %v1340, %v1342
    %v1344 = vrot.slane %v1048, %v1343
    %v1345 = vadd.s32 %v102, 4294967240
    %v1346 = vlaneseq
    %v1347 = vshrl.u32 %v1346, 7
    %v1348 = vsub.s32 %v1345, %v1347
    %v1349 = vrot.slane %v1051, %v1348
    %vm1350 = vcmask 523712
    %v1351 = vsel %vm1350, %v1349, %v1344
    %v1352 = vlaneseq
    %v1353 = vshrl.u32 %v1352, 7
    %v1354 = vsub.s32 %v1340, %v1353
    %v1355 = vrot.slane %v1054, %v1354
    %v1356 = vlaneseq
    %v1357 = vshrl.u32 %v1356, 7
    %v1358 = vsub.s32 %v1345, %v1357
    %v1359 = vrot.slane %v1057, %v1358
    %v1360 = vsel %vm1350, %v1359, %v1355
    %v1361 = vlaneseq
    %v1362 = vshrl.u32 %v1361, 7
    %v1363 = vsub.s32 %v1340, %v1362
    %v1364 = vrot.slane %v1060, %v1363
    %v1365 = vlaneseq
    %v1366 = vshrl.u32 %v1365, 7
    %v1367 = vsub.s32 %v1345, %v1366
    %v1368 = vrot.slane %v1063, %v1367
    %v1369 = vsel %vm1350, %v1368, %v1364
    %v1370 = vlaneseq
    %v1371 = vshrl.u32 %v1370, 7
    %v1372 = vsub.s32 %v1340, %v1371
    %v1373 = vrot.slane %v1066, %v1372
    %v1374 = vlaneseq
    %v1375 = vshrl.u32 %v1374, 7
    %v1376 = vsub.s32 %v1345, %v1375
    %v1377 = vrot.slane %v1069, %v1376
    %v1378 = vsel %vm1350, %v1377, %v1373
    %v1379 = vlaneseq
    %v1380 = vshrl.u32 %v1379, 7
    %v1381 = vsub.s32 %v1340, %v1380
    %v1382 = vrot.slane %v1072, %v1381
    %v1383 = vlaneseq
    %v1384 = vshrl.u32 %v1383, 7
    %v1385 = vsub.s32 %v1345, %v1384
    %v1386 = vrot.slane %v1075, %v1385
    %v1387 = vsel %vm1350, %v1386, %v1382
    %v1388 = vlaneseq
    %v1389 = vshrl.u32 %v1388, 7
    %v1390 = vsub.s32 %v1340, %v1389
    %v1391 = vrot.slane %v1078, %v1390
    %v1392 = vlaneseq
    %v1393 = vshrl.u32 %v1392, 7
    %v1394 = vsub.s32 %v1345, %v1393
    %v1395 = vrot.slane %v1081, %v1394
    %v1396 = vsel %vm1350, %v1395, %v1391
    %v1397 = vlaneseq
    %v1398 = vshrl.u32 %v1397, 7
    %v1399 = vsub.s32 %v1340, %v1398
    %v1400 = vrot.slane %v1084, %v1399
    %v1401 = vlaneseq
    %v1402 = vshrl.u32 %v1401, 7
    %v1403 = vsub.s32 %v1345, %v1402
    %v1404 = vrot.slane %v1087, %v1403
    %v1405 = vsel %vm1350, %v1404, %v1400
    %v1406 = vlaneseq
    %v1407 = vshrl.u32 %v1406, 7
    %v1408 = vsub.s32 %v1340, %v1407
    %v1409 = vrot.slane %v1090, %v1408
    %v1410 = vlaneseq
    %v1411 = vshrl.u32 %v1410, 7
    %v1412 = vsub.s32 %v1345, %v1411
    %v1413 = vrot.slane %v1093, %v1412
    %v1414 = vsel %vm1350, %v1413, %v1409
    %v1415 = vsel %vm715, %v1360, %v1351
    %v1416 = vsel %vm717, %v1369, %v1415
    %v1417 = vsel %vm719, %v1378, %v1416
    %v1418 = vsel %vm721, %v1387, %v1417
    %v1419 = vsel %vm723, %v1396, %v1418
    %v1420 = vsel %vm725, %v1405, %v1419
    %v1421 = vsel %vm727, %v1414, %v1420
    %v1423 = vadd.s32 %v102, 4294967232
    %v1424 = vlaneseq
    %v1425 = vshrl.u32 %v1424, 7
    %v1426 = vsub.s32 %v1423, %v1425
    %v1427 = vrot.slane %v1048, %v1426
    %v1428 = vadd.s32 %v102, 4294967224
    %v1429 = vlaneseq
    %v1430 = vshrl.u32 %v1429, 7
    %v1431 = vsub.s32 %v1428, %v1430
    %v1432 = vrot.slane %v1051, %v1431
    %vm1433 = vcmask 654912
    %v1434 = vsel %vm1433, %v1432, %v1427
    %v1435 = vlaneseq
    %v1436 = vshrl.u32 %v1435, 7
    %v1437 = vsub.s32 %v1423, %v1436
    %v1438 = vrot.slane %v1054, %v1437
    %v1439 = vlaneseq
    %v1440 = vshrl.u32 %v1439, 7
    %v1441 = vsub.s32 %v1428, %v1440
    %v1442 = vrot.slane %v1057, %v1441
    %v1443 = vsel %vm1433, %v1442, %v1438
    %v1444 = vlaneseq
    %v1445 = vshrl.u32 %v1444, 7
    %v1446 = vsub.s32 %v1423, %v1445
    %v1447 = vrot.slane %v1060, %v1446
    %v1448 = vlaneseq
    %v1449 = vshrl.u32 %v1448, 7
    %v1450 = vsub.s32 %v1428, %v1449
    %v1451 = vrot.slane %v1063, %v1450
    %v1452 = vsel %vm1433, %v1451, %v1447
    %v1453 = vlaneseq
    %v1454 = vshrl.u32 %v1453, 7
    %v1455 = vsub.s32 %v1423, %v1454
    %v1456 = vrot.slane %v1066, %v1455
    %v1457 = vlaneseq
    %v1458 = vshrl.u32 %v1457, 7
    %v1459 = vsub.s32 %v1428, %v1458
    %v1460 = vrot.slane %v1069, %v1459
    %v1461 = vsel %vm1433, %v1460, %v1456
    %v1462 = vlaneseq
    %v1463 = vshrl.u32 %v1462, 7
    %v1464 = vsub.s32 %v1423, %v1463
    %v1465 = vrot.slane %v1072, %v1464
    %v1466 = vlaneseq
    %v1467 = vshrl.u32 %v1466, 7
    %v1468 = vsub.s32 %v1428, %v1467
    %v1469 = vrot.slane %v1075, %v1468
    %v1470 = vsel %vm1433, %v1469, %v1465
    %v1471 = vlaneseq
    %v1472 = vshrl.u32 %v1471, 7
    %v1473 = vsub.s32 %v1423, %v1472
    %v1474 = vrot.slane %v1078, %v1473
    %v1475 = vlaneseq
    %v1476 = vshrl.u32 %v1475, 7
    %v1477 = vsub.s32 %v1428, %v1476
    %v1478 = vrot.slane %v1081, %v1477
    %v1479 = vsel %vm1433, %v1478, %v1474
    %v1480 = vlaneseq
    %v1481 = vshrl.u32 %v1480, 7
    %v1482 = vsub.s32 %v1423, %v1481
    %v1483 = vrot.slane %v1084, %v1482
    %v1484 = vlaneseq
    %v1485 = vshrl.u32 %v1484, 7
    %v1486 = vsub.s32 %v1428, %v1485
    %v1487 = vrot.slane %v1087, %v1486
    %v1488 = vsel %vm1433, %v1487, %v1483
    %v1489 = vlaneseq
    %v1490 = vshrl.u32 %v1489, 7
    %v1491 = vsub.s32 %v1423, %v1490
    %v1492 = vrot.slane %v1090, %v1491
    %v1493 = vlaneseq
    %v1494 = vshrl.u32 %v1493, 7
    %v1495 = vsub.s32 %v1428, %v1494
    %v1496 = vrot.slane %v1093, %v1495
    %v1497 = vsel %vm1433, %v1496, %v1492
    %v1498 = vsel %vm715, %v1443, %v1434
    %v1499 = vsel %vm717, %v1452, %v1498
    %v1500 = vsel %vm719, %v1461, %v1499
    %v1501 = vsel %vm721, %v1470, %v1500
    %v1502 = vsel %vm723, %v1479, %v1501
    %v1503 = vsel %vm725, %v1488, %v1502
    %v1504 = vsel %vm727, %v1497, %v1503
    %v1506 = vadd.s32 %v102, 4294967216
    %v1507 = vlaneseq
    %v1508 = vshrl.u32 %v1507, 7
    %v1509 = vsub.s32 %v1506, %v1508
    %v1510 = vrot.slane %v1048, %v1509
    %v1511 = vadd.s32 %v102, 4294967208
    %v1512 = vlaneseq
    %v1513 = vshrl.u32 %v1512, 7
    %v1514 = vsub.s32 %v1511, %v1513
    %v1515 = vrot.slane %v1051, %v1514
    %vm1516 = vcmask 786112
    %v1517 = vsel %vm1516, %v1515, %v1510
    %v1518 = vlaneseq
    %v1519 = vshrl.u32 %v1518, 7
    %v1520 = vsub.s32 %v1506, %v1519
    %v1521 = vrot.slane %v1054, %v1520
    %v1522 = vlaneseq
    %v1523 = vshrl.u32 %v1522, 7
    %v1524 = vsub.s32 %v1511, %v1523
    %v1525 = vrot.slane %v1057, %v1524
    %v1526 = vsel %vm1516, %v1525, %v1521
    %v1527 = vlaneseq
    %v1528 = vshrl.u32 %v1527, 7
    %v1529 = vsub.s32 %v1506, %v1528
    %v1530 = vrot.slane %v1060, %v1529
    %v1531 = vlaneseq
    %v1532 = vshrl.u32 %v1531, 7
    %v1533 = vsub.s32 %v1511, %v1532
    %v1534 = vrot.slane %v1063, %v1533
    %v1535 = vsel %vm1516, %v1534, %v1530
    %v1536 = vlaneseq
    %v1537 = vshrl.u32 %v1536, 7
    %v1538 = vsub.s32 %v1506, %v1537
    %v1539 = vrot.slane %v1066, %v1538
    %v1540 = vlaneseq
    %v1541 = vshrl.u32 %v1540, 7
    %v1542 = vsub.s32 %v1511, %v1541
    %v1543 = vrot.slane %v1069, %v1542
    %v1544 = vsel %vm1516, %v1543, %v1539
    %v1545 = vlaneseq
    %v1546 = vshrl.u32 %v1545, 7
    %v1547 = vsub.s32 %v1506, %v1546
    %v1548 = vrot.slane %v1072, %v1547
    %v1549 = vlaneseq
    %v1550 = vshrl.u32 %v1549, 7
    %v1551 = vsub.s32 %v1511, %v1550
    %v1552 = vrot.slane %v1075, %v1551
    %v1553 = vsel %vm1516, %v1552, %v1548
    %v1554 = vlaneseq
    %v1555 = vshrl.u32 %v1554, 7
    %v1556 = vsub.s32 %v1506, %v1555
    %v1557 = vrot.slane %v1078, %v1556
    %v1558 = vlaneseq
    %v1559 = vshrl.u32 %v1558, 7
    %v1560 = vsub.s32 %v1511, %v1559
    %v1561 = vrot.slane %v1081, %v1560
    %v1562 = vsel %vm1516, %v1561, %v1557
    %v1563 = vlaneseq
    %v1564 = vshrl.u32 %v1563, 7
    %v1565 = vsub.s32 %v1506, %v1564
    %v1566 = vrot.slane %v1084, %v1565
    %v1567 = vlaneseq
    %v1568 = vshrl.u32 %v1567, 7
    %v1569 = vsub.s32 %v1511, %v1568
    %v1570 = vrot.slane %v1087, %v1569
    %v1571 = vsel %vm1516, %v1570, %v1566
    %v1572 = vlaneseq
    %v1573 = vshrl.u32 %v1572, 7
    %v1574 = vsub.s32 %v1506, %v1573
    %v1575 = vrot.slane %v1090, %v1574
    %v1576 = vlaneseq
    %v1577 = vshrl.u32 %v1576, 7
    %v1578 = vsub.s32 %v1511, %v1577
    %v1579 = vrot.slane %v1093, %v1578
    %v1580 = vsel %vm1516, %v1579, %v1575
    %v1581 = vsel %vm715, %v1526, %v1517
    %v1582 = vsel %vm717, %v1535, %v1581
    %v1583 = vsel %vm719, %v1544, %v1582
    %v1584 = vsel %vm721, %v1553, %v1583
    %v1585 = vsel %vm723, %v1562, %v1584
    %v1586 = vsel %vm725, %v1571, %v1585
    %v1587 = vsel %vm727, %v1580, %v1586
    %v1589 = vadd.s32 %v102, 4294967200
    %v1590 = vlaneseq
    %v1591 = vshrl.u32 %v1590, 7
    %v1592 = vsub.s32 %v1589, %v1591
    %v1593 = vrot.slane %v1048, %v1592
    %v1594 = vadd.s32 %v102, 4294967192
    %v1595 = vlaneseq
    %v1596 = vshrl.u32 %v1595, 7
    %v1597 = vsub.s32 %v1594, %v1596
    %v1598 = vrot.slane %v1051, %v1597
    %vm1599 = vcmask 917312
    %v1600 = vsel %vm1599, %v1598, %v1593
    %v1601 = vlaneseq
    %v1602 = vshrl.u32 %v1601, 7
    %v1603 = vsub.s32 %v1589, %v1602
    %v1604 = vrot.slane %v1054, %v1603
    %v1605 = vlaneseq
    %v1606 = vshrl.u32 %v1605, 7
    %v1607 = vsub.s32 %v1594, %v1606
    %v1608 = vrot.slane %v1057, %v1607
    %v1609 = vsel %vm1599, %v1608, %v1604
    %v1610 = vlaneseq
    %v1611 = vshrl.u32 %v1610, 7
    %v1612 = vsub.s32 %v1589, %v1611
    %v1613 = vrot.slane %v1060, %v1612
    %v1614 = vlaneseq
    %v1615 = vshrl.u32 %v1614, 7
    %v1616 = vsub.s32 %v1594, %v1615
    %v1617 = vrot.slane %v1063, %v1616
    %v1618 = vsel %vm1599, %v1617, %v1613
    %v1619 = vlaneseq
    %v1620 = vshrl.u32 %v1619, 7
    %v1621 = vsub.s32 %v1589, %v1620
    %v1622 = vrot.slane %v1066, %v1621
    %v1623 = vlaneseq
    %v1624 = vshrl.u32 %v1623, 7
    %v1625 = vsub.s32 %v1594, %v1624
    %v1626 = vrot.slane %v1069, %v1625
    %v1627 = vsel %vm1599, %v1626, %v1622
    %v1628 = vlaneseq
    %v1629 = vshrl.u32 %v1628, 7
    %v1630 = vsub.s32 %v1589, %v1629
    %v1631 = vrot.slane %v1072, %v1630
    %v1632 = vlaneseq
    %v1633 = vshrl.u32 %v1632, 7
    %v1634 = vsub.s32 %v1594, %v1633
    %v1635 = vrot.slane %v1075, %v1634
    %v1636 = vsel %vm1599, %v1635, %v1631
    %v1637 = vlaneseq
    %v1638 = vshrl.u32 %v1637, 7
    %v1639 = vsub.s32 %v1589, %v1638
    %v1640 = vrot.slane %v1078, %v1639
    %v1641 = vlaneseq
    %v1642 = vshrl.u32 %v1641, 7
    %v1643 = vsub.s32 %v1594, %v1642
    %v1644 = vrot.slane %v1081, %v1643
    %v1645 = vsel %vm1599, %v1644, %v1640
    %v1646 = vlaneseq
    %v1647 = vshrl.u32 %v1646, 7
    %v1648 = vsub.s32 %v1589, %v1647
    %v1649 = vrot.slane %v1084, %v1648
    %v1650 = vlaneseq
    %v1651 = vshrl.u32 %v1650, 7
    %v1652 = vsub.s32 %v1594, %v1651
    %v1653 = vrot.slane %v1087, %v1652
    %v1654 = vsel %vm1599, %v1653, %v1649
    %v1655 = vlaneseq
    %v1656 = vshrl.u32 %v1655, 7
    %v1657 = vsub.s32 %v1589, %v1656
    %v1658 = vrot.slane %v1090, %v1657
    %v1659 = vlaneseq
    %v1660 = vshrl.u32 %v1659, 7
    %v1661 = vsub.s32 %v1594, %v1660
    %v1662 = vrot.slane %v1093, %v1661
    %v1663 = vsel %vm1599, %v1662, %v1658
    %v1664 = vsel %vm715, %v1609, %v1600
    %v1665 = vsel %vm717, %v1618, %v1664
    %v1666 = vsel %vm719, %v1627, %v1665
    %v1667 = vsel %vm721, %v1636, %v1666
    %v1668 = vsel %vm723, %v1645, %v1667
    %v1669 = vsel %vm725, %v1654, %v1668
    %v1670 = vsel %vm727, %v1663, %v1669
    %v1672 = vadd.s32 %v102, 4294967184
    %v1673 = vlaneseq
    %v1674 = vshrl.u32 %v1673, 7
    %v1675 = vsub.s32 %v1672, %v1674
    %v1676 = vrot.slane %v1048, %v1675
    %v1677 = vadd.s32 %v102, 4294967176
    %v1678 = vlaneseq
    %v1679 = vshrl.u32 %v1678, 7
    %v1680 = vsub.s32 %v1677, %v1679
    %v1681 = vrot.slane %v1051, %v1680
    %vm1682 = vcmask 1048512
    %v1683 = vsel %vm1682, %v1681, %v1676
    %v1684 = vlaneseq
    %v1685 = vshrl.u32 %v1684, 7
    %v1686 = vsub.s32 %v1672, %v1685
    %v1687 = vrot.slane %v1054, %v1686
    %v1688 = vlaneseq
    %v1689 = vshrl.u32 %v1688, 7
    %v1690 = vsub.s32 %v1677, %v1689
    %v1691 = vrot.slane %v1057, %v1690
    %v1692 = vsel %vm1682, %v1691, %v1687
    %v1693 = vlaneseq
    %v1694 = vshrl.u32 %v1693, 7
    %v1695 = vsub.s32 %v1672, %v1694
    %v1696 = vrot.slane %v1060, %v1695
    %v1697 = vlaneseq
    %v1698 = vshrl.u32 %v1697, 7
    %v1699 = vsub.s32 %v1677, %v1698
    %v1700 = vrot.slane %v1063, %v1699
    %v1701 = vsel %vm1682, %v1700, %v1696
    %v1702 = vlaneseq
    %v1703 = vshrl.u32 %v1702, 7
    %v1704 = vsub.s32 %v1672, %v1703
    %v1705 = vrot.slane %v1066, %v1704
    %v1706 = vlaneseq
    %v1707 = vshrl.u32 %v1706, 7
    %v1708 = vsub.s32 %v1677, %v1707
    %v1709 = vrot.slane %v1069, %v1708
    %v1710 = vsel %vm1682, %v1709, %v1705
    %v1711 = vlaneseq
    %v1712 = vshrl.u32 %v1711, 7
    %v1713 = vsub.s32 %v1672, %v1712
    %v1714 = vrot.slane %v1072, %v1713
    %v1715 = vlaneseq
    %v1716 = vshrl.u32 %v1715, 7
    %v1717 = vsub.s32 %v1677, %v1716
    %v1718 = vrot.slane %v1075, %v1717
    %v1719 = vsel %vm1682, %v1718, %v1714
    %v1720 = vlaneseq
    %v1721 = vshrl.u32 %v1720, 7
    %v1722 = vsub.s32 %v1672, %v1721
    %v1723 = vrot.slane %v1078, %v1722
    %v1724 = vlaneseq
    %v1725 = vshrl.u32 %v1724, 7
    %v1726 = vsub.s32 %v1677, %v1725
    %v1727 = vrot.slane %v1081, %v1726
    %v1728 = vsel %vm1682, %v1727, %v1723
    %v1729 = vlaneseq
    %v1730 = vshrl.u32 %v1729, 7
    %v1731 = vsub.s32 %v1672, %v1730
    %v1732 = vrot.slane %v1084, %v1731
    %v1733 = vlaneseq
    %v1734 = vshrl.u32 %v1733, 7
    %v1735 = vsub.s32 %v1677, %v1734
    %v1736 = vrot.slane %v1087, %v1735
    %v1737 = vsel %vm1682, %v1736, %v1732
    %v1738 = vlaneseq
    %v1739 = vshrl.u32 %v1738, 7
    %v1740 = vsub.s32 %v1672, %v1739
    %v1741 = vrot.slane %v1090, %v1740
    %v1742 = vlaneseq
    %v1743 = vshrl.u32 %v1742, 7
    %v1744 = vsub.s32 %v1677, %v1743
    %v1745 = vrot.slane %v1093, %v1744
    %v1746 = vsel %vm1682, %v1745, %v1741
    %v1747 = vsel %vm715, %v1692, %v1683
    %v1748 = vsel %vm717, %v1701, %v1747
    %v1749 = vsel %vm719, %v1710, %v1748
    %v1750 = vsel %vm721, %v1719, %v1749
    %v1751 = vsel %vm723, %v1728, %v1750
    %v1752 = vsel %vm725, %v1737, %v1751
    %v1753 = vsel %vm727, %v1746, %v1752
    %v1755 = vsel %vm133, %v1172, %v1255
    %v1756 = vsel %vm135, %v1755, %v1338
    %v1757 = vsel %vm137, %v1756, %v1421
    %v1758 = vsel %vm139, %v1757, %v1504
    %v1759 = vsel %vm141, %v1758, %v1587
    %v1760 = vsel %vm143, %v1759, %v1670
    %v1761 = vsel %vm145, %v1760, %v1753
    %v1762 = vsel %vm109, %v1761, 0.0
    %1763 = vmatprep.subr.mxu0 0.0
    %1764 = vmatpush1.msra.mxu0 %v50
    %1765 = vmatprep.subr.mxu0 0.0
    %1766 = vmatpush1.msra.mxu0 %v49
    %1767 = vmatprep.subr.mxu0 0.0
    %1768 = vmatpush1.msra.mxu0 %v48
    %1769 = vmatprep.subr.mxu0 0.0
    %1770 = vmatpush1.msra.mxu0 %v47
    %1771 = vmatprep.subr.mxu0 0.0
    %1772 = vmatpush1.msra.mxu0 %v46
    %1773 = vmatprep.subr.mxu0 0.0
    %1774 = vmatpush1.msra.mxu0 %v45
    %1775 = vmatprep.subr.mxu0 0.0
    %1776 = vmatpush1.msra.mxu0 %v44
    %1777 = vmatprep.subr.mxu0 0.0
    %1778 = vmatpush1.msra.mxu0 %v43
    %1779 = vmatprep.subr.mxu0 0.0
    %1780 = vmatpush1.msra.mxu0 %v42
    %1781 = vmatprep.subr.mxu0 0.0
    %1782 = vmatpush1.msra.mxu0 %v41
    %1783 = vmatprep.subr.mxu0 0.0
    %1784 = vmatpush1.msra.mxu0 %v40
    %1785 = vmatprep.subr.mxu0 0.0
    %1786 = vmatpush1.msra.mxu0 %v39
    %1787 = vmatprep.subr.mxu0 0.0
    %1788 = vmatpush1.msra.mxu0 %v38
    %1789 = vmatprep.subr.mxu0 0.0
    %1790 = vmatpush1.msra.mxu0 %v37
    %1791 = vmatprep.subr.mxu0 0.0
    %1792 = vmatpush1.msra.mxu0 %v36
    %1793 = vmatprep.subr.mxu0 0.0
    %1794 = vmatpush1.msra.mxu0 %v35
    %1795 = vmatprep.subr.mxu0 0.0
    %1796 = vmatpush2.msra.mxu0 0.0
    %1797 = vmatprep.subr.mxu0 0.0
    %1798 = vmatpush2.msra.mxu0 0.0
    %1799 = vmatprep.subr.mxu0 0.0
    %1800 = vmatpush2.msra.mxu0 0.0
    %1801 = vmatprep.subr.mxu0 0.0
    %1802 = vmatpush2.msra.mxu0 0.0
    %1803 = vmatprep.subr.mxu0 0.0
    %1804 = vmatpush2.msra.mxu0 0.0
    %1805 = vmatprep.subr.mxu0 0.0
    %1806 = vmatpush2.msra.mxu0 0.0
    %1807 = vmatprep.subr.mxu0 0.0
    %1808 = vmatpush2.msra.mxu0 0.0
    %1809 = vmatprep.subr.mxu0 0.0
    %1810 = vmatpush2.msra.mxu0 0.0
    %1811 = vmatprep.subr.mxu0 0.0
    %1812 = vmatpush2.msra.mxu0 0.0
    %1813 = vmatprep.subr.mxu0 0.0
    %1814 = vmatpush2.msra.mxu0 0.0
    %1815 = vmatprep.subr.mxu0 0.0
    %1816 = vmatpush2.msra.mxu0 0.0
    %1817 = vmatprep.subr.mxu0 0.0
    %1818 = vmatpush2.msra.mxu0 0.0
    %1819 = vmatprep.subr.mxu0 0.0
    %1820 = vmatpush2.msra.mxu0 0.0
    %1821 = vmatprep.subr.mxu0 0.0
    %1822 = vmatpush2.msra.mxu0 0.0
    %1823 = vmatprep.subr.mxu0 0.0
    %1824 = vmatpush2.msra.mxu0 0.0
    %1825 = vmatprep.subr.mxu0 0.0
    %1826 = vmatpush2.msra.mxu0 0.0
    %1827 = vmatprep.mubr.f32.mxu0 0.0
    %1828 = vmatmul.mubr.f32.gmra.mxu0 %v1762
    %v1829 = vpop.f32.mrf.mxu0
    %v1830 = vadd.f32 0.0, %v1829
    %v1831 = vpop.f32.mrf.mxu0
    %1832 = vdwg.mxu0
    %v1834 = vsel %vm139, %v1830, 0
    %1836 = vmatprep.subr.mxu0 0.0
    %1837 = vmatpush1.msra.mxu0 0.0
    %1838 = vmatprep.subr.mxu0 0.0
    %1839 = vmatpush1.msra.mxu0 0.0
    %1840 = vmatprep.subr.mxu0 0.0
    %1841 = vmatpush1.msra.mxu0 0.0
    %1842 = vmatprep.subr.mxu0 0.0
    %1843 = vmatpush1.msra.mxu0 0.0
    %1844 = vmatprep.subr.mxu0 0.0
    %1845 = vmatpush1.msra.mxu0 0.0
    %1846 = vmatprep.subr.mxu0 0.0
    %1847 = vmatpush1.msra.mxu0 0.0
    %1848 = vmatprep.subr.mxu0 0.0
    %1849 = vmatpush1.msra.mxu0 0.0
    %1850 = vmatprep.subr.mxu0 0.0
    %1851 = vmatpush1.msra.mxu0 0.0
    %1852 = vmatprep.subr.mxu0 %v82
    %1853 = vmatpush1.msra.mxu0 %v81
    %1854 = vmatprep.subr.mxu0 %v80
    %1855 = vmatpush1.msra.mxu0 %v79
    %1856 = vmatprep.subr.mxu0 %v78
    %1857 = vmatpush1.msra.mxu0 %v77
    %1858 = vmatprep.subr.mxu0 %v76
    %1859 = vmatpush1.msra.mxu0 %v75
    %1860 = vmatprep.subr.mxu0 %v74
    %1861 = vmatpush1.msra.mxu0 %v73
    %1862 = vmatprep.subr.mxu0 %v72
    %1863 = vmatpush1.msra.mxu0 %v71
    %1864 = vmatprep.subr.mxu0 %v70
    %1865 = vmatpush1.msra.mxu0 %v69
    %1866 = vmatprep.subr.mxu0 %v68
    %1867 = vmatpush1.msra.mxu0 %v67
    %1868 = vmatprep.subr.mxu0 0.0
    %1869 = vmatpush2.msra.mxu0 0.0
    %1870 = vmatprep.subr.mxu0 0.0
    %1871 = vmatpush2.msra.mxu0 0.0
    %1872 = vmatprep.subr.mxu0 0.0
    %1873 = vmatpush2.msra.mxu0 0.0
    %1874 = vmatprep.subr.mxu0 0.0
    %1875 = vmatpush2.msra.mxu0 0.0
    %1876 = vmatprep.subr.mxu0 0.0
    %1877 = vmatpush2.msra.mxu0 0.0
    %1878 = vmatprep.subr.mxu0 0.0
    %1879 = vmatpush2.msra.mxu0 0.0
    %1880 = vmatprep.subr.mxu0 0.0
    %1881 = vmatpush2.msra.mxu0 0.0
    %1882 = vmatprep.subr.mxu0 0.0
    %1883 = vmatpush2.msra.mxu0 0.0
    %1884 = vmatprep.subr.mxu0 0.0
    %1885 = vmatpush2.msra.mxu0 0.0
    %1886 = vmatprep.subr.mxu0 0.0
    %1887 = vmatpush2.msra.mxu0 0.0
    %1888 = vmatprep.subr.mxu0 0.0
    %1889 = vmatpush2.msra.mxu0 0.0
    %1890 = vmatprep.subr.mxu0 0.0
    %1891 = vmatpush2.msra.mxu0 0.0
    %1892 = vmatprep.subr.mxu0 0.0
    %1893 = vmatpush2.msra.mxu0 0.0
    %1894 = vmatprep.subr.mxu0 0.0
    %1895 = vmatpush2.msra.mxu0 0.0
    %1896 = vmatprep.subr.mxu0 0.0
    %1897 = vmatpush2.msra.mxu0 0.0
    %1898 = vmatprep.subr.mxu0 0.0
    %1899 = vmatpush2.msra.mxu0 0.0
    %1900 = vmatprep.mubr.f32.mxu0 0.0
    %1901 = vmatmul.mubr.f32.gmra.mxu0 %v1834
    %v1902 = vpop.f32.mrf.mxu0
    %v1903 = vadd.f32 0.0, %v1902
    %v1904 = vpop.f32.mrf.mxu0
    %v1905 = vadd.f32 0.0, %v1904
    %1906 = vdwg.mxu0
    %v1907 = vsel %vm139, %v470, 0
    %1909 = vmatprep.subr.mxu0 0.0
    %1910 = vmatpush1.msra.mxu0 0.0
    %1911 = vmatprep.subr.mxu0 0.0
    %1912 = vmatpush1.msra.mxu0 0.0
    %1913 = vmatprep.subr.mxu0 0.0
    %1914 = vmatpush1.msra.mxu0 0.0
    %1915 = vmatprep.subr.mxu0 0.0
    %1916 = vmatpush1.msra.mxu0 0.0
    %1917 = vmatprep.subr.mxu0 0.0
    %1918 = vmatpush1.msra.mxu0 0.0
    %1919 = vmatprep.subr.mxu0 0.0
    %1920 = vmatpush1.msra.mxu0 0.0
    %1921 = vmatprep.subr.mxu0 0.0
    %1922 = vmatpush1.msra.mxu0 0.0
    %1923 = vmatprep.subr.mxu0 0.0
    %1924 = vmatpush1.msra.mxu0 0.0
    %1925 = vmatprep.subr.mxu0 %v66
    %1926 = vmatpush1.msra.mxu0 %v65
    %1927 = vmatprep.subr.mxu0 %v64
    %1928 = vmatpush1.msra.mxu0 %v63
    %1929 = vmatprep.subr.mxu0 %v62
    %1930 = vmatpush1.msra.mxu0 %v61
    %1931 = vmatprep.subr.mxu0 %v60
    %1932 = vmatpush1.msra.mxu0 %v59
    %1933 = vmatprep.subr.mxu0 %v58
    %1934 = vmatpush1.msra.mxu0 %v57
    %1935 = vmatprep.subr.mxu0 %v56
    %1936 = vmatpush1.msra.mxu0 %v55
    %1937 = vmatprep.subr.mxu0 %v54
    %1938 = vmatpush1.msra.mxu0 %v53
    %1939 = vmatprep.subr.mxu0 %v52
    %1940 = vmatpush1.msra.mxu0 %v51
    %1941 = vmatprep.subr.mxu0 0.0
    %1942 = vmatpush2.msra.mxu0 0.0
    %1943 = vmatprep.subr.mxu0 0.0
    %1944 = vmatpush2.msra.mxu0 0.0
    %1945 = vmatprep.subr.mxu0 0.0
    %1946 = vmatpush2.msra.mxu0 0.0
    %1947 = vmatprep.subr.mxu0 0.0
    %1948 = vmatpush2.msra.mxu0 0.0
    %1949 = vmatprep.subr.mxu0 0.0
    %1950 = vmatpush2.msra.mxu0 0.0
    %1951 = vmatprep.subr.mxu0 0.0
    %1952 = vmatpush2.msra.mxu0 0.0
    %1953 = vmatprep.subr.mxu0 0.0
    %1954 = vmatpush2.msra.mxu0 0.0
    %1955 = vmatprep.subr.mxu0 0.0
    %1956 = vmatpush2.msra.mxu0 0.0
    %1957 = vmatprep.subr.mxu0 0.0
    %1958 = vmatpush2.msra.mxu0 0.0
    %1959 = vmatprep.subr.mxu0 0.0
    %1960 = vmatpush2.msra.mxu0 0.0
    %1961 = vmatprep.subr.mxu0 0.0
    %1962 = vmatpush2.msra.mxu0 0.0
    %1963 = vmatprep.subr.mxu0 0.0
    %1964 = vmatpush2.msra.mxu0 0.0
    %1965 = vmatprep.subr.mxu0 0.0
    %1966 = vmatpush2.msra.mxu0 0.0
    %1967 = vmatprep.subr.mxu0 0.0
    %1968 = vmatpush2.msra.mxu0 0.0
    %1969 = vmatprep.subr.mxu0 0.0
    %1970 = vmatpush2.msra.mxu0 0.0
    %1971 = vmatprep.subr.mxu0 0.0
    %1972 = vmatpush2.msra.mxu0 0.0
    %1973 = vmatprep.mubr.f32.mxu0 0.0
    %1974 = vmatmul.mubr.f32.gmra.mxu0 %v1907
    %v1975 = vpop.f32.mrf.mxu0
    %v1976 = vadd.f32 %v1903, %v1975
    %v1977 = vpop.f32.mrf.mxu0
    %v1978 = vadd.f32 %v1905, %v1977
    %1979 = vdwg.mxu0
    %1980 = vmatprep.subr.mxu0 0.0
    %1981 = vmatpush1.msra.mxu0 0.0
    %1982 = vmatprep.subr.mxu0 0.0
    %1983 = vmatpush1.msra.mxu0 0.0
    %1984 = vmatprep.subr.mxu0 0.0
    %1985 = vmatpush1.msra.mxu0 0.0
    %1986 = vmatprep.subr.mxu0 0.0
    %1987 = vmatpush1.msra.mxu0 0.0
    %1988 = vmatprep.subr.mxu0 0.0
    %1989 = vmatpush1.msra.mxu0 0.0
    %1990 = vmatprep.subr.mxu0 0.0
    %1991 = vmatpush1.msra.mxu0 0.0
    %1992 = vmatprep.subr.mxu0 0.0
    %1993 = vmatpush1.msra.mxu0 0.0
    %1994 = vmatprep.subr.mxu0 0.0
    %1995 = vmatpush1.msra.mxu0 0.0
    %1996 = vmatprep.subr.mxu0 %v98
    %1997 = vmatpush1.msra.mxu0 %v97
    %1998 = vmatprep.subr.mxu0 %v96
    %1999 = vmatpush1.msra.mxu0 %v95
    %2000 = vmatprep.subr.mxu0 %v94
    %2001 = vmatpush1.msra.mxu0 %v93
    %2002 = vmatprep.subr.mxu0 %v92
    %2003 = vmatpush1.msra.mxu0 %v91
    %2004 = vmatprep.subr.mxu0 %v90
    %2005 = vmatpush1.msra.mxu0 %v89
    %2006 = vmatprep.subr.mxu0 %v88
    %2007 = vmatpush1.msra.mxu0 %v87
    %2008 = vmatprep.subr.mxu0 %v86
    %2009 = vmatpush1.msra.mxu0 %v85
    %2010 = vmatprep.subr.mxu0 %v84
    %2011 = vmatpush1.msra.mxu0 %v83
    %2012 = vmatprep.subr.mxu0 0.0
    %2013 = vmatpush2.msra.mxu0 0.0
    %2014 = vmatprep.subr.mxu0 0.0
    %2015 = vmatpush2.msra.mxu0 0.0
    %2016 = vmatprep.subr.mxu0 0.0
    %2017 = vmatpush2.msra.mxu0 0.0
    %2018 = vmatprep.subr.mxu0 0.0
    %2019 = vmatpush2.msra.mxu0 0.0
    %2020 = vmatprep.subr.mxu0 0.0
    %2021 = vmatpush2.msra.mxu0 0.0
    %2022 = vmatprep.subr.mxu0 0.0
    %2023 = vmatpush2.msra.mxu0 0.0
    %2024 = vmatprep.subr.mxu0 0.0
    %2025 = vmatpush2.msra.mxu0 0.0
    %2026 = vmatprep.subr.mxu0 0.0
    %2027 = vmatpush2.msra.mxu0 0.0
    %2028 = vmatprep.subr.mxu0 0.0
    %2029 = vmatpush2.msra.mxu0 0.0
    %2030 = vmatprep.subr.mxu0 0.0
    %2031 = vmatpush2.msra.mxu0 0.0
    %2032 = vmatprep.subr.mxu0 0.0
    %2033 = vmatpush2.msra.mxu0 0.0
    %2034 = vmatprep.subr.mxu0 0.0
    %2035 = vmatpush2.msra.mxu0 0.0
    %2036 = vmatprep.subr.mxu0 0.0
    %2037 = vmatpush2.msra.mxu0 0.0
    %2038 = vmatprep.subr.mxu0 0.0
    %2039 = vmatpush2.msra.mxu0 0.0
    %2040 = vmatprep.subr.mxu0 0.0
    %2041 = vmatpush2.msra.mxu0 0.0
    %2042 = vmatprep.subr.mxu0 0.0
    %2043 = vmatpush2.msra.mxu0 0.0
    %2044 = vmatprep.mubr.f32.mxu0 0.0
    %2045 = vmatmul.mubr.f32.gmra.mxu0 %v1907
    %v2046 = vpop.f32.mrf.mxu0
    %v2047 = vadd.f32 0.0, %v2046
    %v2048 = vpop.f32.mrf.mxu0
    %v2049 = vadd.f32 0.0, %v2048
    %2050 = vdwg.mxu0
    %v2051 = vadd.f32 %v1976, %v2047
    %v2052 = vadd.f32 %v1978, %v2049
    %v2053 = vadd.f32 %v2051, %v447
    %v2054 = vadd.f32 %v2052, %v451
    %v2055 = vtanh.pop %v2053
    %v2056 = vtanh.pop %v2054
    %v2057 = vmul.f32 %v2055, 0.5
    %v2058 = vadd.f32 %v2057, 0.5
    %v2059 = vmul.f32 %v2056, 0.5
    %v2060 = vadd.f32 %v2059, 0.5
    %v2061 = vmul.f32 %v2058, %v468
    %v2062 = vmul.f32 %v2058, %v2056
    %2064 = vrot.lane.b32.xlu0 %v2062, 64
    %v2065 = vpop.permute.xlu0 %2064
    %v2067 = vadd.f32 %v2061, %v2065
    %v2068 = vtanh.pop %v2067
    %v2069 = vmul.f32 %v2060, %v2068
    %v2071 = vcombine.high %v2069, %v2069
    %v2073 = vunpack.c.l.s4 1966171168
    %v2074 = vunpack.c.0.s8 %v2073
    %v2075 = vlaneseq
    %v2076 = vshrl.u32 %v2075, 7
    %v2077 = vsub.s32 %v2074, %v2076
    %v2078 = vrot.slane %v2069, %v2077
    %v2080 = vunpack.c.l.s4 1966171168
    %v2081 = vunpack.c.0.s8 %v2080
    %v2082 = vlaneseq
    %v2083 = vshrl.u32 %v2082, 7
    %v2084 = vsub.s32 %v2081, %v2083
    %v2085 = vrot.slane %v2071, %v2084
    %v2086 = vcombine.high %v2078, %v2078
    %v2087 = vcombine.high %v2085, %v2085
    %v2089 = vunpack.c.l.s4 1966171168
    %v2090 = vunpack.c.0.s8 %v2089
    %v2091 = vlaneseq
    %v2092 = vshrl.u32 %v2091, 7
    %v2093 = vsub.s32 %v2090, %v2092
    %v2094 = vrot.slane %v2078, %v2093
    %v2096 = vunpack.c.l.s4 1966171168
    %v2097 = vunpack.c.0.s8 %v2096
    %v2098 = vlaneseq
    %v2099 = vshrl.u32 %v2098, 7
    %v2100 = vsub.s32 %v2097, %v2099
    %v2101 = vrot.slane %v2085, %v2100
    %v2103 = vunpack.c.l.s4 1966171168
    %v2104 = vunpack.c.0.s8 %v2103
    %v2105 = vlaneseq
    %v2106 = vshrl.u32 %v2105, 7
    %v2107 = vsub.s32 %v2104, %v2106
    %v2108 = vrot.slane %v2086, %v2107
    %v2110 = vunpack.c.l.s4 1966171168
    %v2111 = vunpack.c.0.s8 %v2110
    %v2112 = vlaneseq
    %v2113 = vshrl.u32 %v2112, 7
    %v2114 = vsub.s32 %v2111, %v2113
    %v2115 = vrot.slane %v2087, %v2114
    %v2116 = vcombine.high %v2094, %v2094
    %v2117 = vcombine.high %v2101, %v2101
    %v2118 = vcombine.high %v2108, %v2108
    %v2119 = vcombine.high %v2115, %v2115
    %v2120 = vlaneseq
    %v2121 = vshrl.u32 %v2120, 7
    %v2122 = vsub.s32 0, %v2121
    %v2123 = vrot.slane %v2094, %v2122
    %v2124 = vlaneseq
    %v2125 = vshrl.u32 %v2124, 7
    %v2126 = vsub.s32 0, %v2125
    %v2127 = vrot.slane %v2108, %v2126
    %v2128 = vlaneseq
    %v2129 = vshrl.u32 %v2128, 7
    %v2130 = vsub.s32 0, %v2129
    %v2131 = vrot.slane %v2116, %v2130
    %v2132 = vlaneseq
    %v2133 = vshrl.u32 %v2132, 7
    %v2134 = vsub.s32 0, %v2133
    %v2135 = vrot.slane %v2118, %v2134
    %v2136 = vlaneseq
    %v2137 = vshrl.u32 %v2136, 7
    %v2138 = vsub.s32 0, %v2137
    %v2139 = vrot.slane %v2101, %v2138
    %v2140 = vlaneseq
    %v2141 = vshrl.u32 %v2140, 7
    %v2142 = vsub.s32 0, %v2141
    %v2143 = vrot.slane %v2115, %v2142
    %v2144 = vlaneseq
    %v2145 = vshrl.u32 %v2144, 7
    %v2146 = vsub.s32 0, %v2145
    %v2147 = vrot.slane %v2117, %v2146
    %v2148 = vlaneseq
    %v2149 = vshrl.u32 %v2148, 7
    %v2150 = vsub.s32 0, %v2149
    %v2151 = vrot.slane %v2119, %v2150
    %v2160 = vmul.f32 %v35, %v2123
    %v2161 = vmul.f32 %v36, %v2123
    %v2162 = vmul.f32 %v37, %v2127
    %v2163 = vmul.f32 %v38, %v2127
    %v2164 = vmul.f32 %v39, %v2131
    %v2165 = vmul.f32 %v40, %v2131
    %v2166 = vmul.f32 %v41, %v2135
    %v2167 = vmul.f32 %v42, %v2135
    %v2168 = vmul.f32 %v43, %v2139
    %v2169 = vmul.f32 %v44, %v2139
    %v2170 = vmul.f32 %v45, %v2143
    %v2171 = vmul.f32 %v46, %v2143
    %v2172 = vmul.f32 %v47, %v2147
    %v2173 = vmul.f32 %v48, %v2147
    %v2174 = vmul.f32 %v49, %v2151
    %v2175 = vmul.f32 %v50, %v2151
    %v2176 = vsel %vm139, %v2160, 0.0
    %2177 = vadd.xlane.f32.xlu0 %v2176
    %v2178 = vpop.xlane.xlu0 %2177
    %v2179 = vsel %vm139, %v2161, 0.0
    %2180 = vadd.xlane.f32.xlu0 %v2179
    %v2181 = vpop.xlane.xlu0 %2180
    %v2182 = vsel %vm139, %v2162, 0.0
    %2183 = vadd.xlane.f32.xlu0 %v2182
    %v2184 = vpop.xlane.xlu0 %2183
    %v2185 = vsel %vm139, %v2163, 0.0
    %2186 = vadd.xlane.f32.xlu0 %v2185
    %v2187 = vpop.xlane.xlu0 %2186
    %v2188 = vsel %vm139, %v2164, 0.0
    %2189 = vadd.xlane.f32.xlu0 %v2188
    %v2190 = vpop.xlane.xlu0 %2189
    %v2191 = vsel %vm139, %v2165, 0.0
    %2192 = vadd.xlane.f32.xlu0 %v2191
    %v2193 = vpop.xlane.xlu0 %2192
    %v2194 = vsel %vm139, %v2166, 0.0
    %2195 = vadd.xlane.f32.xlu0 %v2194
    %v2196 = vpop.xlane.xlu0 %2195
    %v2197 = vsel %vm139, %v2167, 0.0
    %2198 = vadd.xlane.f32.xlu0 %v2197
    %v2199 = vpop.xlane.xlu0 %2198
    %v2200 = vsel %vm139, %v2168, 0.0
    %2201 = vadd.xlane.f32.xlu0 %v2200
    %v2202 = vpop.xlane.xlu0 %2201
    %v2203 = vsel %vm139, %v2169, 0.0
    %2204 = vadd.xlane.f32.xlu0 %v2203
    %v2205 = vpop.xlane.xlu0 %2204
    %v2206 = vsel %vm139, %v2170, 0.0
    %2207 = vadd.xlane.f32.xlu0 %v2206
    %v2208 = vpop.xlane.xlu0 %2207
    %v2209 = vsel %vm139, %v2171, 0.0
    %2210 = vadd.xlane.f32.xlu0 %v2209
    %v2211 = vpop.xlane.xlu0 %2210
    %v2212 = vsel %vm139, %v2172, 0.0
    %2213 = vadd.xlane.f32.xlu0 %v2212
    %v2214 = vpop.xlane.xlu0 %2213
    %v2215 = vsel %vm139, %v2173, 0.0
    %2216 = vadd.xlane.f32.xlu0 %v2215
    %v2217 = vpop.xlane.xlu0 %2216
    %v2218 = vsel %vm139, %v2174, 0.0
    %2219 = vadd.xlane.f32.xlu0 %v2218
    %v2220 = vpop.xlane.xlu0 %2219
    %v2221 = vsel %vm139, %v2175, 0.0
    %2222 = vadd.xlane.f32.xlu0 %v2221
    %v2223 = vpop.xlane.xlu0 %2222
    %v2240 = vlaneseq
    %v2241 = vshrl.u32 %v2240, 7
    %v2242 = vsub.s32 %v102, %v2241
    %v2243 = vrot.slane %v2178, %v2242
    %v2244 = vlaneseq
    %v2245 = vshrl.u32 %v2244, 7
    %v2246 = vsub.s32 %v645, %v2245
    %v2247 = vrot.slane %v2181, %v2246
    %v2248 = vsel %vm650, %v2247, %v2243
    %v2249 = vlaneseq
    %v2250 = vshrl.u32 %v2249, 7
    %v2251 = vsub.s32 %v102, %v2250
    %v2252 = vrot.slane %v2184, %v2251
    %v2253 = vlaneseq
    %v2254 = vshrl.u32 %v2253, 7
    %v2255 = vsub.s32 %v645, %v2254
    %v2256 = vrot.slane %v2187, %v2255
    %v2257 = vsel %vm650, %v2256, %v2252
    %v2258 = vlaneseq
    %v2259 = vshrl.u32 %v2258, 7
    %v2260 = vsub.s32 %v102, %v2259
    %v2261 = vrot.slane %v2190, %v2260
    %v2262 = vlaneseq
    %v2263 = vshrl.u32 %v2262, 7
    %v2264 = vsub.s32 %v645, %v2263
    %v2265 = vrot.slane %v2193, %v2264
    %v2266 = vsel %vm650, %v2265, %v2261
    %v2267 = vlaneseq
    %v2268 = vshrl.u32 %v2267, 7
    %v2269 = vsub.s32 %v102, %v2268
    %v2270 = vrot.slane %v2196, %v2269
    %v2271 = vlaneseq
    %v2272 = vshrl.u32 %v2271, 7
    %v2273 = vsub.s32 %v645, %v2272
    %v2274 = vrot.slane %v2199, %v2273
    %v2275 = vsel %vm650, %v2274, %v2270
    %v2276 = vlaneseq
    %v2277 = vshrl.u32 %v2276, 7
    %v2278 = vsub.s32 %v102, %v2277
    %v2279 = vrot.slane %v2202, %v2278
    %v2280 = vlaneseq
    %v2281 = vshrl.u32 %v2280, 7
    %v2282 = vsub.s32 %v645, %v2281
    %v2283 = vrot.slane %v2205, %v2282
    %v2284 = vsel %vm650, %v2283, %v2279
    %v2285 = vlaneseq
    %v2286 = vshrl.u32 %v2285, 7
    %v2287 = vsub.s32 %v102, %v2286
    %v2288 = vrot.slane %v2208, %v2287
    %v2289 = vlaneseq
    %v2290 = vshrl.u32 %v2289, 7
    %v2291 = vsub.s32 %v645, %v2290
    %v2292 = vrot.slane %v2211, %v2291
    %v2293 = vsel %vm650, %v2292, %v2288
    %v2294 = vlaneseq
    %v2295 = vshrl.u32 %v2294, 7
    %v2296 = vsub.s32 %v102, %v2295
    %v2297 = vrot.slane %v2214, %v2296
    %v2298 = vlaneseq
    %v2299 = vshrl.u32 %v2298, 7
    %v2300 = vsub.s32 %v645, %v2299
    %v2301 = vrot.slane %v2217, %v2300
    %v2302 = vsel %vm650, %v2301, %v2297
    %v2303 = vlaneseq
    %v2304 = vshrl.u32 %v2303, 7
    %v2305 = vsub.s32 %v102, %v2304
    %v2306 = vrot.slane %v2220, %v2305
    %v2307 = vlaneseq
    %v2308 = vshrl.u32 %v2307, 7
    %v2309 = vsub.s32 %v645, %v2308
    %v2310 = vrot.slane %v2223, %v2309
    %v2311 = vsel %vm650, %v2310, %v2306
    %v2312 = vsel %vm715, %v2257, %v2248
    %v2313 = vsel %vm717, %v2266, %v2312
    %v2314 = vsel %vm719, %v2275, %v2313
    %v2315 = vsel %vm721, %v2284, %v2314
    %v2316 = vsel %vm723, %v2293, %v2315
    %v2317 = vsel %vm725, %v2302, %v2316
    %v2318 = vsel %vm727, %v2311, %v2317
    %v2320 = vsel %vm133, %v2318, -inf
    %2321 = vmax.xlane.f32.xlu0 %v2320
    %v2322 = vpop.xlane.xlu0 %2321
    %v2324 = vlaneseq
    %v2325 = vshrl.u32 %v2324, 7
    %v2326 = vsub.s32 0, %v2325
    %v2327 = vrot.slane %v2322, %v2326
    %v2328 = vlaneseq
    %v2329 = vshrl.u32 %v2328, 7
    %v2330 = vsub.s32 1, %v2329
    %v2331 = vrot.slane %v2322, %v2330
    %v2332 = vlaneseq
    %v2333 = vshrl.u32 %v2332, 7
    %v2334 = vsub.s32 2, %v2333
    %v2335 = vrot.slane %v2322, %v2334
    %v2336 = vlaneseq
    %v2337 = vshrl.u32 %v2336, 7
    %v2338 = vsub.s32 3, %v2337
    %v2339 = vrot.slane %v2322, %v2338
    %v2340 = vlaneseq
    %v2341 = vshrl.u32 %v2340, 7
    %v2342 = vsub.s32 4, %v2341
    %v2343 = vrot.slane %v2322, %v2342
    %v2344 = vlaneseq
    %v2345 = vshrl.u32 %v2344, 7
    %v2346 = vsub.s32 5, %v2345
    %v2347 = vrot.slane %v2322, %v2346
    %v2348 = vlaneseq
    %v2349 = vshrl.u32 %v2348, 7
    %v2350 = vsub.s32 6, %v2349
    %v2351 = vrot.slane %v2322, %v2350
    %v2352 = vlaneseq
    %v2353 = vshrl.u32 %v2352, 7
    %v2354 = vsub.s32 7, %v2353
    %v2355 = vrot.slane %v2322, %v2354
    %v2364 = vsub.f32 %v2178, %v2327
    %v2365 = vsub.f32 %v2181, %v2327
    %v2366 = vsub.f32 %v2184, %v2331
    %v2367 = vsub.f32 %v2187, %v2331
    %v2368 = vsub.f32 %v2190, %v2335
    %v2369 = vsub.f32 %v2193, %v2335
    %v2370 = vsub.f32 %v2196, %v2339
    %v2371 = vsub.f32 %v2199, %v2339
    %v2372 = vsub.f32 %v2202, %v2343
    %v2373 = vsub.f32 %v2205, %v2343
    %v2374 = vsub.f32 %v2208, %v2347
    %v2375 = vsub.f32 %v2211, %v2347
    %v2376 = vsub.f32 %v2214, %v2351
    %v2377 = vsub.f32 %v2217, %v2351
    %v2378 = vsub.f32 %v2220, %v2355
    %v2379 = vsub.f32 %v2223, %v2355
    %v2380 = vmul.f32 %v2364, 1.442695
    %v2381 = vpow.pop %v2380
    %v2382 = vmul.f32 %v2365, 1.442695
    %v2383 = vpow.pop %v2382
    %v2384 = vmul.f32 %v2366, 1.442695
    %v2385 = vpow.pop %v2384
    %v2386 = vmul.f32 %v2367, 1.442695
    %v2387 = vpow.pop %v2386
    %v2388 = vmul.f32 %v2368, 1.442695
    %v2389 = vpow.pop %v2388
    %v2390 = vmul.f32 %v2369, 1.442695
    %v2391 = vpow.pop %v2390
    %v2392 = vmul.f32 %v2370, 1.442695
    %v2393 = vpow.pop %v2392
    %v2394 = vmul.f32 %v2371, 1.442695
    %v2395 = vpow.pop %v2394
    %v2396 = vmul.f32 %v2372, 1.442695
    %v2397 = vpow.pop %v2396
    %v2398 = vmul.f32 %v2373, 1.442695
    %v2399 = vpow.pop %v2398
    %v2400 = vmul.f32 %v2374, 1.442695
    %v2401 = vpow.pop %v2400
    %v2402 = vmul.f32 %v2375, 1.442695
    %v2403 = vpow.pop %v2402
    %v2404 = vmul.f32 %v2376, 1.442695
    %v2405 = vpow.pop %v2404
    %v2406 = vmul.f32 %v2377, 1.442695
    %v2407 = vpow.pop %v2406
    %v2408 = vmul.f32 %v2378, 1.442695
    %v2409 = vpow.pop %v2408
    %v2410 = vmul.f32 %v2379, 1.442695
    %v2411 = vpow.pop %v2410
    %2428 = vset.pattern.permute.xlu0 0
    %2429 = vperm.xlu0 %2428, %v2381
    %v2430 = vpop.permute.xlu0 %2429
    %2431 = vset.pattern.permute.xlu0 0
    %2432 = vperm.xlu0 %2431, %v2383
    %v2433 = vpop.permute.xlu0 %2432
    %2434 = vset.pattern.permute.xlu0 0
    %2435 = vperm.xlu0 %2434, %v2385
    %v2436 = vpop.permute.xlu0 %2435
    %2437 = vset.pattern.permute.xlu0 0
    %2438 = vperm.xlu0 %2437, %v2387
    %v2439 = vpop.permute.xlu0 %2438
    %2440 = vset.pattern.permute.xlu0 0
    %2441 = vperm.xlu0 %2440, %v2389
    %v2442 = vpop.permute.xlu0 %2441
    %2443 = vset.pattern.permute.xlu0 0
    %2444 = vperm.xlu0 %2443, %v2391
    %v2445 = vpop.permute.xlu0 %2444
    %2446 = vset.pattern.permute.xlu0 0
    %2447 = vperm.xlu0 %2446, %v2393
    %v2448 = vpop.permute.xlu0 %2447
    %2449 = vset.pattern.permute.xlu0 0
    %2450 = vperm.xlu0 %2449, %v2395
    %v2451 = vpop.permute.xlu0 %2450
    %2452 = vset.pattern.permute.xlu0 0
    %2453 = vperm.xlu0 %2452, %v2397
    %v2454 = vpop.permute.xlu0 %2453
    %2455 = vset.pattern.permute.xlu0 0
    %2456 = vperm.xlu0 %2455, %v2399
    %v2457 = vpop.permute.xlu0 %2456
    %2458 = vset.pattern.permute.xlu0 0
    %2459 = vperm.xlu0 %2458, %v2401
    %v2460 = vpop.permute.xlu0 %2459
    %2461 = vset.pattern.permute.xlu0 0
    %2462 = vperm.xlu0 %2461, %v2403
    %v2463 = vpop.permute.xlu0 %2462
    %2464 = vset.pattern.permute.xlu0 0
    %2465 = vperm.xlu0 %2464, %v2405
    %v2466 = vpop.permute.xlu0 %2465
    %2467 = vset.pattern.permute.xlu0 0
    %2468 = vperm.xlu0 %2467, %v2407
    %v2469 = vpop.permute.xlu0 %2468
    %2470 = vset.pattern.permute.xlu0 0
    %2471 = vperm.xlu0 %2470, %v2409
    %v2472 = vpop.permute.xlu0 %2471
    %2473 = vset.pattern.permute.xlu0 0
    %2474 = vperm.xlu0 %2473, %v2411
    %v2475 = vpop.permute.xlu0 %2474
    %v2476 = vlaneseq
    %v2477 = vshrl.u32 %v2476, 7
    %v2478 = vsub.s32 %v102, %v2477
    %v2479 = vrot.slane %v2430, %v2478
    %v2480 = vlaneseq
    %v2481 = vshrl.u32 %v2480, 7
    %v2482 = vsub.s32 %v645, %v2481
    %v2483 = vrot.slane %v2433, %v2482
    %v2484 = vsel %vm650, %v2483, %v2479
    %v2485 = vlaneseq
    %v2486 = vshrl.u32 %v2485, 7
    %v2487 = vsub.s32 %v102, %v2486
    %v2488 = vrot.slane %v2436, %v2487
    %v2489 = vlaneseq
    %v2490 = vshrl.u32 %v2489, 7
    %v2491 = vsub.s32 %v645, %v2490
    %v2492 = vrot.slane %v2439, %v2491
    %v2493 = vsel %vm650, %v2492, %v2488
    %v2494 = vlaneseq
    %v2495 = vshrl.u32 %v2494, 7
    %v2496 = vsub.s32 %v102, %v2495
    %v2497 = vrot.slane %v2442, %v2496
    %v2498 = vlaneseq
    %v2499 = vshrl.u32 %v2498, 7
    %v2500 = vsub.s32 %v645, %v2499
    %v2501 = vrot.slane %v2445, %v2500
    %v2502 = vsel %vm650, %v2501, %v2497
    %v2503 = vlaneseq
    %v2504 = vshrl.u32 %v2503, 7
    %v2505 = vsub.s32 %v102, %v2504
    %v2506 = vrot.slane %v2448, %v2505
    %v2507 = vlaneseq
    %v2508 = vshrl.u32 %v2507, 7
    %v2509 = vsub.s32 %v645, %v2508
    %v2510 = vrot.slane %v2451, %v2509
    %v2511 = vsel %vm650, %v2510, %v2506
    %v2512 = vlaneseq
    %v2513 = vshrl.u32 %v2512, 7
    %v2514 = vsub.s32 %v102, %v2513
    %v2515 = vrot.slane %v2454, %v2514
    %v2516 = vlaneseq
    %v2517 = vshrl.u32 %v2516, 7
    %v2518 = vsub.s32 %v645, %v2517
    %v2519 = vrot.slane %v2457, %v2518
    %v2520 = vsel %vm650, %v2519, %v2515
    %v2521 = vlaneseq
    %v2522 = vshrl.u32 %v2521, 7
    %v2523 = vsub.s32 %v102, %v2522
    %v2524 = vrot.slane %v2460, %v2523
    %v2525 = vlaneseq
    %v2526 = vshrl.u32 %v2525, 7
    %v2527 = vsub.s32 %v645, %v2526
    %v2528 = vrot.slane %v2463, %v2527
    %v2529 = vsel %vm650, %v2528, %v2524
    %v2530 = vlaneseq
    %v2531 = vshrl.u32 %v2530, 7
    %v2532 = vsub.s32 %v102, %v2531
    %v2533 = vrot.slane %v2466, %v2532
    %v2534 = vlaneseq
    %v2535 = vshrl.u32 %v2534, 7
    %v2536 = vsub.s32 %v645, %v2535
    %v2537 = vrot.slane %v2469, %v2536
    %v2538 = vsel %vm650, %v2537, %v2533
    %v2539 = vlaneseq
    %v2540 = vshrl.u32 %v2539, 7
    %v2541 = vsub.s32 %v102, %v2540
    %v2542 = vrot.slane %v2472, %v2541
    %v2543 = vlaneseq
    %v2544 = vshrl.u32 %v2543, 7
    %v2545 = vsub.s32 %v645, %v2544
    %v2546 = vrot.slane %v2475, %v2545
    %v2547 = vsel %vm650, %v2546, %v2542
    %v2548 = vsel %vm715, %v2493, %v2484
    %v2549 = vsel %vm717, %v2502, %v2548
    %v2550 = vsel %vm719, %v2511, %v2549
    %v2551 = vsel %vm721, %v2520, %v2550
    %v2552 = vsel %vm723, %v2529, %v2551
    %v2553 = vsel %vm725, %v2538, %v2552
    %v2554 = vsel %vm727, %v2547, %v2553
    %v2556 = vsel %vm133, %v2554, 0.0
    %2557 = vadd.xlane.f32.xlu0 %v2556
    %v2558 = vpop.xlane.xlu0 %2557
    %v2559 = vrcp.pop %v2558
    %v2560 = vmul.f32 %v2558, %v2559
    %v2561 = vsub.f32 2.0, %v2560
    %v2562 = vmul.f32 %v2559, %v2561
    %v2564 = vlaneseq
    %v2565 = vshrl.u32 %v2564, 7
    %v2566 = vsub.s32 0, %v2565
    %v2567 = vrot.slane %v2562, %v2566
    %v2568 = vlaneseq
    %v2569 = vshrl.u32 %v2568, 7
    %v2570 = vsub.s32 1, %v2569
    %v2571 = vrot.slane %v2562, %v2570
    %v2572 = vlaneseq
    %v2573 = vshrl.u32 %v2572, 7
    %v2574 = vsub.s32 2, %v2573
    %v2575 = vrot.slane %v2562, %v2574
    %v2576 = vlaneseq
    %v2577 = vshrl.u32 %v2576, 7
    %v2578 = vsub.s32 3, %v2577
    %v2579 = vrot.slane %v2562, %v2578
    %v2580 = vlaneseq
    %v2581 = vshrl.u32 %v2580, 7
    %v2582 = vsub.s32 4, %v2581
    %v2583 = vrot.slane %v2562, %v2582
    %v2584 = vlaneseq
    %v2585 = vshrl.u32 %v2584, 7
    %v2586 = vsub.s32 5, %v2585
    %v2587 = vrot.slane %v2562, %v2586
    %v2588 = vlaneseq
    %v2589 = vshrl.u32 %v2588, 7
    %v2590 = vsub.s32 6, %v2589
    %v2591 = vrot.slane %v2562, %v2590
    %v2592 = vlaneseq
    %v2593 = vshrl.u32 %v2592, 7
    %v2594 = vsub.s32 7, %v2593
    %v2595 = vrot.slane %v2562, %v2594
    %v2604 = vmul.f32 %v2381, %v2567
    %v2605 = vmul.f32 %v2383, %v2567
    %v2606 = vmul.f32 %v2385, %v2571
    %v2607 = vmul.f32 %v2387, %v2571
    %v2608 = vmul.f32 %v2389, %v2575
    %v2609 = vmul.f32 %v2391, %v2575
    %v2610 = vmul.f32 %v2393, %v2579
    %v2611 = vmul.f32 %v2395, %v2579
    %v2612 = vmul.f32 %v2397, %v2583
    %v2613 = vmul.f32 %v2399, %v2583
    %v2614 = vmul.f32 %v2401, %v2587
    %v2615 = vmul.f32 %v2403, %v2587
    %v2616 = vmul.f32 %v2405, %v2591
    %v2617 = vmul.f32 %v2407, %v2591
    %v2618 = vmul.f32 %v2409, %v2595
    %v2619 = vmul.f32 %v2411, %v2595
    %2636 = vset.pattern.permute.xlu0 0
    %2637 = vperm.xlu0 %2636, %v2604
    %v2638 = vpop.permute.xlu0 %2637
    %2639 = vset.pattern.permute.xlu0 0
    %2640 = vperm.xlu0 %2639, %v2605
    %v2641 = vpop.permute.xlu0 %2640
    %2642 = vset.pattern.permute.xlu0 0
    %2643 = vperm.xlu0 %2642, %v2606
    %v2644 = vpop.permute.xlu0 %2643
    %2645 = vset.pattern.permute.xlu0 0
    %2646 = vperm.xlu0 %2645, %v2607
    %v2647 = vpop.permute.xlu0 %2646
    %2648 = vset.pattern.permute.xlu0 0
    %2649 = vperm.xlu0 %2648, %v2608
    %v2650 = vpop.permute.xlu0 %2649
    %2651 = vset.pattern.permute.xlu0 0
    %2652 = vperm.xlu0 %2651, %v2609
    %v2653 = vpop.permute.xlu0 %2652
    %2654 = vset.pattern.permute.xlu0 0
    %2655 = vperm.xlu0 %2654, %v2610
    %v2656 = vpop.permute.xlu0 %2655
    %2657 = vset.pattern.permute.xlu0 0
    %2658 = vperm.xlu0 %2657, %v2611
    %v2659 = vpop.permute.xlu0 %2658
    %2660 = vset.pattern.permute.xlu0 0
    %2661 = vperm.xlu0 %2660, %v2612
    %v2662 = vpop.permute.xlu0 %2661
    %2663 = vset.pattern.permute.xlu0 0
    %2664 = vperm.xlu0 %2663, %v2613
    %v2665 = vpop.permute.xlu0 %2664
    %2666 = vset.pattern.permute.xlu0 0
    %2667 = vperm.xlu0 %2666, %v2614
    %v2668 = vpop.permute.xlu0 %2667
    %2669 = vset.pattern.permute.xlu0 0
    %2670 = vperm.xlu0 %2669, %v2615
    %v2671 = vpop.permute.xlu0 %2670
    %2672 = vset.pattern.permute.xlu0 0
    %2673 = vperm.xlu0 %2672, %v2616
    %v2674 = vpop.permute.xlu0 %2673
    %2675 = vset.pattern.permute.xlu0 0
    %2676 = vperm.xlu0 %2675, %v2617
    %v2677 = vpop.permute.xlu0 %2676
    %2678 = vset.pattern.permute.xlu0 0
    %2679 = vperm.xlu0 %2678, %v2618
    %v2680 = vpop.permute.xlu0 %2679
    %2681 = vset.pattern.permute.xlu0 0
    %2682 = vperm.xlu0 %2681, %v2619
    %v2683 = vpop.permute.xlu0 %2682
    %v2684 = vlaneseq
    %v2685 = vshrl.u32 %v2684, 7
    %v2686 = vsub.s32 %v102, %v2685
    %v2687 = vrot.slane %v2638, %v2686
    %v2688 = vlaneseq
    %v2689 = vshrl.u32 %v2688, 7
    %v2690 = vsub.s32 %v645, %v2689
    %v2691 = vrot.slane %v2641, %v2690
    %v2692 = vsel %vm650, %v2691, %v2687
    %v2693 = vlaneseq
    %v2694 = vshrl.u32 %v2693, 7
    %v2695 = vsub.s32 %v102, %v2694
    %v2696 = vrot.slane %v2644, %v2695
    %v2697 = vlaneseq
    %v2698 = vshrl.u32 %v2697, 7
    %v2699 = vsub.s32 %v645, %v2698
    %v2700 = vrot.slane %v2647, %v2699
    %v2701 = vsel %vm650, %v2700, %v2696
    %v2702 = vlaneseq
    %v2703 = vshrl.u32 %v2702, 7
    %v2704 = vsub.s32 %v102, %v2703
    %v2705 = vrot.slane %v2650, %v2704
    %v2706 = vlaneseq
    %v2707 = vshrl.u32 %v2706, 7
    %v2708 = vsub.s32 %v645, %v2707
    %v2709 = vrot.slane %v2653, %v2708
    %v2710 = vsel %vm650, %v2709, %v2705
    %v2711 = vlaneseq
    %v2712 = vshrl.u32 %v2711, 7
    %v2713 = vsub.s32 %v102, %v2712
    %v2714 = vrot.slane %v2656, %v2713
    %v2715 = vlaneseq
    %v2716 = vshrl.u32 %v2715, 7
    %v2717 = vsub.s32 %v645, %v2716
    %v2718 = vrot.slane %v2659, %v2717
    %v2719 = vsel %vm650, %v2718, %v2714
    %v2720 = vlaneseq
    %v2721 = vshrl.u32 %v2720, 7
    %v2722 = vsub.s32 %v102, %v2721
    %v2723 = vrot.slane %v2662, %v2722
    %v2724 = vlaneseq
    %v2725 = vshrl.u32 %v2724, 7
    %v2726 = vsub.s32 %v645, %v2725
    %v2727 = vrot.slane %v2665, %v2726
    %v2728 = vsel %vm650, %v2727, %v2723
    %v2729 = vlaneseq
    %v2730 = vshrl.u32 %v2729, 7
    %v2731 = vsub.s32 %v102, %v2730
    %v2732 = vrot.slane %v2668, %v2731
    %v2733 = vlaneseq
    %v2734 = vshrl.u32 %v2733, 7
    %v2735 = vsub.s32 %v645, %v2734
    %v2736 = vrot.slane %v2671, %v2735
    %v2737 = vsel %vm650, %v2736, %v2732
    %v2738 = vlaneseq
    %v2739 = vshrl.u32 %v2738, 7
    %v2740 = vsub.s32 %v102, %v2739
    %v2741 = vrot.slane %v2674, %v2740
    %v2742 = vlaneseq
    %v2743 = vshrl.u32 %v2742, 7
    %v2744 = vsub.s32 %v645, %v2743
    %v2745 = vrot.slane %v2677, %v2744
    %v2746 = vsel %vm650, %v2745, %v2741
    %v2747 = vlaneseq
    %v2748 = vshrl.u32 %v2747, 7
    %v2749 = vsub.s32 %v102, %v2748
    %v2750 = vrot.slane %v2680, %v2749
    %v2751 = vlaneseq
    %v2752 = vshrl.u32 %v2751, 7
    %v2753 = vsub.s32 %v645, %v2752
    %v2754 = vrot.slane %v2683, %v2753
    %v2755 = vsel %vm650, %v2754, %v2750
    %v2756 = vsel %vm715, %v2701, %v2692
    %v2757 = vsel %vm717, %v2710, %v2756
    %v2758 = vsel %vm719, %v2719, %v2757
    %v2759 = vsel %vm721, %v2728, %v2758
    %v2760 = vsel %vm723, %v2737, %v2759
    %v2761 = vsel %vm725, %v2746, %v2760
    %v2762 = vsel %vm727, %v2755, %v2761
    %v2764 = vlaneseq
    %v2765 = vshrl.u32 %v2764, 7
    %v2766 = vsub.s32 %v1174, %v2765
    %v2767 = vrot.slane %v2638, %v2766
    %v2768 = vlaneseq
    %v2769 = vshrl.u32 %v2768, 7
    %v2770 = vsub.s32 %v1179, %v2769
    %v2771 = vrot.slane %v2641, %v2770
    %v2772 = vsel %vm1184, %v2771, %v2767
    %v2773 = vlaneseq
    %v2774 = vshrl.u32 %v2773, 7
    %v2775 = vsub.s32 %v1174, %v2774
    %v2776 = vrot.slane %v2644, %v2775
    %v2777 = vlaneseq
    %v2778 = vshrl.u32 %v2777, 7
    %v2779 = vsub.s32 %v1179, %v2778
    %v2780 = vrot.slane %v2647, %v2779
    %v2781 = vsel %vm1184, %v2780, %v2776
    %v2782 = vlaneseq
    %v2783 = vshrl.u32 %v2782, 7
    %v2784 = vsub.s32 %v1174, %v2783
    %v2785 = vrot.slane %v2650, %v2784
    %v2786 = vlaneseq
    %v2787 = vshrl.u32 %v2786, 7
    %v2788 = vsub.s32 %v1179, %v2787
    %v2789 = vrot.slane %v2653, %v2788
    %v2790 = vsel %vm1184, %v2789, %v2785
    %v2791 = vlaneseq
    %v2792 = vshrl.u32 %v2791, 7
    %v2793 = vsub.s32 %v1174, %v2792
    %v2794 = vrot.slane %v2656, %v2793
    %v2795 = vlaneseq
    %v2796 = vshrl.u32 %v2795, 7
    %v2797 = vsub.s32 %v1179, %v2796
    %v2798 = vrot.slane %v2659, %v2797
    %v2799 = vsel %vm1184, %v2798, %v2794
    %v2800 = vlaneseq
    %v2801 = vshrl.u32 %v2800, 7
    %v2802 = vsub.s32 %v1174, %v2801
    %v2803 = vrot.slane %v2662, %v2802
    %v2804 = vlaneseq
    %v2805 = vshrl.u32 %v2804, 7
    %v2806 = vsub.s32 %v1179, %v2805
    %v2807 = vrot.slane %v2665, %v2806
    %v2808 = vsel %vm1184, %v2807, %v2803
    %v2809 = vlaneseq
    %v2810 = vshrl.u32 %v2809, 7
    %v2811 = vsub.s32 %v1174, %v2810
    %v2812 = vrot.slane %v2668, %v2811
    %v2813 = vlaneseq
    %v2814 = vshrl.u32 %v2813, 7
    %v2815 = vsub.s32 %v1179, %v2814
    %v2816 = vrot.slane %v2671, %v2815
    %v2817 = vsel %vm1184, %v2816, %v2812
    %v2818 = vlaneseq
    %v2819 = vshrl.u32 %v2818, 7
    %v2820 = vsub.s32 %v1174, %v2819
    %v2821 = vrot.slane %v2674, %v2820
    %v2822 = vlaneseq
    %v2823 = vshrl.u32 %v2822, 7
    %v2824 = vsub.s32 %v1179, %v2823
    %v2825 = vrot.slane %v2677, %v2824
    %v2826 = vsel %vm1184, %v2825, %v2821
    %v2827 = vlaneseq
    %v2828 = vshrl.u32 %v2827, 7
    %v2829 = vsub.s32 %v1174, %v2828
    %v2830 = vrot.slane %v2680, %v2829
    %v2831 = vlaneseq
    %v2832 = vshrl.u32 %v2831, 7
    %v2833 = vsub.s32 %v1179, %v2832
    %v2834 = vrot.slane %v2683, %v2833
    %v2835 = vsel %vm1184, %v2834, %v2830
    %v2836 = vsel %vm715, %v2781, %v2772
    %v2837 = vsel %vm717, %v2790, %v2836
    %v2838 = vsel %vm719, %v2799, %v2837
    %v2839 = vsel %vm721, %v2808, %v2838
    %v2840 = vsel %vm723, %v2817, %v2839
    %v2841 = vsel %vm725, %v2826, %v2840
    %v2842 = vsel %vm727, %v2835, %v2841
    %v2844 = vlaneseq
    %v2845 = vshrl.u32 %v2844, 7
    %v2846 = vsub.s32 %v1257, %v2845
    %v2847 = vrot.slane %v2638, %v2846
    %v2848 = vlaneseq
    %v2849 = vshrl.u32 %v2848, 7
    %v2850 = vsub.s32 %v1262, %v2849
    %v2851 = vrot.slane %v2641, %v2850
    %v2852 = vsel %vm1267, %v2851, %v2847
    %v2853 = vlaneseq
    %v2854 = vshrl.u32 %v2853, 7
    %v2855 = vsub.s32 %v1257, %v2854
    %v2856 = vrot.slane %v2644, %v2855
    %v2857 = vlaneseq
    %v2858 = vshrl.u32 %v2857, 7
    %v2859 = vsub.s32 %v1262, %v2858
    %v2860 = vrot.slane %v2647, %v2859
    %v2861 = vsel %vm1267, %v2860, %v2856
    %v2862 = vlaneseq
    %v2863 = vshrl.u32 %v2862, 7
    %v2864 = vsub.s32 %v1257, %v2863
    %v2865 = vrot.slane %v2650, %v2864
    %v2866 = vlaneseq
    %v2867 = vshrl.u32 %v2866, 7
    %v2868 = vsub.s32 %v1262, %v2867
    %v2869 = vrot.slane %v2653, %v2868
    %v2870 = vsel %vm1267, %v2869, %v2865
    %v2871 = vlaneseq
    %v2872 = vshrl.u32 %v2871, 7
    %v2873 = vsub.s32 %v1257, %v2872
    %v2874 = vrot.slane %v2656, %v2873
    %v2875 = vlaneseq
    %v2876 = vshrl.u32 %v2875, 7
    %v2877 = vsub.s32 %v1262, %v2876
    %v2878 = vrot.slane %v2659, %v2877
    %v2879 = vsel %vm1267, %v2878, %v2874
    %v2880 = vlaneseq
    %v2881 = vshrl.u32 %v2880, 7
    %v2882 = vsub.s32 %v1257, %v2881
    %v2883 = vrot.slane %v2662, %v2882
    %v2884 = vlaneseq
    %v2885 = vshrl.u32 %v2884, 7
    %v2886 = vsub.s32 %v1262, %v2885
    %v2887 = vrot.slane %v2665, %v2886
    %v2888 = vsel %vm1267, %v2887, %v2883
    %v2889 = vlaneseq
    %v2890 = vshrl.u32 %v2889, 7
    %v2891 = vsub.s32 %v1257, %v2890
    %v2892 = vrot.slane %v2668, %v2891
    %v2893 = vlaneseq
    %v2894 = vshrl.u32 %v2893, 7
    %v2895 = vsub.s32 %v1262, %v2894
    %v2896 = vrot.slane %v2671, %v2895
    %v2897 = vsel %vm1267, %v2896, %v2892
    %v2898 = vlaneseq
    %v2899 = vshrl.u32 %v2898, 7
    %v2900 = vsub.s32 %v1257, %v2899
    %v2901 = vrot.slane %v2674, %v2900
    %v2902 = vlaneseq
    %v2903 = vshrl.u32 %v2902, 7
    %v2904 = vsub.s32 %v1262, %v2903
    %v2905 = vrot.slane %v2677, %v2904
    %v2906 = vsel %vm1267, %v2905, %v2901
    %v2907 = vlaneseq
    %v2908 = vshrl.u32 %v2907, 7
    %v2909 = vsub.s32 %v1257, %v2908
    %v2910 = vrot.slane %v2680, %v2909
    %v2911 = vlaneseq
    %v2912 = vshrl.u32 %v2911, 7
    %v2913 = vsub.s32 %v1262, %v2912
    %v2914 = vrot.slane %v2683, %v2913
    %v2915 = vsel %vm1267, %v2914, %v2910
    %v2916 = vsel %vm715, %v2861, %v2852
    %v2917 = vsel %vm717, %v2870, %v2916
    %v2918 = vsel %vm719, %v2879, %v2917
    %v2919 = vsel %vm721, %v2888, %v2918
    %v2920 = vsel %vm723, %v2897, %v2919
    %v2921 = vsel %vm725, %v2906, %v2920
    %v2922 = vsel %vm727, %v2915, %v2921
    %v2924 = vlaneseq
    %v2925 = vshrl.u32 %v2924, 7
    %v2926 = vsub.s32 %v1340, %v2925
    %v2927 = vrot.slane %v2638, %v2926
    %v2928 = vlaneseq
    %v2929 = vshrl.u32 %v2928, 7
    %v2930 = vsub.s32 %v1345, %v2929
    %v2931 = vrot.slane %v2641, %v2930
    %v2932 = vsel %vm1350, %v2931, %v2927
    %v2933 = vlaneseq
    %v2934 = vshrl.u32 %v2933, 7
    %v2935 = vsub.s32 %v1340, %v2934
    %v2936 = vrot.slane %v2644, %v2935
    %v2937 = vlaneseq
    %v2938 = vshrl.u32 %v2937, 7
    %v2939 = vsub.s32 %v1345, %v2938
    %v2940 = vrot.slane %v2647, %v2939
    %v2941 = vsel %vm1350, %v2940, %v2936
    %v2942 = vlaneseq
    %v2943 = vshrl.u32 %v2942, 7
    %v2944 = vsub.s32 %v1340, %v2943
    %v2945 = vrot.slane %v2650, %v2944
    %v2946 = vlaneseq
    %v2947 = vshrl.u32 %v2946, 7
    %v2948 = vsub.s32 %v1345, %v2947
    %v2949 = vrot.slane %v2653, %v2948
    %v2950 = vsel %vm1350, %v2949, %v2945
    %v2951 = vlaneseq
    %v2952 = vshrl.u32 %v2951, 7
    %v2953 = vsub.s32 %v1340, %v2952
    %v2954 = vrot.slane %v2656, %v2953
    %v2955 = vlaneseq
    %v2956 = vshrl.u32 %v2955, 7
    %v2957 = vsub.s32 %v1345, %v2956
    %v2958 = vrot.slane %v2659, %v2957
    %v2959 = vsel %vm1350, %v2958, %v2954
    %v2960 = vlaneseq
    %v2961 = vshrl.u32 %v2960, 7
    %v2962 = vsub.s32 %v1340, %v2961
    %v2963 = vrot.slane %v2662, %v2962
    %v2964 = vlaneseq
    %v2965 = vshrl.u32 %v2964, 7
    %v2966 = vsub.s32 %v1345, %v2965
    %v2967 = vrot.slane %v2665, %v2966
    %v2968 = vsel %vm1350, %v2967, %v2963
    %v2969 = vlaneseq
    %v2970 = vshrl.u32 %v2969, 7
    %v2971 = vsub.s32 %v1340, %v2970
    %v2972 = vrot.slane %v2668, %v2971
    %v2973 = vlaneseq
    %v2974 = vshrl.u32 %v2973, 7
    %v2975 = vsub.s32 %v1345, %v2974
    %v2976 = vrot.slane %v2671, %v2975
    %v2977 = vsel %vm1350, %v2976, %v2972
    %v2978 = vlaneseq
    %v2979 = vshrl.u32 %v2978, 7
    %v2980 = vsub.s32 %v1340, %v2979
    %v2981 = vrot.slane %v2674, %v2980
    %v2982 = vlaneseq
    %v2983 = vshrl.u32 %v2982, 7
    %v2984 = vsub.s32 %v1345, %v2983
    %v2985 = vrot.slane %v2677, %v2984
    %v2986 = vsel %vm1350, %v2985, %v2981
    %v2987 = vlaneseq
    %v2988 = vshrl.u32 %v2987, 7
    %v2989 = vsub.s32 %v1340, %v2988
    %v2990 = vrot.slane %v2680, %v2989
    %v2991 = vlaneseq
    %v2992 = vshrl.u32 %v2991, 7
    %v2993 = vsub.s32 %v1345, %v2992
    %v2994 = vrot.slane %v2683, %v2993
    %v2995 = vsel %vm1350, %v2994, %v2990
    %v2996 = vsel %vm715, %v2941, %v2932
    %v2997 = vsel %vm717, %v2950, %v2996
    %v2998 = vsel %vm719, %v2959, %v2997
    %v2999 = vsel %vm721, %v2968, %v2998
    %v3000 = vsel %vm723, %v2977, %v2999
    %v3001 = vsel %vm725, %v2986, %v3000
    %v3002 = vsel %vm727, %v2995, %v3001
    %v3004 = vlaneseq
    %v3005 = vshrl.u32 %v3004, 7
    %v3006 = vsub.s32 %v1423, %v3005
    %v3007 = vrot.slane %v2638, %v3006
    %v3008 = vlaneseq
    %v3009 = vshrl.u32 %v3008, 7
    %v3010 = vsub.s32 %v1428, %v3009
    %v3011 = vrot.slane %v2641, %v3010
    %v3012 = vsel %vm1433, %v3011, %v3007
    %v3013 = vlaneseq
    %v3014 = vshrl.u32 %v3013, 7
    %v3015 = vsub.s32 %v1423, %v3014
    %v3016 = vrot.slane %v2644, %v3015
    %v3017 = vlaneseq
    %v3018 = vshrl.u32 %v3017, 7
    %v3019 = vsub.s32 %v1428, %v3018
    %v3020 = vrot.slane %v2647, %v3019
    %v3021 = vsel %vm1433, %v3020, %v3016
    %v3022 = vlaneseq
    %v3023 = vshrl.u32 %v3022, 7
    %v3024 = vsub.s32 %v1423, %v3023
    %v3025 = vrot.slane %v2650, %v3024
    %v3026 = vlaneseq
    %v3027 = vshrl.u32 %v3026, 7
    %v3028 = vsub.s32 %v1428, %v3027
    %v3029 = vrot.slane %v2653, %v3028
    %v3030 = vsel %vm1433, %v3029, %v3025
    %v3031 = vlaneseq
    %v3032 = vshrl.u32 %v3031, 7
    %v3033 = vsub.s32 %v1423, %v3032
    %v3034 = vrot.slane %v2656, %v3033
    %v3035 = vlaneseq
    %v3036 = vshrl.u32 %v3035, 7
    %v3037 = vsub.s32 %v1428, %v3036
    %v3038 = vrot.slane %v2659, %v3037
    %v3039 = vsel %vm1433, %v3038, %v3034
    %v3040 = vlaneseq
    %v3041 = vshrl.u32 %v3040, 7
    %v3042 = vsub.s32 %v1423, %v3041
    %v3043 = vrot.slane %v2662, %v3042
    %v3044 = vlaneseq
    %v3045 = vshrl.u32 %v3044, 7
    %v3046 = vsub.s32 %v1428, %v3045
    %v3047 = vrot.slane %v2665, %v3046
    %v3048 = vsel %vm1433, %v3047, %v3043
    %v3049 = vlaneseq
    %v3050 = vshrl.u32 %v3049, 7
    %v3051 = vsub.s32 %v1423, %v3050
    %v3052 = vrot.slane %v2668, %v3051
    %v3053 = vlaneseq
    %v3054 = vshrl.u32 %v3053, 7
    %v3055 = vsub.s32 %v1428, %v3054
    %v3056 = vrot.slane %v2671, %v3055
    %v3057 = vsel %vm1433, %v3056, %v3052
    %v3058 = vlaneseq
    %v3059 = vshrl.u32 %v3058, 7
    %v3060 = vsub.s32 %v1423, %v3059
    %v3061 = vrot.slane %v2674, %v3060
    %v3062 = vlaneseq
    %v3063 = vshrl.u32 %v3062, 7
    %v3064 = vsub.s32 %v1428, %v3063
    %v3065 = vrot.slane %v2677, %v3064
    %v3066 = vsel %vm1433, %v3065, %v3061
    %v3067 = vlaneseq
    %v3068 = vshrl.u32 %v3067, 7
    %v3069 = vsub.s32 %v1423, %v3068
    %v3070 = vrot.slane %v2680, %v3069
    %v3071 = vlaneseq
    %v3072 = vshrl.u32 %v3071, 7
    %v3073 = vsub.s32 %v1428, %v3072
    %v3074 = vrot.slane %v2683, %v3073
    %v3075 = vsel %vm1433, %v3074, %v3070
    %v3076 = vsel %vm715, %v3021, %v3012
    %v3077 = vsel %vm717, %v3030, %v3076
    %v3078 = vsel %vm719, %v3039, %v3077
    %v3079 = vsel %vm721, %v3048, %v3078
    %v3080 = vsel %vm723, %v3057, %v3079
    %v3081 = vsel %vm725, %v3066, %v3080
    %v3082 = vsel %vm727, %v3075, %v3081
    %v3084 = vlaneseq
    %v3085 = vshrl.u32 %v3084, 7
    %v3086 = vsub.s32 %v1506, %v3085
    %v3087 = vrot.slane %v2638, %v3086
    %v3088 = vlaneseq
    %v3089 = vshrl.u32 %v3088, 7
    %v3090 = vsub.s32 %v1511, %v3089
    %v3091 = vrot.slane %v2641, %v3090
    %v3092 = vsel %vm1516, %v3091, %v3087
    %v3093 = vlaneseq
    %v3094 = vshrl.u32 %v3093, 7
    %v3095 = vsub.s32 %v1506, %v3094
    %v3096 = vrot.slane %v2644, %v3095
    %v3097 = vlaneseq
    %v3098 = vshrl.u32 %v3097, 7
    %v3099 = vsub.s32 %v1511, %v3098
    %v3100 = vrot.slane %v2647, %v3099
    %v3101 = vsel %vm1516, %v3100, %v3096
    %v3102 = vlaneseq
    %v3103 = vshrl.u32 %v3102, 7
    %v3104 = vsub.s32 %v1506, %v3103
    %v3105 = vrot.slane %v2650, %v3104
    %v3106 = vlaneseq
    %v3107 = vshrl.u32 %v3106, 7
    %v3108 = vsub.s32 %v1511, %v3107
    %v3109 = vrot.slane %v2653, %v3108
    %v3110 = vsel %vm1516, %v3109, %v3105
    %v3111 = vlaneseq
    %v3112 = vshrl.u32 %v3111, 7
    %v3113 = vsub.s32 %v1506, %v3112
    %v3114 = vrot.slane %v2656, %v3113
    %v3115 = vlaneseq
    %v3116 = vshrl.u32 %v3115, 7
    %v3117 = vsub.s32 %v1511, %v3116
    %v3118 = vrot.slane %v2659, %v3117
    %v3119 = vsel %vm1516, %v3118, %v3114
    %v3120 = vlaneseq
    %v3121 = vshrl.u32 %v3120, 7
    %v3122 = vsub.s32 %v1506, %v3121
    %v3123 = vrot.slane %v2662, %v3122
    %v3124 = vlaneseq
    %v3125 = vshrl.u32 %v3124, 7
    %v3126 = vsub.s32 %v1511, %v3125
    %v3127 = vrot.slane %v2665, %v3126
    %v3128 = vsel %vm1516, %v3127, %v3123
    %v3129 = vlaneseq
    %v3130 = vshrl.u32 %v3129, 7
    %v3131 = vsub.s32 %v1506, %v3130
    %v3132 = vrot.slane %v2668, %v3131
    %v3133 = vlaneseq
    %v3134 = vshrl.u32 %v3133, 7
    %v3135 = vsub.s32 %v1511, %v3134
    %v3136 = vrot.slane %v2671, %v3135
    %v3137 = vsel %vm1516, %v3136, %v3132
    %v3138 = vlaneseq
    %v3139 = vshrl.u32 %v3138, 7
    %v3140 = vsub.s32 %v1506, %v3139
    %v3141 = vrot.slane %v2674, %v3140
    %v3142 = vlaneseq
    %v3143 = vshrl.u32 %v3142, 7
    %v3144 = vsub.s32 %v1511, %v3143
    %v3145 = vrot.slane %v2677, %v3144
    %v3146 = vsel %vm1516, %v3145, %v3141
    %v3147 = vlaneseq
    %v3148 = vshrl.u32 %v3147, 7
    %v3149 = vsub.s32 %v1506, %v3148
    %v3150 = vrot.slane %v2680, %v3149
    %v3151 = vlaneseq
    %v3152 = vshrl.u32 %v3151, 7
    %v3153 = vsub.s32 %v1511, %v3152
    %v3154 = vrot.slane %v2683, %v3153
    %v3155 = vsel %vm1516, %v3154, %v3150
    %v3156 = vsel %vm715, %v3101, %v3092
    %v3157 = vsel %vm717, %v3110, %v3156
    %v3158 = vsel %vm719, %v3119, %v3157
    %v3159 = vsel %vm721, %v3128, %v3158
    %v3160 = vsel %vm723, %v3137, %v3159
    %v3161 = vsel %vm725, %v3146, %v3160
    %v3162 = vsel %vm727, %v3155, %v3161
    %v3164 = vlaneseq
    %v3165 = vshrl.u32 %v3164, 7
    %v3166 = vsub.s32 %v1589, %v3165
    %v3167 = vrot.slane %v2638, %v3166
    %v3168 = vlaneseq
    %v3169 = vshrl.u32 %v3168, 7
    %v3170 = vsub.s32 %v1594, %v3169
    %v3171 = vrot.slane %v2641, %v3170
    %v3172 = vsel %vm1599, %v3171, %v3167
    %v3173 = vlaneseq
    %v3174 = vshrl.u32 %v3173, 7
    %v3175 = vsub.s32 %v1589, %v3174
    %v3176 = vrot.slane %v2644, %v3175
    %v3177 = vlaneseq
    %v3178 = vshrl.u32 %v3177, 7
    %v3179 = vsub.s32 %v1594, %v3178
    %v3180 = vrot.slane %v2647, %v3179
    %v3181 = vsel %vm1599, %v3180, %v3176
    %v3182 = vlaneseq
    %v3183 = vshrl.u32 %v3182, 7
    %v3184 = vsub.s32 %v1589, %v3183
    %v3185 = vrot.slane %v2650, %v3184
    %v3186 = vlaneseq
    %v3187 = vshrl.u32 %v3186, 7
    %v3188 = vsub.s32 %v1594, %v3187
    %v3189 = vrot.slane %v2653, %v3188
    %v3190 = vsel %vm1599, %v3189, %v3185
    %v3191 = vlaneseq
    %v3192 = vshrl.u32 %v3191, 7
    %v3193 = vsub.s32 %v1589, %v3192
    %v3194 = vrot.slane %v2656, %v3193
    %v3195 = vlaneseq
    %v3196 = vshrl.u32 %v3195, 7
    %v3197 = vsub.s32 %v1594, %v3196
    %v3198 = vrot.slane %v2659, %v3197
    %v3199 = vsel %vm1599, %v3198, %v3194
    %v3200 = vlaneseq
    %v3201 = vshrl.u32 %v3200, 7
    %v3202 = vsub.s32 %v1589, %v3201
    %v3203 = vrot.slane %v2662, %v3202
    %v3204 = vlaneseq
    %v3205 = vshrl.u32 %v3204, 7
    %v3206 = vsub.s32 %v1594, %v3205
    %v3207 = vrot.slane %v2665, %v3206
    %v3208 = vsel %vm1599, %v3207, %v3203
    %v3209 = vlaneseq
    %v3210 = vshrl.u32 %v3209, 7
    %v3211 = vsub.s32 %v1589, %v3210
    %v3212 = vrot.slane %v2668, %v3211
    %v3213 = vlaneseq
    %v3214 = vshrl.u32 %v3213, 7
    %v3215 = vsub.s32 %v1594, %v3214
    %v3216 = vrot.slane %v2671, %v3215
    %v3217 = vsel %vm1599, %v3216, %v3212
    %v3218 = vlaneseq
    %v3219 = vshrl.u32 %v3218, 7
    %v3220 = vsub.s32 %v1589, %v3219
    %v3221 = vrot.slane %v2674, %v3220
    %v3222 = vlaneseq
    %v3223 = vshrl.u32 %v3222, 7
    %v3224 = vsub.s32 %v1594, %v3223
    %v3225 = vrot.slane %v2677, %v3224
    %v3226 = vsel %vm1599, %v3225, %v3221
    %v3227 = vlaneseq
    %v3228 = vshrl.u32 %v3227, 7
    %v3229 = vsub.s32 %v1589, %v3228
    %v3230 = vrot.slane %v2680, %v3229
    %v3231 = vlaneseq
    %v3232 = vshrl.u32 %v3231, 7
    %v3233 = vsub.s32 %v1594, %v3232
    %v3234 = vrot.slane %v2683, %v3233
    %v3235 = vsel %vm1599, %v3234, %v3230
    %v3236 = vsel %vm715, %v3181, %v3172
    %v3237 = vsel %vm717, %v3190, %v3236
    %v3238 = vsel %vm719, %v3199, %v3237
    %v3239 = vsel %vm721, %v3208, %v3238
    %v3240 = vsel %vm723, %v3217, %v3239
    %v3241 = vsel %vm725, %v3226, %v3240
    %v3242 = vsel %vm727, %v3235, %v3241
    %v3244 = vlaneseq
    %v3245 = vshrl.u32 %v3244, 7
    %v3246 = vsub.s32 %v1672, %v3245
    %v3247 = vrot.slane %v2638, %v3246
    %v3248 = vlaneseq
    %v3249 = vshrl.u32 %v3248, 7
    %v3250 = vsub.s32 %v1677, %v3249
    %v3251 = vrot.slane %v2641, %v3250
    %v3252 = vsel %vm1682, %v3251, %v3247
    %v3253 = vlaneseq
    %v3254 = vshrl.u32 %v3253, 7
    %v3255 = vsub.s32 %v1672, %v3254
    %v3256 = vrot.slane %v2644, %v3255
    %v3257 = vlaneseq
    %v3258 = vshrl.u32 %v3257, 7
    %v3259 = vsub.s32 %v1677, %v3258
    %v3260 = vrot.slane %v2647, %v3259
    %v3261 = vsel %vm1682, %v3260, %v3256
    %v3262 = vlaneseq
    %v3263 = vshrl.u32 %v3262, 7
    %v3264 = vsub.s32 %v1672, %v3263
    %v3265 = vrot.slane %v2650, %v3264
    %v3266 = vlaneseq
    %v3267 = vshrl.u32 %v3266, 7
    %v3268 = vsub.s32 %v1677, %v3267
    %v3269 = vrot.slane %v2653, %v3268
    %v3270 = vsel %vm1682, %v3269, %v3265
    %v3271 = vlaneseq
    %v3272 = vshrl.u32 %v3271, 7
    %v3273 = vsub.s32 %v1672, %v3272
    %v3274 = vrot.slane %v2656, %v3273
    %v3275 = vlaneseq
    %v3276 = vshrl.u32 %v3275, 7
    %v3277 = vsub.s32 %v1677, %v3276
    %v3278 = vrot.slane %v2659, %v3277
    %v3279 = vsel %vm1682, %v3278, %v3274
    %v3280 = vlaneseq
    %v3281 = vshrl.u32 %v3280, 7
    %v3282 = vsub.s32 %v1672, %v3281
    %v3283 = vrot.slane %v2662, %v3282
    %v3284 = vlaneseq
    %v3285 = vshrl.u32 %v3284, 7
    %v3286 = vsub.s32 %v1677, %v3285
    %v3287 = vrot.slane %v2665, %v3286
    %v3288 = vsel %vm1682, %v3287, %v3283
    %v3289 = vlaneseq
    %v3290 = vshrl.u32 %v3289, 7
    %v3291 = vsub.s32 %v1672, %v3290
    %v3292 = vrot.slane %v2668, %v3291
    %v3293 = vlaneseq
    %v3294 = vshrl.u32 %v3293, 7
    %v3295 = vsub.s32 %v1677, %v3294
    %v3296 = vrot.slane %v2671, %v3295
    %v3297 = vsel %vm1682, %v3296, %v3292
    %v3298 = vlaneseq
    %v3299 = vshrl.u32 %v3298, 7
    %v3300 = vsub.s32 %v1672, %v3299
    %v3301 = vrot.slane %v2674, %v3300
    %v3302 = vlaneseq
    %v3303 = vshrl.u32 %v3302, 7
    %v3304 = vsub.s32 %v1677, %v3303
    %v3305 = vrot.slane %v2677, %v3304
    %v3306 = vsel %vm1682, %v3305, %v3301
    %v3307 = vlaneseq
    %v3308 = vshrl.u32 %v3307, 7
    %v3309 = vsub.s32 %v1672, %v3308
    %v3310 = vrot.slane %v2680, %v3309
    %v3311 = vlaneseq
    %v3312 = vshrl.u32 %v3311, 7
    %v3313 = vsub.s32 %v1677, %v3312
    %v3314 = vrot.slane %v2683, %v3313
    %v3315 = vsel %vm1682, %v3314, %v3310
    %v3316 = vsel %vm715, %v3261, %v3252
    %v3317 = vsel %vm717, %v3270, %v3316
    %v3318 = vsel %vm719, %v3279, %v3317
    %v3319 = vsel %vm721, %v3288, %v3318
    %v3320 = vsel %vm723, %v3297, %v3319
    %v3321 = vsel %vm725, %v3306, %v3320
    %v3322 = vsel %vm727, %v3315, %v3321
    %v3324 = vsel %vm133, %v2762, %v2842
    %v3325 = vsel %vm135, %v3324, %v2922
    %v3326 = vsel %vm137, %v3325, %v3002
    %v3327 = vsel %vm139, %v3326, %v3082
    %v3328 = vsel %vm141, %v3327, %v3162
    %v3329 = vsel %vm143, %v3328, %v3242
    %v3330 = vsel %vm145, %v3329, %v3322
    %v3331 = vsel %vm109, %v3330, 0.0
    %3332 = vmatprep.subr.mxu0 0.0
    %3333 = vmatpush1.msra.mxu0 %v50
    %3334 = vmatprep.subr.mxu0 0.0
    %3335 = vmatpush1.msra.mxu0 %v49
    %3336 = vmatprep.subr.mxu0 0.0
    %3337 = vmatpush1.msra.mxu0 %v48
    %3338 = vmatprep.subr.mxu0 0.0
    %3339 = vmatpush1.msra.mxu0 %v47
    %3340 = vmatprep.subr.mxu0 0.0
    %3341 = vmatpush1.msra.mxu0 %v46
    %3342 = vmatprep.subr.mxu0 0.0
    %3343 = vmatpush1.msra.mxu0 %v45
    %3344 = vmatprep.subr.mxu0 0.0
    %3345 = vmatpush1.msra.mxu0 %v44
    %3346 = vmatprep.subr.mxu0 0.0
    %3347 = vmatpush1.msra.mxu0 %v43
    %3348 = vmatprep.subr.mxu0 0.0
    %3349 = vmatpush1.msra.mxu0 %v42
    %3350 = vmatprep.subr.mxu0 0.0
    %3351 = vmatpush1.msra.mxu0 %v41
    %3352 = vmatprep.subr.mxu0 0.0
    %3353 = vmatpush1.msra.mxu0 %v40
    %3354 = vmatprep.subr.mxu0 0.0
    %3355 = vmatpush1.msra.mxu0 %v39
    %3356 = vmatprep.subr.mxu0 0.0
    %3357 = vmatpush1.msra.mxu0 %v38
    %3358 = vmatprep.subr.mxu0 0.0
    %3359 = vmatpush1.msra.mxu0 %v37
    %3360 = vmatprep.subr.mxu0 0.0
    %3361 = vmatpush1.msra.mxu0 %v36
    %3362 = vmatprep.subr.mxu0 0.0
    %3363 = vmatpush1.msra.mxu0 %v35
    %3364 = vmatprep.subr.mxu0 0.0
    %3365 = vmatpush2.msra.mxu0 0.0
    %3366 = vmatprep.subr.mxu0 0.0
    %3367 = vmatpush2.msra.mxu0 0.0
    %3368 = vmatprep.subr.mxu0 0.0
    %3369 = vmatpush2.msra.mxu0 0.0
    %3370 = vmatprep.subr.mxu0 0.0
    %3371 = vmatpush2.msra.mxu0 0.0
    %3372 = vmatprep.subr.mxu0 0.0
    %3373 = vmatpush2.msra.mxu0 0.0
    %3374 = vmatprep.subr.mxu0 0.0
    %3375 = vmatpush2.msra.mxu0 0.0
    %3376 = vmatprep.subr.mxu0 0.0
    %3377 = vmatpush2.msra.mxu0 0.0
    %3378 = vmatprep.subr.mxu0 0.0
    %3379 = vmatpush2.msra.mxu0 0.0
    %3380 = vmatprep.subr.mxu0 0.0
    %3381 = vmatpush2.msra.mxu0 0.0
    %3382 = vmatprep.subr.mxu0 0.0
    %3383 = vmatpush2.msra.mxu0 0.0
    %3384 = vmatprep.subr.mxu0 0.0
    %3385 = vmatpush2.msra.mxu0 0.0
    %3386 = vmatprep.subr.mxu0 0.0
    %3387 = vmatpush2.msra.mxu0 0.0
    %3388 = vmatprep.subr.mxu0 0.0
    %3389 = vmatpush2.msra.mxu0 0.0
    %3390 = vmatprep.subr.mxu0 0.0
    %3391 = vmatpush2.msra.mxu0 0.0
    %3392 = vmatprep.subr.mxu0 0.0
    %3393 = vmatpush2.msra.mxu0 0.0
    %3394 = vmatprep.subr.mxu0 0.0
    %3395 = vmatpush2.msra.mxu0 0.0
    %3396 = vmatprep.mubr.f32.mxu0 0.0
    %3397 = vmatmul.mubr.f32.gmra.mxu0 %v3331
    %v3398 = vpop.f32.mrf.mxu0
    %v3399 = vadd.f32 0.0, %v3398
    %v3400 = vpop.f32.mrf.mxu0
    %3401 = vdwg.mxu0
    %3403 = vrot.lane.b32.xlu0 %v3399, 64
    %v3404 = vpop.permute.xlu0 %3403
    %v3406 = vsel %vm139, %v2069, %v3404
    %3407 = vst [vmem:[#allocation5] sm:$0xff] %v3406
    // Predicated region
    $region26: #{_reason_forward.1} parent=1 // pred_check
      _
    $region27: #{_reason_forward.1} parent=1 // pred_check_branch
      %3409 = sbr.rel (0) target = $region29
    $region28: #{_reason_forward.1} parent=1 // pred_region
      %s3411 = ssub.s32 128, 128
      %3412 = vsyncadd [#allocation4], %s3411
      %s3414 = sshll.u32 [#allocation5], 4
      %s3415 = int_to_ptr.vmem [resolvable:$true] %s3414
      %3417 = dma.vmem_to_hbm [thread:$0]  %s3415, 128, %s5, [#allocation4]
    $region29: #{_reason_forward.1} parent=1 // pred_fallthru
      _
    // Predicated region
    $region30: #{_reason_forward.1} parent=1 // pred_check
      _
    $region31: #{_reason_forward.1} parent=1 // pred_check_branch
      %3419 = sbr.rel (0) target = $region33
    $region32: #{_reason_forward.1} parent=1 // pred_region
      %3420 = dma.done [#allocation4], 128
    $region33: #{_reason_forward.1} parent=1 // pred_fallthru
      _
    %3421 = vsyncpa [#allocation3], 1
    %3422 = vsyncpa [#allocation4], 1

</llo_original>
